<compile_context>
chip_gen: v6e
topology: v6e:2x2x1
jax: 0.10.0
libtpu: 0.0.40
codegen_flags: <defaults>
</compile_context>

<pallas_src>
import functools

import jax
import jax.numpy as jnp
from jax.experimental import pallas as pl
from jax.experimental.pallas import tpu as pltpu

C_IN = 3
K_RAW = 9 * C_IN          # 27 im2col columns (3x3 patch x 3 channels)
K_PAD = 32                # padded to 32 for clean bf16 packing into the MXU
C_STEM = 24               # efficientnetv2_s stem width
N_FEATURES = 1280         # backbone.classifier.in_features for tf_efficientnetv2_s
HIDDEN = 512
OUT_LANES = 128           # lane-dense output slab; column 0 holds the prediction


def _round_up(x, m):
    return (x + m - 1) // m * m


def _device_kind():
    try:
        return jax.devices()[0].device_kind.lower()
    except Exception:
        return ""


def _use_bf16_elementwise():
    # v5-generation VPU/EUP have no bf16 path -> keep SiLU in f32 there.
    return "v5" not in _device_kind()


def _vmem_limit_bytes():
    kind = _device_kind()
    if "v5" in kind or "v6" in kind:
        return 64 * 1024 * 1024      # 128 MiB physical VMEM -> generous scoped limit
    return 48 * 1024 * 1024          # v7x: only 64 MiB physical per TC


def _silu(x, use_bf16):
    if use_bf16:
        xb = x.astype(jnp.bfloat16)
        return xb * jax.nn.sigmoid(xb)            # bf16 EUP/VPU (v6e/v7x)
    # f32 path (v5*): keep exp and the divide both on the EUP slot.
    return x * pl.reciprocal(1.0 + jnp.exp(-x), approx=True)


# ---------------------------------------------------------------------------
# Kernel 1: fused stem + conv_head + global-average-pool
# ---------------------------------------------------------------------------
def _backbone_pool_kernel(p_ref, ws_ref, bs_ref, wh_ref, bh_ref,
                          o_ref, acc_ref, *, hw, tm, use_bf16):
    j = pl.program_id(1)
    nt = pl.num_programs(1)

    @pl.when(j == 0)
    def _():
        acc_ref[...] = jnp.zeros_like(acc_ref)

    # stem 3x3 / stride-2 conv as im2col matmul (bf16 in, f32 acc) + SiLU
    p = p_ref[0]                                                   # (tm, 32) bf16
    stem = jnp.dot(p, ws_ref[...], preferred_element_type=jnp.float32) + bs_ref[...]
    stem = _silu(stem, use_bf16)

    # 1x1 conv_head expansion to 1280 features (bf16 in, f32 acc) + SiLU
    h = jnp.dot(stem.astype(jnp.bfloat16), wh_ref[...],
                preferred_element_type=jnp.float32) + bh_ref[...]
    h = _silu(h, use_bf16)                                         # (tm, 1280)

    # Global-average-pool partial column sums into the f32 accumulator.
    # Only the final row tile can contain padded rows, so the mask is gated
    # behind pl.when instead of running on every tile.
    if hw % tm != 0:
        @pl.when(j < nt - 1)
        def _():
            acc_ref[...] += jnp.sum(h.astype(jnp.float32), axis=0, keepdims=True)

        @pl.when(j == nt - 1)
        def _():
            row = j * tm + jax.lax.broadcasted_iota(jnp.int32, (tm, 1), 0)
            hm = jnp.where(row < hw, h, jnp.zeros_like(h))
            acc_ref[...] += jnp.sum(hm.astype(jnp.float32), axis=0, keepdims=True)
    else:
        acc_ref[...] += jnp.sum(h.astype(jnp.float32), axis=0, keepdims=True)

    @pl.when(j == nt - 1)
    def _():
        o_ref[0] = acc_ref[...] * (1.0 / hw)                       # (1, 1280) f32


def _backbone_pool(patches, ws, bs, wh, bh, *, batch, hw, tm, use_bf16, vmem_limit):
    hw_pad = patches.shape[1]
    n_tiles = hw_pad // tm
    kernel = functools.partial(_backbone_pool_kernel, hw=hw, tm=tm, use_bf16=use_bf16)
    pooled = pl.pallas_call(
        kernel,
        out_shape=jax.ShapeDtypeStruct((batch, 1, N_FEATURES), jnp.float32),
        grid=(batch, n_tiles),
        in_specs=[
            pl.BlockSpec((1, tm, K_PAD), lambda b, j: (b, j, 0)),        # patch tile
            pl.BlockSpec((K_PAD, C_STEM), lambda b, j: (0, 0)),          # stem weight (resident)
            pl.BlockSpec((1, C_STEM), lambda b, j: (0, 0)),              # stem bias
            pl.BlockSpec((C_STEM, N_FEATURES), lambda b, j: (0, 0)),     # head weight (resident)
            pl.BlockSpec((1, N_FEATURES), lambda b, j: (0, 0)),          # head bias
        ],
        out_specs=pl.BlockSpec((1, 1, N_FEATURES), lambda b, j: (b, 0, 0)),
        scratch_shapes=[pltpu.VMEM((1, N_FEATURES), jnp.float32)],       # pool accumulator
        compiler_params=pltpu.CompilerParams(
            dimension_semantics=("parallel", "arbitrary"),
            vmem_limit_bytes=vmem_limit),
    )(patches, ws, bs, wh, bh)
    return pooled[:, 0, :]                                               # (B, 1280)


# ---------------------------------------------------------------------------
# Kernel 2: batched regressor head (whole batch in one MXU pass)
# ---------------------------------------------------------------------------
def _regressor_kernel(f_ref, w1_ref, b1_ref, w2_ref, b2_ref, o_ref):
    feats = f_ref[...]                                             # (B, 1280) f32
    h1 = jnp.dot(feats.astype(jnp.bfloat16), w1_ref[...],
                 preferred_element_type=jnp.float32) + b1_ref[...]
    h1 = jnp.maximum(h1, 0.0)                                      # ReLU; Dropout(0.5) = identity (eval)
    # final 512->1 on the VPU (avoid a degenerate 1-lane MXU push)
    y = jnp.sum(h1 * w2_ref[...], axis=-1, keepdims=True) + b2_ref[...]   # (B, 1)
    o_ref[...] = jnp.broadcast_to(y, o_ref.shape)                  # lane-dense (B, 128)


def _regressor(pooled, w1, b1, w2, b2):
    out = pl.pallas_call(
        _regressor_kernel,
        out_shape=jax.ShapeDtypeStruct((pooled.shape[0], OUT_LANES), jnp.float32),
    )(pooled, w1, b1, w2, b2)
    return out[:, 0]                                               # (B,)


# ---------------------------------------------------------------------------
# Parameters (deterministic, synthetic)
# ---------------------------------------------------------------------------
def init_params(key):
    ks = jax.random.split(key, 8)
    s = 0.05
    return {
        "stem_w": jax.random.normal(ks[0], (3, 3, C_IN, C_STEM), jnp.float32) * s,
        "stem_b": jax.random.normal(ks[1], (1, C_STEM), jnp.float32) * s,
        "head_w": jax.random.normal(ks[2], (C_STEM, N_FEATURES), jnp.float32) * s,
        "head_b": jax.random.normal(ks[3], (1, N_FEATURES), jnp.float32) * s,
        "reg_w1": jax.random.normal(ks[4], (N_FEATURES, HIDDEN), jnp.float32) * s,
        "reg_b1": jax.random.normal(ks[5], (1, HIDDEN), jnp.float32) * s,
        "reg_w2": jax.random.normal(ks[6], (HIDDEN, 1), jnp.float32) * s,
        "reg_b2": jax.random.normal(ks[7], (1, 1), jnp.float32) * s,
    }


# ---------------------------------------------------------------------------
# Forward pass (light glue in JAX, all matmul/reduction/elementwise in Pallas)
# ---------------------------------------------------------------------------
def bone_age_regressor_forward(x_nchw, params, *, tm=1024):
    # x_nchw: (B, 3, H, W) float32 -- PyTorch NCHW convention (H, W even).
    x = jnp.transpose(x_nchw, (0, 2, 3, 1)).astype(jnp.float32)   # -> NHWC
    B, H, W, C = x.shape
    OH, OW = H // 2, W // 2
    hw = OH * OW

    # im2col for the 3x3 / stride-2 stem conv; TF-"SAME" on even inputs: pad (0,1).
    # TODO(synk): im2col still materializes wrapper-side in XLA; pulling it into
    #             the kernel (pl.ANY image + in-kernel strided reads) would remove
    #             the ~2.25x HBM round-trip, which matters most on v5e.
    xp = jnp.pad(x, ((0, 0), (0, 1), (0, 1), (0, 0)))
    cols = []
    for dh in range(3):
        for dw in range(3):
            cols.append(xp[:, dh:dh + 2 * OH:2, dw:dw + 2 * OW:2, :])
    patches = jnp.stack(cols, axis=3).reshape(B, hw, K_RAW)       # (B, HW, 27)
    patches = jnp.pad(patches, ((0, 0), (0, 0), (0, K_PAD - K_RAW)))   # K 27 -> 32

    # Large row tiles amortize the ~0.35us per-grid-step overhead and put the
    # per-tile patch DMA in the efficient (100s-of-KB) regime.
    tm = min(tm, _round_up(hw, 8))
    hw_pad = _round_up(hw, tm)
    if hw_pad != hw:
        patches = jnp.pad(patches, ((0, 0), (0, hw_pad - hw), (0, 0)))
    patches = patches.astype(jnp.bfloat16)                        # bf16 MXU inputs

    ws = jnp.pad(params["stem_w"].reshape(K_RAW, C_STEM),
                 ((0, K_PAD - K_RAW), (0, 0))).astype(jnp.bfloat16)
    wh = params["head_w"].astype(jnp.bfloat16)
    w1 = params["reg_w1"].astype(jnp.bfloat16)
    w2 = params["reg_w2"].reshape(1, HIDDEN)                      # f32, used on VPU

    use_bf16 = _use_bf16_elementwise()
    vmem_limit = _vmem_limit_bytes()

    pooled = _backbone_pool(patches, ws, params["stem_b"], wh, params["head_b"],
                            batch=B, hw=hw, tm=tm,
                            use_bf16=use_bf16, vmem_limit=vmem_limit)
    return _regressor(pooled, w1, params["reg_b1"], w2, params["reg_b2"])


if __name__ == "__main__":
    key = jax.random.PRNGKey(0)
    pkey, xkey = jax.random.split(key)
    params = init_params(pkey)

    # Small, deterministic NCHW input (PyTorch convention).
    x = jax.random.normal(xkey, (2, 3, 32, 32), jnp.float32)

    fwd = jax.jit(lambda x: bone_age_regressor_forward(x, params))
    y = fwd(x)
    jax.block_until_ready(y)
    assert y.shape == (2,) and y.dtype == jnp.float32
    print("KERNEL_OK")
</pallas_src>

<mosaic_0001>
module attributes {stable_mosaic.version = 11 : i64} {
  func.func @_regressor_kernel(%arg0: memref<2x1280xf32, #tpu.memory_space<vmem>>, %arg1: memref<1280x512xbf16, #tpu.memory_space<vmem>>, %arg2: memref<1x512xf32, #tpu.memory_space<vmem>>, %arg3: memref<1x512xf32, #tpu.memory_space<vmem>>, %arg4: memref<1x1xf32, #tpu.memory_space<vmem>>, %arg5: memref<2x128xf32, #tpu.memory_space<vmem>>) attributes {dimension_semantics = [], scalar_prefetch = 0 : i64, scratch_operands = 0 : i64, tpu.core_type = #tpu.core_type<tc>} {
    %c0 = arith.constant 0 : index
    %c0_0 = arith.constant 0 : index
    %0 = vector.load %arg0[%c0, %c0_0] : memref<2x1280xf32, #tpu.memory_space<vmem>>, vector<2x1280xf32>
    %1 = arith.truncf %0 : vector<2x1280xf32> to vector<2x1280xbf16>
    %c0_1 = arith.constant 0 : index
    %c0_2 = arith.constant 0 : index
    %2 = vector.load %arg1[%c0_1, %c0_2] : memref<1280x512xbf16, #tpu.memory_space<vmem>>, vector<1280x512xbf16>
    %cst = arith.constant dense<0.000000e+00> : vector<2x512xf32>
    %3 = tpu.matmul %1, %2, %cst {dimension_numbers = #tpu.dot_dimension_numbers<[1], [0], [0], [1], [0, 0, 1, 1], [], []>} : vector<2x1280xbf16>, vector<1280x512xbf16>, vector<2x512xf32> -> vector<2x512xf32>
    %c0_3 = arith.constant 0 : index
    %c0_4 = arith.constant 0 : index
    %4 = vector.load %arg2[%c0_3, %c0_4] : memref<1x512xf32, #tpu.memory_space<vmem>>, vector<1x512xf32>
    %5 = vector.broadcast %4 : vector<1x512xf32> to vector<2x512xf32>
    %6 = arith.addf %3, %5 : vector<2x512xf32>
    %cst_5 = arith.constant 0.000000e+00 : f32
    %7 = vector.broadcast %cst_5 : f32 to vector<2x512xf32>
    %8 = arith.maximumf %6, %7 : vector<2x512xf32>
    %c0_6 = arith.constant 0 : index
    %c0_7 = arith.constant 0 : index
    %9 = vector.load %arg3[%c0_6, %c0_7] : memref<1x512xf32, #tpu.memory_space<vmem>>, vector<1x512xf32>
    %10 = vector.broadcast %9 : vector<1x512xf32> to vector<2x512xf32>
    %11 = arith.mulf %8, %10 : vector<2x512xf32>
    %cst_8 = arith.constant dense<0.000000e+00> : vector<2xf32>
    %12 = vector.multi_reduction <add>, %11, %cst_8 [1] : vector<2x512xf32> to vector<2xf32>
    %13 = vector.shape_cast %12 : vector<2xf32> to vector<2x1xf32>
    %c0_9 = arith.constant 0 : index
    %c0_10 = arith.constant 0 : index
    %14 = vector.load %arg4[%c0_9, %c0_10] : memref<1x1xf32, #tpu.memory_space<vmem>>, vector<1x1xf32>
    %15 = vector.broadcast %14 : vector<1x1xf32> to vector<2x1xf32>
    %16 = arith.addf %13, %15 : vector<2x1xf32>
    %17 = vector.shape_cast %16 : vector<2x1xf32> to vector<2x1xf32>
    %18 = vector.broadcast %17 : vector<2x1xf32> to vector<2x128xf32>
    %c0_11 = arith.constant 0 : index
    %c0_12 = arith.constant 0 : index
    %19 = vector.load %arg5[%c0_11, %c0_12] : memref<2x128xf32, #tpu.memory_space<vmem>>, vector<2x128xf32>
    tpu.vector_store %arg5[%c0_11, %c0_12], %18 {strides = array<i32>} : memref<2x128xf32, #tpu.memory_space<vmem>>, vector<2x128xf32>,
    return
  }
}

module attributes {stable_mosaic.version = 11 : i64} {
  func.func @_backbone_pool_kernel(%arg0: i32, %arg1: i32, %arg2: memref<1x256x32xbf16, #tpu.memory_space<vmem>>, %arg3: memref<32x24xbf16, #tpu.memory_space<vmem>>, %arg4: memref<1x24xf32, #tpu.memory_space<vmem>>, %arg5: memref<24x1280xbf16, #tpu.memory_space<vmem>>, %arg6: memref<1x1280xf32, #tpu.memory_space<vmem>>, %arg7: memref<1x1x1280xf32, #tpu.memory_space<vmem>>, %arg8: memref<1x1280xf32, #tpu.memory_space<vmem>>) attributes {dimension_semantics = [#tpu.dimension_semantics<parallel>, #tpu.dimension_semantics<arbitrary>], iteration_bounds = array<i64: 2, 1>, scalar_prefetch = 0 : i64, scratch_operands = 1 : i64, tpu.core_type = #tpu.core_type<tc>, window_params = [{transform_indices = @transform_0, window_bounds = array<i64: 1, 256, 32>}, {pipeline_mode = #tpu.pipeline_mode<synchronous>, transform_indices = @transform_1, window_bounds = array<i64: 32, 24>}, {pipeline_mode = #tpu.pipeline_mode<synchronous>, transform_indices = @transform_2, window_bounds = array<i64: 1, 24>}, {pipeline_mode = #tpu.pipeline_mode<synchronous>, transform_indices = @transform_3, window_bounds = array<i64: 24, 1280>}, {pipeline_mode = #tpu.pipeline_mode<synchronous>, transform_indices = @transform_4, window_bounds = array<i64: 1, 1280>}, {transform_indices = @transform_5, window_bounds = array<i64: 1, 1, 1280>}]} {
    %c0_i32 = arith.constant 0 : i32
    %0 = arith.cmpi eq, %arg1, %c0_i32 : i32
    %1 = arith.extui %0 : i1 to i32
    %c0_i32_0 = arith.constant 0 : i32
    %2 = arith.cmpi ne, %1, %c0_i32_0 : i32
    scf.if %2 {
      %cst_21 = arith.constant 0.000000e+00 : f32
      %38 = vector.broadcast %cst_21 : f32 to vector<1x1280xf32>
      %c0_22 = arith.constant 0 : index
      %c0_23 = arith.constant 0 : index
      %39 = vector.load %arg8[%c0_22, %c0_23] : memref<1x1280xf32, #tpu.memory_space<vmem>>, vector<1x1280xf32>
      tpu.vector_store %arg8[%c0_22, %c0_23], %38 {strides = array<i32>} : memref<1x1280xf32, #tpu.memory_space<vmem>>, vector<1x1280xf32>,
    } else {
    }
    %c0 = arith.constant 0 : index
    %c0_1 = arith.constant 0 : index
    %c0_2 = arith.constant 0 : index
    %3 = vector.load %arg2[%c0, %c0_1, %c0_2] : memref<1x256x32xbf16, #tpu.memory_space<vmem>>, vector<1x256x32xbf16>
    %4 = vector.shape_cast %3 : vector<1x256x32xbf16> to vector<256x32xbf16>
    %c0_3 = arith.constant 0 : index
    %c0_4 = arith.constant 0 : index
    %5 = vector.load %arg3[%c0_3, %c0_4] : memref<32x24xbf16, #tpu.memory_space<vmem>>, vector<32x24xbf16>
    %cst = arith.constant dense<0.000000e+00> : vector<256x24xf32>
    %6 = tpu.matmul %4, %5, %cst {dimension_numbers = #tpu.dot_dimension_numbers<[1], [0], [0], [1], [0, 0, 1, 1], [], []>} : vector<256x32xbf16>, vector<32x24xbf16>, vector<256x24xf32> -> vector<256x24xf32>
    %c0_5 = arith.constant 0 : index
    %c0_6 = arith.constant 0 : index
    %7 = vector.load %arg4[%c0_5, %c0_6] : memref<1x24xf32, #tpu.memory_space<vmem>>, vector<1x24xf32>
    %8 = vector.broadcast %7 : vector<1x24xf32> to vector<256x24xf32>
    %9 = arith.addf %6, %8 : vector<256x24xf32>
    %10 = arith.truncf %9 : vector<256x24xf32> to vector<256x24xbf16>
    %11 = arith.negf %10 : vector<256x24xbf16>
    %12 = math.exp %11 : vector<256x24xbf16>
    %cst_7 = arith.constant 1.000000e+00 : bf16
    %13 = vector.broadcast %cst_7 : bf16 to vector<256x24xbf16>
    %14 = arith.addf %13, %12 : vector<256x24xbf16>
    %15 = arith.divf %13, %14 : vector<256x24xbf16>
    %16 = arith.mulf %10, %15 : vector<256x24xbf16>
    %c0_8 = arith.constant 0 : index
    %c0_9 = arith.constant 0 : index
    %17 = vector.load %arg5[%c0_8, %c0_9] : memref<24x1280xbf16, #tpu.memory_space<vmem>>, vector<24x1280xbf16>
    %cst_10 = arith.constant dense<0.000000e+00> : vector<256x1280xf32>
    %18 = tpu.matmul %16, %17, %cst_10 {dimension_numbers = #tpu.dot_dimension_numbers<[1], [0], [0], [1], [0, 0, 1, 1], [], []>} : vector<256x24xbf16>, vector<24x1280xbf16>, vector<256x1280xf32> -> vector<256x1280xf32>
    %c0_11 = arith.constant 0 : index
    %c0_12 = arith.constant 0 : index
    %19 = vector.load %arg6[%c0_11, %c0_12] : memref<1x1280xf32, #tpu.memory_space<vmem>>, vector<1x1280xf32>
    %20 = vector.broadcast %19 : vector<1x1280xf32> to vector<256x1280xf32>
    %21 = arith.addf %18, %20 : vector<256x1280xf32>
    %22 = arith.truncf %21 : vector<256x1280xf32> to vector<256x1280xbf16>
    %23 = arith.negf %22 : vector<256x1280xbf16>
    %24 = math.exp %23 : vector<256x1280xbf16>
    %cst_13 = arith.constant 1.000000e+00 : bf16
    %25 = vector.broadcast %cst_13 : bf16 to vector<256x1280xbf16>
    %26 = arith.addf %25, %24 : vector<256x1280xbf16>
    %27 = arith.divf %25, %26 : vector<256x1280xbf16>
    %28 = arith.mulf %22, %27 : vector<256x1280xbf16>
    %c0_14 = arith.constant 0 : index
    %c0_15 = arith.constant 0 : index
    %29 = vector.load %arg8[%c0_14, %c0_15] : memref<1x1280xf32, #tpu.memory_space<vmem>>, vector<1x1280xf32>
    %30 = arith.extf %28 : vector<256x1280xbf16> to vector<256x1280xf32>
    %cst_16 = arith.constant dense<0.000000e+00> : vector<1280xf32>
    %31 = vector.multi_reduction <add>, %30, %cst_16 [0] : vector<256x1280xf32> to vector<1280xf32>
    %32 = vector.shape_cast %31 : vector<1280xf32> to vector<1x1280xf32>
    %33 = arith.addf %29, %32 : vector<1x1280xf32>
    %c0_17 = arith.constant 0 : index
    %c0_18 = arith.constant 0 : index
    %34 = vector.load %arg8[%c0_17, %c0_18] : memref<1x1280xf32, #tpu.memory_space<vmem>>, vector<1x1280xf32>
    tpu.vector_store %arg8[%c0_17, %c0_18], %33 {strides = array<i32>} : memref<1x1280xf32, #tpu.memory_space<vmem>>, vector<1x1280xf32>,
    %c0_i32_19 = arith.constant 0 : i32
    %35 = arith.cmpi eq, %arg1, %c0_i32_19 : i32
    %36 = arith.extui %35 : i1 to i32
    %c0_i32_20 = arith.constant 0 : i32
    %37 = arith.cmpi ne, %36, %c0_i32_20 : i32
    scf.if %37 {
      %c0_21 = arith.constant 0 : index
      %c0_22 = arith.constant 0 : index
      %38 = vector.load %arg8[%c0_21, %c0_22] : memref<1x1280xf32, #tpu.memory_space<vmem>>, vector<1x1280xf32>
      %cst_23 = arith.constant 3.906250e-03 : f32
      %39 = vector.broadcast %cst_23 : f32 to vector<1x1280xf32>
      %40 = arith.mulf %38, %39 : vector<1x1280xf32>
      %c0_24 = arith.constant 0 : index
      %c0_25 = arith.constant 0 : index
      %c0_26 = arith.constant 0 : index
      %41 = vector.load %arg7[%c0_24, %c0_25, %c0_26] : memref<1x1x1280xf32, #tpu.memory_space<vmem>>, vector<1x1x1280xf32>
      %42 = vector.shape_cast %41 : vector<1x1x1280xf32> to vector<1x1280xf32>
      %43 = vector.shape_cast %40 : vector<1x1280xf32> to vector<1x1x1280xf32>
      tpu.vector_store %arg7[%c0_24, %c0_25, %c0_26], %43 {strides = array<i32>} : memref<1x1x1280xf32, #tpu.memory_space<vmem>>, vector<1x1x1280xf32>,
    } else {
    }
    return
  }
  func.func @transform_0(%arg0: i32, %arg1: i32) -> (i32, i32, i32) {
    %c0_i32 = arith.constant 0 : i32
    %c0_i32_0 = arith.constant 0 : i32
    return %arg0, %arg1, %c0_i32 : i32, i32, i32
  }
  func.func @transform_1(%arg0: i32, %arg1: i32) -> (i32, i32) {
    %c0_i32 = arith.constant 0 : i32
    %c0_i32_0 = arith.constant 0 : i32
    %c0_i32_1 = arith.constant 0 : i32
    return %c0_i32, %c0_i32_0 : i32, i32
  }
  func.func @transform_2(%arg0: i32, %arg1: i32) -> (i32, i32) {
    %c0_i32 = arith.constant 0 : i32
    %c0_i32_0 = arith.constant 0 : i32
    %c0_i32_1 = arith.constant 0 : i32
    return %c0_i32, %c0_i32_0 : i32, i32
  }
  func.func @transform_3(%arg0: i32, %arg1: i32) -> (i32, i32) {
    %c0_i32 = arith.constant 0 : i32
    %c0_i32_0 = arith.constant 0 : i32
    %c0_i32_1 = arith.constant 0 : i32
    return %c0_i32, %c0_i32_0 : i32, i32
  }
  func.func @transform_4(%arg0: i32, %arg1: i32) -> (i32, i32) {
    %c0_i32 = arith.constant 0 : i32
    %c0_i32_0 = arith.constant 0 : i32
    %c0_i32_1 = arith.constant 0 : i32
    return %c0_i32, %c0_i32_0 : i32, i32
  }
  func.func @transform_5(%arg0: i32, %arg1: i32) -> (i32, i32, i32) {
    %c0_i32 = arith.constant 0 : i32
    %c0_i32_0 = arith.constant 0 : i32
    %c0_i32_1 = arith.constant 0 : i32
    return %arg0, %c0_i32, %c0_i32_0 : i32, i32, i32
  }
}

</mosaic_0001>

<llo_original>
// kernel: _lambda_.3
$region0: #{_lambda_.3}
  #allocation0 [shape = 'u32[]', space=smem, size = 0x4, offset = 0x4, fixed_abs, tag = 'smem constant byte address 0x4 - core index']
  #allocation1 [shape = 'u32[144,128]{1,0:T(1,128)}', space=vmem, size = 0x12000, scoped, tag = 'internal scratch']
  #allocation2 [shape = 'f32[1,1]{1,0:T(1,128)S(1)}', space=vmem, size = 0x200, scoped, tag = 'scoped memory for _lambda_.3']
  %s0 = inlined_call_operand.vmem [shape: f32[2,1280], index: 0, kind: input, shape index: {}]
  %s1 = inlined_call_operand.vmem [shape: bf16[1280,512], index: 1, kind: input, shape index: {}]
  %s2 = inlined_call_operand.vmem [shape: f32[1,512], index: 2, kind: input, shape index: {}]
  %s3 = inlined_call_operand.vmem [shape: f32[1,512], index: 3, kind: input, shape index: {}]
  %s4 = inlined_call_operand.<no memory space> [shape: f32[1,1], index: 4, kind: input, shape index: {}]
  %s5 = inlined_call_operand.vmem [shape: f32[2,128], index: 5, kind: output, shape index: {}]
  %s6 = sld [smem:[#allocation0]]
  $region30: #{_lambda_.3} parent=0
    _
  %s8 = ssub.s32 1, %s6
  %s9 = scalar_select 0, %s8, %s6
  %v10 = vstv %s4
  %11 = vst [vmem:[#allocation2] sm:$0x1] %v10
  // Predicated region
  $region2: #{_lambda_.3} parent=0 // pred_check
    _
  $region3: #{_lambda_.3} parent=0 // pred_check_branch
    %13 = sbr.rel (0) target = $region5
  $region4: #{_lambda_.3} parent=0 // pred_region
    _
  $region5: #{_lambda_.3} parent=0 // pred_fallthru
    _
  // Predicated region
  $region6: #{_lambda_.3} parent=0 // pred_check
    _
  $region7: #{_lambda_.3} parent=0 // pred_check_branch
    %15 = sbr.rel (0) target = $region9
  $region8: #{_lambda_.3} parent=0 // pred_region
    _
  $region9: #{_lambda_.3} parent=0 // pred_fallthru
    _
  // Predicated region
  $region10: #{_lambda_.3} parent=0 // pred_check
    _
  $region11: #{_lambda_.3} parent=0 // pred_check_branch
    %17 = sbr.rel (0) target = $region13
  $region12: #{_lambda_.3} parent=0 // pred_region
    _
  $region13: #{_lambda_.3} parent=0 // pred_fallthru
    _
  // Predicated region
  $region14: #{_lambda_.3} parent=0 // pred_check
    _
  $region15: #{_lambda_.3} parent=0 // pred_check_branch
    %19 = sbr.rel (0) target = $region17
  $region16: #{_lambda_.3} parent=0 // pred_region
    _
  $region17: #{_lambda_.3} parent=0 // pred_fallthru
    _
  // Predicated region
  $region18: #{_lambda_.3} parent=0 // pred_check
    _
  $region19: #{_lambda_.3} parent=0 // pred_check_branch
    %21 = sbr.rel (0) target = $region21
  $region20: #{_lambda_.3} parent=0 // pred_region
    _
  $region21: #{_lambda_.3} parent=0 // pred_fallthru
    _
  %v22 = vld [vmem:[%s0] sm:$0xff]
  %v23 = vld [vmem:[%s0 + $0x8] sm:$0xff]
  %v24 = vld [vmem:[%s0 + $0x10] sm:$0xf]
  %v28 = vcombine.high %v22, %v22
  %v30 = vunpack.c.l.s4 1983009808
  %v31 = vunpack.c.0.s8 %v30
  %v32 = vlaneseq
  %v33 = vshrl.u32 %v32, 7
  %v34 = vsub.s32 %v31, %v33
  %v35 = vrot.slane %v22, %v34
  %v37 = vunpack.c.l.s4 1983009808
  %v38 = vunpack.c.0.s8 %v37
  %v39 = vlaneseq
  %v40 = vshrl.u32 %v39, 7
  %v41 = vsub.s32 %v38, %v40
  %v42 = vrot.slane %v28, %v41
  %v43 = vcombine.high %v35, %v35
  %v44 = vcombine.high %v42, %v42
  %v45 = vcombine.high %v23, %v23
  %v47 = vunpack.c.l.s4 1983009808
  %v48 = vunpack.c.0.s8 %v47
  %v49 = vlaneseq
  %v50 = vshrl.u32 %v49, 7
  %v51 = vsub.s32 %v48, %v50
  %v52 = vrot.slane %v23, %v51
  %v54 = vunpack.c.l.s4 1983009808
  %v55 = vunpack.c.0.s8 %v54
  %v56 = vlaneseq
  %v57 = vshrl.u32 %v56, 7
  %v58 = vsub.s32 %v55, %v57
  %v59 = vrot.slane %v45, %v58
  %v60 = vcombine.high %v52, %v52
  %v61 = vcombine.high %v59, %v59
  %v63 = vunpack.c.l.s4 1983009808
  %v64 = vunpack.c.0.s8 %v63
  %v65 = vlaneseq
  %v66 = vshrl.u32 %v65, 7
  %v67 = vsub.s32 %v64, %v66
  %v68 = vrot.slane %v24, %v67
  %v69 = vcombine.high %v68, %v68
  %v80 = vpack.c.bf16 %v35, %v35
  %v81 = vpack.c.bf16 %v43, %v43
  %v82 = vpack.c.bf16 %v42, %v42
  %v83 = vpack.c.bf16 %v44, %v44
  %v84 = vpack.c.bf16 %v52, %v52
  %v85 = vpack.c.bf16 %v60, %v60
  %v86 = vpack.c.bf16 %v59, %v59
  %v87 = vpack.c.bf16 %v61, %v61
  %v88 = vpack.c.bf16 %v68, %v68
  %v89 = vpack.c.bf16 %v69, %v69
  %v90 = vld [vmem:[%s1] sm:$0xff]
  %v91 = vld [vmem:[%s1 + $0x8] sm:$0xff]
  %v92 = vld [vmem:[%s1 + $0x10] sm:$0xff]
  %v93 = vld [vmem:[%s1 + $0x18] sm:$0xff]
  %v94 = vld [vmem:[%s1 + $0x20] sm:$0xff]
  %v95 = vld [vmem:[%s1 + $0x28] sm:$0xff]
  %v96 = vld [vmem:[%s1 + $0x30] sm:$0xff]
  %v97 = vld [vmem:[%s1 + $0x38] sm:$0xff]
  %v98 = vld [vmem:[%s1 + $0x40] sm:$0xff]
  %v99 = vld [vmem:[%s1 + $0x48] sm:$0xff]
  %v100 = vld [vmem:[%s1 + $0x50] sm:$0xff]
  %v101 = vld [vmem:[%s1 + $0x58] sm:$0xff]
  %v102 = vld [vmem:[%s1 + $0x60] sm:$0xff]
  %v103 = vld [vmem:[%s1 + $0x68] sm:$0xff]
  %v104 = vld [vmem:[%s1 + $0x70] sm:$0xff]
  %v105 = vld [vmem:[%s1 + $0x78] sm:$0xff]
  %v106 = vld [vmem:[%s1 + $0x80] sm:$0xff]
  %v107 = vld [vmem:[%s1 + $0x88] sm:$0xff]
  %v108 = vld [vmem:[%s1 + $0x90] sm:$0xff]
  %v109 = vld [vmem:[%s1 + $0x98] sm:$0xff]
  %v110 = vld [vmem:[%s1 + $0xa0] sm:$0xff]
  %v111 = vld [vmem:[%s1 + $0xa8] sm:$0xff]
  %v112 = vld [vmem:[%s1 + $0xb0] sm:$0xff]
  %v113 = vld [vmem:[%s1 + $0xb8] sm:$0xff]
  %v114 = vld [vmem:[%s1 + $0xc0] sm:$0xff]
  %v115 = vld [vmem:[%s1 + $0xc8] sm:$0xff]
  %v116 = vld [vmem:[%s1 + $0xd0] sm:$0xff]
  %v117 = vld [vmem:[%s1 + $0xd8] sm:$0xff]
  %v118 = vld [vmem:[%s1 + $0xe0] sm:$0xff]
  %v119 = vld [vmem:[%s1 + $0xe8] sm:$0xff]
  %v120 = vld [vmem:[%s1 + $0xf0] sm:$0xff]
  %v121 = vld [vmem:[%s1 + $0xf8] sm:$0xff]
  %v122 = vld [vmem:[%s1 + $0x100] sm:$0xff]
  %v123 = vld [vmem:[%s1 + $0x108] sm:$0xff]
  %v124 = vld [vmem:[%s1 + $0x110] sm:$0xff]
  %v125 = vld [vmem:[%s1 + $0x118] sm:$0xff]
  %v126 = vld [vmem:[%s1 + $0x120] sm:$0xff]
  %v127 = vld [vmem:[%s1 + $0x128] sm:$0xff]
  %v128 = vld [vmem:[%s1 + $0x130] sm:$0xff]
  %v129 = vld [vmem:[%s1 + $0x138] sm:$0xff]
  %v130 = vld [vmem:[%s1 + $0x140] sm:$0xff]
  %v131 = vld [vmem:[%s1 + $0x148] sm:$0xff]
  %v132 = vld [vmem:[%s1 + $0x150] sm:$0xff]
  %v133 = vld [vmem:[%s1 + $0x158] sm:$0xff]
  %v134 = vld [vmem:[%s1 + $0x160] sm:$0xff]
  %v135 = vld [vmem:[%s1 + $0x168] sm:$0xff]
  %v136 = vld [vmem:[%s1 + $0x170] sm:$0xff]
  %v137 = vld [vmem:[%s1 + $0x178] sm:$0xff]
  %v138 = vld [vmem:[%s1 + $0x180] sm:$0xff]
  %v139 = vld [vmem:[%s1 + $0x188] sm:$0xff]
  %v140 = vld [vmem:[%s1 + $0x190] sm:$0xff]
  %v141 = vld [vmem:[%s1 + $0x198] sm:$0xff]
  %v142 = vld [vmem:[%s1 + $0x1a0] sm:$0xff]
  %v143 = vld [vmem:[%s1 + $0x1a8] sm:$0xff]
  %v144 = vld [vmem:[%s1 + $0x1b0] sm:$0xff]
  %v145 = vld [vmem:[%s1 + $0x1b8] sm:$0xff]
  %v146 = vld [vmem:[%s1 + $0x1c0] sm:$0xff]
  %v147 = vld [vmem:[%s1 + $0x1c8] sm:$0xff]
  %v148 = vld [vmem:[%s1 + $0x1d0] sm:$0xff]
  %v149 = vld [vmem:[%s1 + $0x1d8] sm:$0xff]
  %v150 = vld [vmem:[%s1 + $0x1e0] sm:$0xff]
  %v151 = vld [vmem:[%s1 + $0x1e8] sm:$0xff]
  %v152 = vld [vmem:[%s1 + $0x1f0] sm:$0xff]
  %v153 = vld [vmem:[%s1 + $0x1f8] sm:$0xff]
  %v154 = vld [vmem:[%s1 + $0x200] sm:$0xff]
  %v155 = vld [vmem:[%s1 + $0x208] sm:$0xff]
  %v156 = vld [vmem:[%s1 + $0x210] sm:$0xff]
  %v157 = vld [vmem:[%s1 + $0x218] sm:$0xff]
  %v158 = vld [vmem:[%s1 + $0x220] sm:$0xff]
  %v159 = vld [vmem:[%s1 + $0x228] sm:$0xff]
  %v160 = vld [vmem:[%s1 + $0x230] sm:$0xff]
  %v161 = vld [vmem:[%s1 + $0x238] sm:$0xff]
  %v162 = vld [vmem:[%s1 + $0x240] sm:$0xff]
  %v163 = vld [vmem:[%s1 + $0x248] sm:$0xff]
  %v164 = vld [vmem:[%s1 + $0x250] sm:$0xff]
  %v165 = vld [vmem:[%s1 + $0x258] sm:$0xff]
  %v166 = vld [vmem:[%s1 + $0x260] sm:$0xff]
  %v167 = vld [vmem:[%s1 + $0x268] sm:$0xff]
  %v168 = vld [vmem:[%s1 + $0x270] sm:$0xff]
  %v169 = vld [vmem:[%s1 + $0x278] sm:$0xff]
  %v170 = vld [vmem:[%s1 + $0x280] sm:$0xff]
  %v171 = vld [vmem:[%s1 + $0x288] sm:$0xff]
  %v172 = vld [vmem:[%s1 + $0x290] sm:$0xff]
  %v173 = vld [vmem:[%s1 + $0x298] sm:$0xff]
  %v174 = vld [vmem:[%s1 + $0x2a0] sm:$0xff]
  %v175 = vld [vmem:[%s1 + $0x2a8] sm:$0xff]
  %v176 = vld [vmem:[%s1 + $0x2b0] sm:$0xff]
  %v177 = vld [vmem:[%s1 + $0x2b8] sm:$0xff]
  %v178 = vld [vmem:[%s1 + $0x2c0] sm:$0xff]
  %v179 = vld [vmem:[%s1 + $0x2c8] sm:$0xff]
  %v180 = vld [vmem:[%s1 + $0x2d0] sm:$0xff]
  %v181 = vld [vmem:[%s1 + $0x2d8] sm:$0xff]
  %v182 = vld [vmem:[%s1 + $0x2e0] sm:$0xff]
  %v183 = vld [vmem:[%s1 + $0x2e8] sm:$0xff]
  %v184 = vld [vmem:[%s1 + $0x2f0] sm:$0xff]
  %v185 = vld [vmem:[%s1 + $0x2f8] sm:$0xff]
  %v186 = vld [vmem:[%s1 + $0x300] sm:$0xff]
  %v187 = vld [vmem:[%s1 + $0x308] sm:$0xff]
  %v188 = vld [vmem:[%s1 + $0x310] sm:$0xff]
  %v189 = vld [vmem:[%s1 + $0x318] sm:$0xff]
  %v190 = vld [vmem:[%s1 + $0x320] sm:$0xff]
  %v191 = vld [vmem:[%s1 + $0x328] sm:$0xff]
  %v192 = vld [vmem:[%s1 + $0x330] sm:$0xff]
  %v193 = vld [vmem:[%s1 + $0x338] sm:$0xff]
  %v194 = vld [vmem:[%s1 + $0x340] sm:$0xff]
  %v195 = vld [vmem:[%s1 + $0x348] sm:$0xff]
  %v196 = vld [vmem:[%s1 + $0x350] sm:$0xff]
  %v197 = vld [vmem:[%s1 + $0x358] sm:$0xff]
  %v198 = vld [vmem:[%s1 + $0x360] sm:$0xff]
  %v199 = vld [vmem:[%s1 + $0x368] sm:$0xff]
  %v200 = vld [vmem:[%s1 + $0x370] sm:$0xff]
  %v201 = vld [vmem:[%s1 + $0x378] sm:$0xff]
  %v202 = vld [vmem:[%s1 + $0x380] sm:$0xff]
  %v203 = vld [vmem:[%s1 + $0x388] sm:$0xff]
  %v204 = vld [vmem:[%s1 + $0x390] sm:$0xff]
  %v205 = vld [vmem:[%s1 + $0x398] sm:$0xff]
  %v206 = vld [vmem:[%s1 + $0x3a0] sm:$0xff]
  %v207 = vld [vmem:[%s1 + $0x3a8] sm:$0xff]
  %v208 = vld [vmem:[%s1 + $0x3b0] sm:$0xff]
  %v209 = vld [vmem:[%s1 + $0x3b8] sm:$0xff]
  %v210 = vld [vmem:[%s1 + $0x3c0] sm:$0xff]
  %v211 = vld [vmem:[%s1 + $0x3c8] sm:$0xff]
  %v212 = vld [vmem:[%s1 + $0x3d0] sm:$0xff]
  %v213 = vld [vmem:[%s1 + $0x3d8] sm:$0xff]
  %v214 = vld [vmem:[%s1 + $0x3e0] sm:$0xff]
  %v215 = vld [vmem:[%s1 + $0x3e8] sm:$0xff]
  %v216 = vld [vmem:[%s1 + $0x3f0] sm:$0xff]
  %v217 = vld [vmem:[%s1 + $0x3f8] sm:$0xff]
  %v218 = vld [vmem:[%s1 + $0x400] sm:$0xff]
  %v219 = vld [vmem:[%s1 + $0x408] sm:$0xff]
  %v220 = vld [vmem:[%s1 + $0x410] sm:$0xff]
  %v221 = vld [vmem:[%s1 + $0x418] sm:$0xff]
  %v222 = vld [vmem:[%s1 + $0x420] sm:$0xff]
  %v223 = vld [vmem:[%s1 + $0x428] sm:$0xff]
  %v224 = vld [vmem:[%s1 + $0x430] sm:$0xff]
  %v225 = vld [vmem:[%s1 + $0x438] sm:$0xff]
  %v226 = vld [vmem:[%s1 + $0x440] sm:$0xff]
  %v227 = vld [vmem:[%s1 + $0x448] sm:$0xff]
  %v228 = vld [vmem:[%s1 + $0x450] sm:$0xff]
  %v229 = vld [vmem:[%s1 + $0x458] sm:$0xff]
  %v230 = vld [vmem:[%s1 + $0x460] sm:$0xff]
  %v231 = vld [vmem:[%s1 + $0x468] sm:$0xff]
  %v232 = vld [vmem:[%s1 + $0x470] sm:$0xff]
  %v233 = vld [vmem:[%s1 + $0x478] sm:$0xff]
  %v234 = vld [vmem:[%s1 + $0x480] sm:$0xff]
  %v235 = vld [vmem:[%s1 + $0x488] sm:$0xff]
  %v236 = vld [vmem:[%s1 + $0x490] sm:$0xff]
  %v237 = vld [vmem:[%s1 + $0x498] sm:$0xff]
  %v238 = vld [vmem:[%s1 + $0x4a0] sm:$0xff]
  %v239 = vld [vmem:[%s1 + $0x4a8] sm:$0xff]
  %v240 = vld [vmem:[%s1 + $0x4b0] sm:$0xff]
  %v241 = vld [vmem:[%s1 + $0x4b8] sm:$0xff]
  %v242 = vld [vmem:[%s1 + $0x4c0] sm:$0xff]
  %v243 = vld [vmem:[%s1 + $0x4c8] sm:$0xff]
  %v244 = vld [vmem:[%s1 + $0x4d0] sm:$0xff]
  %v245 = vld [vmem:[%s1 + $0x4d8] sm:$0xff]
  %v246 = vld [vmem:[%s1 + $0x4e0] sm:$0xff]
  %v247 = vld [vmem:[%s1 + $0x4e8] sm:$0xff]
  %v248 = vld [vmem:[%s1 + $0x4f0] sm:$0xff]
  %v249 = vld [vmem:[%s1 + $0x4f8] sm:$0xff]
  %v250 = vld [vmem:[%s1 + $0x500] sm:$0xff]
  %v251 = vld [vmem:[%s1 + $0x508] sm:$0xff]
  %v252 = vld [vmem:[%s1 + $0x510] sm:$0xff]
  %v253 = vld [vmem:[%s1 + $0x518] sm:$0xff]
  %v254 = vld [vmem:[%s1 + $0x520] sm:$0xff]
  %v255 = vld [vmem:[%s1 + $0x528] sm:$0xff]
  %v256 = vld [vmem:[%s1 + $0x530] sm:$0xff]
  %v257 = vld [vmem:[%s1 + $0x538] sm:$0xff]
  %v258 = vld [vmem:[%s1 + $0x540] sm:$0xff]
  %v259 = vld [vmem:[%s1 + $0x548] sm:$0xff]
  %v260 = vld [vmem:[%s1 + $0x550] sm:$0xff]
  %v261 = vld [vmem:[%s1 + $0x558] sm:$0xff]
  %v262 = vld [vmem:[%s1 + $0x560] sm:$0xff]
  %v263 = vld [vmem:[%s1 + $0x568] sm:$0xff]
  %v264 = vld [vmem:[%s1 + $0x570] sm:$0xff]
  %v265 = vld [vmem:[%s1 + $0x578] sm:$0xff]
  %v266 = vld [vmem:[%s1 + $0x580] sm:$0xff]
  %v267 = vld [vmem:[%s1 + $0x588] sm:$0xff]
  %v268 = vld [vmem:[%s1 + $0x590] sm:$0xff]
  %v269 = vld [vmem:[%s1 + $0x598] sm:$0xff]
  %v270 = vld [vmem:[%s1 + $0x5a0] sm:$0xff]
  %v271 = vld [vmem:[%s1 + $0x5a8] sm:$0xff]
  %v272 = vld [vmem:[%s1 + $0x5b0] sm:$0xff]
  %v273 = vld [vmem:[%s1 + $0x5b8] sm:$0xff]
  %v274 = vld [vmem:[%s1 + $0x5c0] sm:$0xff]
  %v275 = vld [vmem:[%s1 + $0x5c8] sm:$0xff]
  %v276 = vld [vmem:[%s1 + $0x5d0] sm:$0xff]
  %v277 = vld [vmem:[%s1 + $0x5d8] sm:$0xff]
  %v278 = vld [vmem:[%s1 + $0x5e0] sm:$0xff]
  %v279 = vld [vmem:[%s1 + $0x5e8] sm:$0xff]
  %v280 = vld [vmem:[%s1 + $0x5f0] sm:$0xff]
  %v281 = vld [vmem:[%s1 + $0x5f8] sm:$0xff]
  %v282 = vld [vmem:[%s1 + $0x600] sm:$0xff]
  %v283 = vld [vmem:[%s1 + $0x608] sm:$0xff]
  %v284 = vld [vmem:[%s1 + $0x610] sm:$0xff]
  %v285 = vld [vmem:[%s1 + $0x618] sm:$0xff]
  %v286 = vld [vmem:[%s1 + $0x620] sm:$0xff]
  %v287 = vld [vmem:[%s1 + $0x628] sm:$0xff]
  %v288 = vld [vmem:[%s1 + $0x630] sm:$0xff]
  %v289 = vld [vmem:[%s1 + $0x638] sm:$0xff]
  %v290 = vld [vmem:[%s1 + $0x640] sm:$0xff]
  %v291 = vld [vmem:[%s1 + $0x648] sm:$0xff]
  %v292 = vld [vmem:[%s1 + $0x650] sm:$0xff]
  %v293 = vld [vmem:[%s1 + $0x658] sm:$0xff]
  %v294 = vld [vmem:[%s1 + $0x660] sm:$0xff]
  %v295 = vld [vmem:[%s1 + $0x668] sm:$0xff]
  %v296 = vld [vmem:[%s1 + $0x670] sm:$0xff]
  %v297 = vld [vmem:[%s1 + $0x678] sm:$0xff]
  %v298 = vld [vmem:[%s1 + $0x680] sm:$0xff]
  %v299 = vld [vmem:[%s1 + $0x688] sm:$0xff]
  %v300 = vld [vmem:[%s1 + $0x690] sm:$0xff]
  %v301 = vld [vmem:[%s1 + $0x698] sm:$0xff]
  %v302 = vld [vmem:[%s1 + $0x6a0] sm:$0xff]
  %v303 = vld [vmem:[%s1 + $0x6a8] sm:$0xff]
  %v304 = vld [vmem:[%s1 + $0x6b0] sm:$0xff]
  %v305 = vld [vmem:[%s1 + $0x6b8] sm:$0xff]
  %v306 = vld [vmem:[%s1 + $0x6c0] sm:$0xff]
  %v307 = vld [vmem:[%s1 + $0x6c8] sm:$0xff]
  %v308 = vld [vmem:[%s1 + $0x6d0] sm:$0xff]
  %v309 = vld [vmem:[%s1 + $0x6d8] sm:$0xff]
  %v310 = vld [vmem:[%s1 + $0x6e0] sm:$0xff]
  %v311 = vld [vmem:[%s1 + $0x6e8] sm:$0xff]
  %v312 = vld [vmem:[%s1 + $0x6f0] sm:$0xff]
  %v313 = vld [vmem:[%s1 + $0x6f8] sm:$0xff]
  %v314 = vld [vmem:[%s1 + $0x700] sm:$0xff]
  %v315 = vld [vmem:[%s1 + $0x708] sm:$0xff]
  %v316 = vld [vmem:[%s1 + $0x710] sm:$0xff]
  %v317 = vld [vmem:[%s1 + $0x718] sm:$0xff]
  %v318 = vld [vmem:[%s1 + $0x720] sm:$0xff]
  %v319 = vld [vmem:[%s1 + $0x728] sm:$0xff]
  %v320 = vld [vmem:[%s1 + $0x730] sm:$0xff]
  %v321 = vld [vmem:[%s1 + $0x738] sm:$0xff]
  %v322 = vld [vmem:[%s1 + $0x740] sm:$0xff]
  %v323 = vld [vmem:[%s1 + $0x748] sm:$0xff]
  %v324 = vld [vmem:[%s1 + $0x750] sm:$0xff]
  %v325 = vld [vmem:[%s1 + $0x758] sm:$0xff]
  %v326 = vld [vmem:[%s1 + $0x760] sm:$0xff]
  %v327 = vld [vmem:[%s1 + $0x768] sm:$0xff]
  %v328 = vld [vmem:[%s1 + $0x770] sm:$0xff]
  %v329 = vld [vmem:[%s1 + $0x778] sm:$0xff]
  %v330 = vld [vmem:[%s1 + $0x780] sm:$0xff]
  %v331 = vld [vmem:[%s1 + $0x788] sm:$0xff]
  %v332 = vld [vmem:[%s1 + $0x790] sm:$0xff]
  %v333 = vld [vmem:[%s1 + $0x798] sm:$0xff]
  %v334 = vld [vmem:[%s1 + $0x7a0] sm:$0xff]
  %v335 = vld [vmem:[%s1 + $0x7a8] sm:$0xff]
  %v336 = vld [vmem:[%s1 + $0x7b0] sm:$0xff]
  %v337 = vld [vmem:[%s1 + $0x7b8] sm:$0xff]
  %v338 = vld [vmem:[%s1 + $0x7c0] sm:$0xff]
  %v339 = vld [vmem:[%s1 + $0x7c8] sm:$0xff]
  %v340 = vld [vmem:[%s1 + $0x7d0] sm:$0xff]
  %v341 = vld [vmem:[%s1 + $0x7d8] sm:$0xff]
  %v342 = vld [vmem:[%s1 + $0x7e0] sm:$0xff]
  %v343 = vld [vmem:[%s1 + $0x7e8] sm:$0xff]
  %v344 = vld [vmem:[%s1 + $0x7f0] sm:$0xff]
  %v345 = vld [vmem:[%s1 + $0x7f8] sm:$0xff]
  %v346 = vld [vmem:[%s1 + $0x800] sm:$0xff]
  %v347 = vld [vmem:[%s1 + $0x808] sm:$0xff]
  %v348 = vld [vmem:[%s1 + $0x810] sm:$0xff]
  %v349 = vld [vmem:[%s1 + $0x818] sm:$0xff]
  %v350 = vld [vmem:[%s1 + $0x820] sm:$0xff]
  %v351 = vld [vmem:[%s1 + $0x828] sm:$0xff]
  %v352 = vld [vmem:[%s1 + $0x830] sm:$0xff]
  %v353 = vld [vmem:[%s1 + $0x838] sm:$0xff]
  %v354 = vld [vmem:[%s1 + $0x840] sm:$0xff]
  %v355 = vld [vmem:[%s1 + $0x848] sm:$0xff]
  %v356 = vld [vmem:[%s1 + $0x850] sm:$0xff]
  %v357 = vld [vmem:[%s1 + $0x858] sm:$0xff]
  %v358 = vld [vmem:[%s1 + $0x860] sm:$0xff]
  %v359 = vld [vmem:[%s1 + $0x868] sm:$0xff]
  %v360 = vld [vmem:[%s1 + $0x870] sm:$0xff]
  %v361 = vld [vmem:[%s1 + $0x878] sm:$0xff]
  %v362 = vld [vmem:[%s1 + $0x880] sm:$0xff]
  %v363 = vld [vmem:[%s1 + $0x888] sm:$0xff]
  %v364 = vld [vmem:[%s1 + $0x890] sm:$0xff]
  %v365 = vld [vmem:[%s1 + $0x898] sm:$0xff]
  %v366 = vld [vmem:[%s1 + $0x8a0] sm:$0xff]
  %v367 = vld [vmem:[%s1 + $0x8a8] sm:$0xff]
  %v368 = vld [vmem:[%s1 + $0x8b0] sm:$0xff]
  %v369 = vld [vmem:[%s1 + $0x8b8] sm:$0xff]
  %v370 = vld [vmem:[%s1 + $0x8c0] sm:$0xff]
  %v371 = vld [vmem:[%s1 + $0x8c8] sm:$0xff]
  %v372 = vld [vmem:[%s1 + $0x8d0] sm:$0xff]
  %v373 = vld [vmem:[%s1 + $0x8d8] sm:$0xff]
  %v374 = vld [vmem:[%s1 + $0x8e0] sm:$0xff]
  %v375 = vld [vmem:[%s1 + $0x8e8] sm:$0xff]
  %v376 = vld [vmem:[%s1 + $0x8f0] sm:$0xff]
  %v377 = vld [vmem:[%s1 + $0x8f8] sm:$0xff]
  %v378 = vld [vmem:[%s1 + $0x900] sm:$0xff]
  %v379 = vld [vmem:[%s1 + $0x908] sm:$0xff]
  %v380 = vld [vmem:[%s1 + $0x910] sm:$0xff]
  %v381 = vld [vmem:[%s1 + $0x918] sm:$0xff]
  %v382 = vld [vmem:[%s1 + $0x920] sm:$0xff]
  %v383 = vld [vmem:[%s1 + $0x928] sm:$0xff]
  %v384 = vld [vmem:[%s1 + $0x930] sm:$0xff]
  %v385 = vld [vmem:[%s1 + $0x938] sm:$0xff]
  %v386 = vld [vmem:[%s1 + $0x940] sm:$0xff]
  %v387 = vld [vmem:[%s1 + $0x948] sm:$0xff]
  %v388 = vld [vmem:[%s1 + $0x950] sm:$0xff]
  %v389 = vld [vmem:[%s1 + $0x958] sm:$0xff]
  %v390 = vld [vmem:[%s1 + $0x960] sm:$0xff]
  %v391 = vld [vmem:[%s1 + $0x968] sm:$0xff]
  %v392 = vld [vmem:[%s1 + $0x970] sm:$0xff]
  %v393 = vld [vmem:[%s1 + $0x978] sm:$0xff]
  %v394 = vld [vmem:[%s1 + $0x980] sm:$0xff]
  %v395 = vld [vmem:[%s1 + $0x988] sm:$0xff]
  %v396 = vld [vmem:[%s1 + $0x990] sm:$0xff]
  %v397 = vld [vmem:[%s1 + $0x998] sm:$0xff]
  %v398 = vld [vmem:[%s1 + $0x9a0] sm:$0xff]
  %v399 = vld [vmem:[%s1 + $0x9a8] sm:$0xff]
  %v400 = vld [vmem:[%s1 + $0x9b0] sm:$0xff]
  %v401 = vld [vmem:[%s1 + $0x9b8] sm:$0xff]
  %v402 = vld [vmem:[%s1 + $0x9c0] sm:$0xff]
  %v403 = vld [vmem:[%s1 + $0x9c8] sm:$0xff]
  %v404 = vld [vmem:[%s1 + $0x9d0] sm:$0xff]
  %v405 = vld [vmem:[%s1 + $0x9d8] sm:$0xff]
  %v406 = vld [vmem:[%s1 + $0x9e0] sm:$0xff]
  %v407 = vld [vmem:[%s1 + $0x9e8] sm:$0xff]
  %v408 = vld [vmem:[%s1 + $0x9f0] sm:$0xff]
  %v409 = vld [vmem:[%s1 + $0x9f8] sm:$0xff]
  %v410 = vld [vmem:[%s2] sm:$0xf]
  %v412 = vlaneseq
  %v413 = vshrl.u32 %v412, 7
  %v414 = vsub.s32 0, %v413
  %v415 = vrot.slane %v410, %v414
  %v416 = vlaneseq
  %v417 = vshrl.u32 %v416, 7
  %v418 = vsub.s32 1, %v417
  %v419 = vrot.slane %v410, %v418
  %v420 = vlaneseq
  %v421 = vshrl.u32 %v420, 7
  %v422 = vsub.s32 2, %v421
  %v423 = vrot.slane %v410, %v422
  %v424 = vlaneseq
  %v425 = vshrl.u32 %v424, 7
  %v426 = vsub.s32 3, %v425
  %v427 = vrot.slane %v410, %v426
  %v752 = vunpack.c.l.b16 %v90
  %v753 = vunpack.c.h.b16 %v90
  %v754 = vunpack.c.l.b16 %v91
  %v755 = vunpack.c.h.b16 %v91
  %v756 = vunpack.c.l.b16 %v92
  %v757 = vunpack.c.h.b16 %v92
  %v758 = vunpack.c.l.b16 %v93
  %v759 = vunpack.c.h.b16 %v93
  %v760 = vunpack.c.l.b16 %v94
  %v761 = vunpack.c.h.b16 %v94
  %v762 = vunpack.c.l.b16 %v95
  %v763 = vunpack.c.h.b16 %v95
  %v764 = vunpack.c.l.b16 %v96
  %v765 = vunpack.c.h.b16 %v96
  %v766 = vunpack.c.l.b16 %v97
  %v767 = vunpack.c.h.b16 %v97
  %v768 = vunpack.c.l.b16 %v98
  %v769 = vunpack.c.h.b16 %v98
  %v770 = vunpack.c.l.b16 %v99
  %v771 = vunpack.c.h.b16 %v99
  %v772 = vunpack.c.l.b16 %v100
  %v773 = vunpack.c.h.b16 %v100
  %v774 = vunpack.c.l.b16 %v101
  %v775 = vunpack.c.h.b16 %v101
  %v776 = vunpack.c.l.b16 %v102
  %v777 = vunpack.c.h.b16 %v102
  %v778 = vunpack.c.l.b16 %v103
  %v779 = vunpack.c.h.b16 %v103
  %v780 = vunpack.c.l.b16 %v104
  %v781 = vunpack.c.h.b16 %v104
  %v782 = vunpack.c.l.b16 %v105
  %v783 = vunpack.c.h.b16 %v105
  %v784 = vunpack.c.l.b16 %v106
  %v785 = vunpack.c.h.b16 %v106
  %v786 = vunpack.c.l.b16 %v107
  %v787 = vunpack.c.h.b16 %v107
  %v788 = vunpack.c.l.b16 %v108
  %v789 = vunpack.c.h.b16 %v108
  %v790 = vunpack.c.l.b16 %v109
  %v791 = vunpack.c.h.b16 %v109
  %v792 = vunpack.c.l.b16 %v110
  %v793 = vunpack.c.h.b16 %v110
  %v794 = vunpack.c.l.b16 %v111
  %v795 = vunpack.c.h.b16 %v111
  %v796 = vunpack.c.l.b16 %v112
  %v797 = vunpack.c.h.b16 %v112
  %v798 = vunpack.c.l.b16 %v113
  %v799 = vunpack.c.h.b16 %v113
  %v800 = vunpack.c.l.b16 %v114
  %v801 = vunpack.c.h.b16 %v114
  %v802 = vunpack.c.l.b16 %v115
  %v803 = vunpack.c.h.b16 %v115
  %v804 = vunpack.c.l.b16 %v116
  %v805 = vunpack.c.h.b16 %v116
  %v806 = vunpack.c.l.b16 %v117
  %v807 = vunpack.c.h.b16 %v117
  %v808 = vunpack.c.l.b16 %v118
  %v809 = vunpack.c.h.b16 %v118
  %v810 = vunpack.c.l.b16 %v119
  %v811 = vunpack.c.h.b16 %v119
  %v812 = vunpack.c.l.b16 %v120
  %v813 = vunpack.c.h.b16 %v120
  %v814 = vunpack.c.l.b16 %v121
  %v815 = vunpack.c.h.b16 %v121
  %v816 = vunpack.c.l.b16 %v122
  %v817 = vunpack.c.h.b16 %v122
  %v818 = vunpack.c.l.b16 %v123
  %v819 = vunpack.c.h.b16 %v123
  %v820 = vunpack.c.l.b16 %v124
  %v821 = vunpack.c.h.b16 %v124
  %v822 = vunpack.c.l.b16 %v125
  %v823 = vunpack.c.h.b16 %v125
  %v824 = vunpack.c.l.b16 %v126
  %v825 = vunpack.c.h.b16 %v126
  %v826 = vunpack.c.l.b16 %v127
  %v827 = vunpack.c.h.b16 %v127
  %v828 = vunpack.c.l.b16 %v128
  %v829 = vunpack.c.h.b16 %v128
  %v830 = vunpack.c.l.b16 %v129
  %v831 = vunpack.c.h.b16 %v129
  %v832 = vunpack.c.l.b16 %v130
  %v833 = vunpack.c.h.b16 %v130
  %v834 = vunpack.c.l.b16 %v131
  %v835 = vunpack.c.h.b16 %v131
  %v836 = vunpack.c.l.b16 %v132
  %v837 = vunpack.c.h.b16 %v132
  %v838 = vunpack.c.l.b16 %v133
  %v839 = vunpack.c.h.b16 %v133
  %v840 = vunpack.c.l.b16 %v134
  %v841 = vunpack.c.h.b16 %v134
  %v842 = vunpack.c.l.b16 %v135
  %v843 = vunpack.c.h.b16 %v135
  %v844 = vunpack.c.l.b16 %v136
  %v845 = vunpack.c.h.b16 %v136
  %v846 = vunpack.c.l.b16 %v137
  %v847 = vunpack.c.h.b16 %v137
  %v848 = vunpack.c.l.b16 %v138
  %v849 = vunpack.c.h.b16 %v138
  %v850 = vunpack.c.l.b16 %v139
  %v851 = vunpack.c.h.b16 %v139
  %v852 = vunpack.c.l.b16 %v140
  %v853 = vunpack.c.h.b16 %v140
  %v854 = vunpack.c.l.b16 %v141
  %v855 = vunpack.c.h.b16 %v141
  %v856 = vunpack.c.l.b16 %v142
  %v857 = vunpack.c.h.b16 %v142
  %v858 = vunpack.c.l.b16 %v143
  %v859 = vunpack.c.h.b16 %v143
  %v860 = vunpack.c.l.b16 %v144
  %v861 = vunpack.c.h.b16 %v144
  %v862 = vunpack.c.l.b16 %v145
  %v863 = vunpack.c.h.b16 %v145
  %v864 = vunpack.c.l.b16 %v146
  %v865 = vunpack.c.h.b16 %v146
  %v866 = vunpack.c.l.b16 %v147
  %v867 = vunpack.c.h.b16 %v147
  %v868 = vunpack.c.l.b16 %v148
  %v869 = vunpack.c.h.b16 %v148
  %v870 = vunpack.c.l.b16 %v149
  %v871 = vunpack.c.h.b16 %v149
  %v872 = vunpack.c.l.b16 %v150
  %v873 = vunpack.c.h.b16 %v150
  %v874 = vunpack.c.l.b16 %v151
  %v875 = vunpack.c.h.b16 %v151
  %v876 = vunpack.c.l.b16 %v152
  %v877 = vunpack.c.h.b16 %v152
  %v878 = vunpack.c.l.b16 %v153
  %v879 = vunpack.c.h.b16 %v153
  %v880 = vunpack.c.l.b16 %v154
  %v881 = vunpack.c.h.b16 %v154
  %v882 = vunpack.c.l.b16 %v155
  %v883 = vunpack.c.h.b16 %v155
  %v884 = vunpack.c.l.b16 %v156
  %v885 = vunpack.c.h.b16 %v156
  %v886 = vunpack.c.l.b16 %v157
  %v887 = vunpack.c.h.b16 %v157
  %v888 = vunpack.c.l.b16 %v158
  %v889 = vunpack.c.h.b16 %v158
  %v890 = vunpack.c.l.b16 %v159
  %v891 = vunpack.c.h.b16 %v159
  %v892 = vunpack.c.l.b16 %v160
  %v893 = vunpack.c.h.b16 %v160
  %v894 = vunpack.c.l.b16 %v161
  %v895 = vunpack.c.h.b16 %v161
  %v896 = vunpack.c.l.b16 %v162
  %v897 = vunpack.c.h.b16 %v162
  %v898 = vunpack.c.l.b16 %v163
  %v899 = vunpack.c.h.b16 %v163
  %v900 = vunpack.c.l.b16 %v164
  %v901 = vunpack.c.h.b16 %v164
  %v902 = vunpack.c.l.b16 %v165
  %v903 = vunpack.c.h.b16 %v165
  %v904 = vunpack.c.l.b16 %v166
  %v905 = vunpack.c.h.b16 %v166
  %v906 = vunpack.c.l.b16 %v167
  %v907 = vunpack.c.h.b16 %v167
  %v908 = vunpack.c.l.b16 %v168
  %v909 = vunpack.c.h.b16 %v168
  %v910 = vunpack.c.l.b16 %v169
  %v911 = vunpack.c.h.b16 %v169
  %v912 = vunpack.c.l.b16 %v170
  %v913 = vunpack.c.h.b16 %v170
  %v914 = vunpack.c.l.b16 %v171
  %v915 = vunpack.c.h.b16 %v171
  %v916 = vunpack.c.l.b16 %v172
  %v917 = vunpack.c.h.b16 %v172
  %v918 = vunpack.c.l.b16 %v173
  %v919 = vunpack.c.h.b16 %v173
  %v920 = vunpack.c.l.b16 %v174
  %v921 = vunpack.c.h.b16 %v174
  %v922 = vunpack.c.l.b16 %v175
  %v923 = vunpack.c.h.b16 %v175
  %v924 = vunpack.c.l.b16 %v176
  %v925 = vunpack.c.h.b16 %v176
  %v926 = vunpack.c.l.b16 %v177
  %v927 = vunpack.c.h.b16 %v177
  %v928 = vunpack.c.l.b16 %v178
  %v929 = vunpack.c.h.b16 %v178
  %v930 = vunpack.c.l.b16 %v179
  %v931 = vunpack.c.h.b16 %v179
  %v932 = vunpack.c.l.b16 %v180
  %v933 = vunpack.c.h.b16 %v180
  %v934 = vunpack.c.l.b16 %v181
  %v935 = vunpack.c.h.b16 %v181
  %v936 = vunpack.c.l.b16 %v182
  %v937 = vunpack.c.h.b16 %v182
  %v938 = vunpack.c.l.b16 %v183
  %v939 = vunpack.c.h.b16 %v183
  %v940 = vunpack.c.l.b16 %v184
  %v941 = vunpack.c.h.b16 %v184
  %v942 = vunpack.c.l.b16 %v185
  %v943 = vunpack.c.h.b16 %v185
  %v944 = vunpack.c.l.b16 %v186
  %v945 = vunpack.c.h.b16 %v186
  %v946 = vunpack.c.l.b16 %v187
  %v947 = vunpack.c.h.b16 %v187
  %v948 = vunpack.c.l.b16 %v188
  %v949 = vunpack.c.h.b16 %v188
  %v950 = vunpack.c.l.b16 %v189
  %v951 = vunpack.c.h.b16 %v189
  %v952 = vunpack.c.l.b16 %v190
  %v953 = vunpack.c.h.b16 %v190
  %v954 = vunpack.c.l.b16 %v191
  %v955 = vunpack.c.h.b16 %v191
  %v956 = vunpack.c.l.b16 %v192
  %v957 = vunpack.c.h.b16 %v192
  %v958 = vunpack.c.l.b16 %v193
  %v959 = vunpack.c.h.b16 %v193
  %v960 = vunpack.c.l.b16 %v194
  %v961 = vunpack.c.h.b16 %v194
  %v962 = vunpack.c.l.b16 %v195
  %v963 = vunpack.c.h.b16 %v195
  %v964 = vunpack.c.l.b16 %v196
  %v965 = vunpack.c.h.b16 %v196
  %v966 = vunpack.c.l.b16 %v197
  %v967 = vunpack.c.h.b16 %v197
  %v968 = vunpack.c.l.b16 %v198
  %v969 = vunpack.c.h.b16 %v198
  %v970 = vunpack.c.l.b16 %v199
  %v971 = vunpack.c.h.b16 %v199
  %v972 = vunpack.c.l.b16 %v200
  %v973 = vunpack.c.h.b16 %v200
  %v974 = vunpack.c.l.b16 %v201
  %v975 = vunpack.c.h.b16 %v201
  %v976 = vunpack.c.l.b16 %v202
  %v977 = vunpack.c.h.b16 %v202
  %v978 = vunpack.c.l.b16 %v203
  %v979 = vunpack.c.h.b16 %v203
  %v980 = vunpack.c.l.b16 %v204
  %v981 = vunpack.c.h.b16 %v204
  %v982 = vunpack.c.l.b16 %v205
  %v983 = vunpack.c.h.b16 %v205
  %v984 = vunpack.c.l.b16 %v206
  %v985 = vunpack.c.h.b16 %v206
  %v986 = vunpack.c.l.b16 %v207
  %v987 = vunpack.c.h.b16 %v207
  %v988 = vunpack.c.l.b16 %v208
  %v989 = vunpack.c.h.b16 %v208
  %v990 = vunpack.c.l.b16 %v209
  %v991 = vunpack.c.h.b16 %v209
  %v992 = vunpack.c.l.b16 %v210
  %v993 = vunpack.c.h.b16 %v210
  %v994 = vunpack.c.l.b16 %v211
  %v995 = vunpack.c.h.b16 %v211
  %v996 = vunpack.c.l.b16 %v212
  %v997 = vunpack.c.h.b16 %v212
  %v998 = vunpack.c.l.b16 %v213
  %v999 = vunpack.c.h.b16 %v213
  %v1000 = vunpack.c.l.b16 %v214
  %v1001 = vunpack.c.h.b16 %v214
  %v1002 = vunpack.c.l.b16 %v215
  %v1003 = vunpack.c.h.b16 %v215
  %v1004 = vunpack.c.l.b16 %v216
  %v1005 = vunpack.c.h.b16 %v216
  %v1006 = vunpack.c.l.b16 %v217
  %v1007 = vunpack.c.h.b16 %v217
  %v1008 = vunpack.c.l.b16 %v218
  %v1009 = vunpack.c.h.b16 %v218
  %v1010 = vunpack.c.l.b16 %v219
  %v1011 = vunpack.c.h.b16 %v219
  %v1012 = vunpack.c.l.b16 %v220
  %v1013 = vunpack.c.h.b16 %v220
  %v1014 = vunpack.c.l.b16 %v221
  %v1015 = vunpack.c.h.b16 %v221
  %v1016 = vunpack.c.l.b16 %v222
  %v1017 = vunpack.c.h.b16 %v222
  %v1018 = vunpack.c.l.b16 %v223
  %v1019 = vunpack.c.h.b16 %v223
  %v1020 = vunpack.c.l.b16 %v224
  %v1021 = vunpack.c.h.b16 %v224
  %v1022 = vunpack.c.l.b16 %v225
  %v1023 = vunpack.c.h.b16 %v225
  %v1024 = vunpack.c.l.b16 %v226
  %v1025 = vunpack.c.h.b16 %v226
  %v1026 = vunpack.c.l.b16 %v227
  %v1027 = vunpack.c.h.b16 %v227
  %v1028 = vunpack.c.l.b16 %v228
  %v1029 = vunpack.c.h.b16 %v228
  %v1030 = vunpack.c.l.b16 %v229
  %v1031 = vunpack.c.h.b16 %v229
  %v1032 = vunpack.c.l.b16 %v230
  %v1033 = vunpack.c.h.b16 %v230
  %v1034 = vunpack.c.l.b16 %v231
  %v1035 = vunpack.c.h.b16 %v231
  %v1036 = vunpack.c.l.b16 %v232
  %v1037 = vunpack.c.h.b16 %v232
  %v1038 = vunpack.c.l.b16 %v233
  %v1039 = vunpack.c.h.b16 %v233
  %v1040 = vunpack.c.l.b16 %v234
  %v1041 = vunpack.c.h.b16 %v234
  %v1042 = vunpack.c.l.b16 %v235
  %v1043 = vunpack.c.h.b16 %v235
  %v1044 = vunpack.c.l.b16 %v236
  %v1045 = vunpack.c.h.b16 %v236
  %v1046 = vunpack.c.l.b16 %v237
  %v1047 = vunpack.c.h.b16 %v237
  %v1048 = vunpack.c.l.b16 %v238
  %v1049 = vunpack.c.h.b16 %v238
  %v1050 = vunpack.c.l.b16 %v239
  %v1051 = vunpack.c.h.b16 %v239
  %v1052 = vunpack.c.l.b16 %v240
  %v1053 = vunpack.c.h.b16 %v240
  %v1054 = vunpack.c.l.b16 %v241
  %v1055 = vunpack.c.h.b16 %v241
  %v1056 = vunpack.c.l.b16 %v242
  %v1057 = vunpack.c.h.b16 %v242
  %v1058 = vunpack.c.l.b16 %v243
  %v1059 = vunpack.c.h.b16 %v243
  %v1060 = vunpack.c.l.b16 %v244
  %v1061 = vunpack.c.h.b16 %v244
  %v1062 = vunpack.c.l.b16 %v245
  %v1063 = vunpack.c.h.b16 %v245
  %v1064 = vunpack.c.l.b16 %v246
  %v1065 = vunpack.c.h.b16 %v246
  %v1066 = vunpack.c.l.b16 %v247
  %v1067 = vunpack.c.h.b16 %v247
  %v1068 = vunpack.c.l.b16 %v248
  %v1069 = vunpack.c.h.b16 %v248
  %v1070 = vunpack.c.l.b16 %v249
  %v1071 = vunpack.c.h.b16 %v249
  %v1072 = vunpack.c.l.b16 %v250
  %v1073 = vunpack.c.h.b16 %v250
  %v1074 = vunpack.c.l.b16 %v251
  %v1075 = vunpack.c.h.b16 %v251
  %v1076 = vunpack.c.l.b16 %v252
  %v1077 = vunpack.c.h.b16 %v252
  %v1078 = vunpack.c.l.b16 %v253
  %v1079 = vunpack.c.h.b16 %v253
  %v1080 = vunpack.c.l.b16 %v254
  %v1081 = vunpack.c.h.b16 %v254
  %v1082 = vunpack.c.l.b16 %v255
  %v1083 = vunpack.c.h.b16 %v255
  %v1084 = vunpack.c.l.b16 %v256
  %v1085 = vunpack.c.h.b16 %v256
  %v1086 = vunpack.c.l.b16 %v257
  %v1087 = vunpack.c.h.b16 %v257
  %v1088 = vunpack.c.l.b16 %v258
  %v1089 = vunpack.c.h.b16 %v258
  %v1090 = vunpack.c.l.b16 %v259
  %v1091 = vunpack.c.h.b16 %v259
  %v1092 = vunpack.c.l.b16 %v260
  %v1093 = vunpack.c.h.b16 %v260
  %v1094 = vunpack.c.l.b16 %v261
  %v1095 = vunpack.c.h.b16 %v261
  %v1096 = vunpack.c.l.b16 %v262
  %v1097 = vunpack.c.h.b16 %v262
  %v1098 = vunpack.c.l.b16 %v263
  %v1099 = vunpack.c.h.b16 %v263
  %v1100 = vunpack.c.l.b16 %v264
  %v1101 = vunpack.c.h.b16 %v264
  %v1102 = vunpack.c.l.b16 %v265
  %v1103 = vunpack.c.h.b16 %v265
  %v1104 = vunpack.c.l.b16 %v266
  %v1105 = vunpack.c.h.b16 %v266
  %v1106 = vunpack.c.l.b16 %v267
  %v1107 = vunpack.c.h.b16 %v267
  %v1108 = vunpack.c.l.b16 %v268
  %v1109 = vunpack.c.h.b16 %v268
  %v1110 = vunpack.c.l.b16 %v269
  %v1111 = vunpack.c.h.b16 %v269
  %v1112 = vunpack.c.l.b16 %v270
  %v1113 = vunpack.c.h.b16 %v270
  %v1114 = vunpack.c.l.b16 %v271
  %v1115 = vunpack.c.h.b16 %v271
  %v1116 = vunpack.c.l.b16 %v272
  %v1117 = vunpack.c.h.b16 %v272
  %v1118 = vunpack.c.l.b16 %v273
  %v1119 = vunpack.c.h.b16 %v273
  %v1120 = vunpack.c.l.b16 %v274
  %v1121 = vunpack.c.h.b16 %v274
  %v1122 = vunpack.c.l.b16 %v275
  %v1123 = vunpack.c.h.b16 %v275
  %v1124 = vunpack.c.l.b16 %v276
  %v1125 = vunpack.c.h.b16 %v276
  %v1126 = vunpack.c.l.b16 %v277
  %v1127 = vunpack.c.h.b16 %v277
  %v1128 = vunpack.c.l.b16 %v278
  %v1129 = vunpack.c.h.b16 %v278
  %v1130 = vunpack.c.l.b16 %v279
  %v1131 = vunpack.c.h.b16 %v279
  %v1132 = vunpack.c.l.b16 %v280
  %v1133 = vunpack.c.h.b16 %v280
  %v1134 = vunpack.c.l.b16 %v281
  %v1135 = vunpack.c.h.b16 %v281
  %v1136 = vunpack.c.l.b16 %v282
  %v1137 = vunpack.c.h.b16 %v282
  %v1138 = vunpack.c.l.b16 %v283
  %v1139 = vunpack.c.h.b16 %v283
  %v1140 = vunpack.c.l.b16 %v284
  %v1141 = vunpack.c.h.b16 %v284
  %v1142 = vunpack.c.l.b16 %v285
  %v1143 = vunpack.c.h.b16 %v285
  %v1144 = vunpack.c.l.b16 %v286
  %v1145 = vunpack.c.h.b16 %v286
  %v1146 = vunpack.c.l.b16 %v287
  %v1147 = vunpack.c.h.b16 %v287
  %v1148 = vunpack.c.l.b16 %v288
  %v1149 = vunpack.c.h.b16 %v288
  %v1150 = vunpack.c.l.b16 %v289
  %v1151 = vunpack.c.h.b16 %v289
  %v1152 = vunpack.c.l.b16 %v290
  %v1153 = vunpack.c.h.b16 %v290
  %v1154 = vunpack.c.l.b16 %v291
  %v1155 = vunpack.c.h.b16 %v291
  %v1156 = vunpack.c.l.b16 %v292
  %v1157 = vunpack.c.h.b16 %v292
  %v1158 = vunpack.c.l.b16 %v293
  %v1159 = vunpack.c.h.b16 %v293
  %v1160 = vunpack.c.l.b16 %v294
  %v1161 = vunpack.c.h.b16 %v294
  %v1162 = vunpack.c.l.b16 %v295
  %v1163 = vunpack.c.h.b16 %v295
  %v1164 = vunpack.c.l.b16 %v296
  %v1165 = vunpack.c.h.b16 %v296
  %v1166 = vunpack.c.l.b16 %v297
  %v1167 = vunpack.c.h.b16 %v297
  %v1168 = vunpack.c.l.b16 %v298
  %v1169 = vunpack.c.h.b16 %v298
  %v1170 = vunpack.c.l.b16 %v299
  %v1171 = vunpack.c.h.b16 %v299
  %v1172 = vunpack.c.l.b16 %v300
  %v1173 = vunpack.c.h.b16 %v300
  %v1174 = vunpack.c.l.b16 %v301
  %v1175 = vunpack.c.h.b16 %v301
  %v1176 = vunpack.c.l.b16 %v302
  %v1177 = vunpack.c.h.b16 %v302
  %v1178 = vunpack.c.l.b16 %v303
  %v1179 = vunpack.c.h.b16 %v303
  %v1180 = vunpack.c.l.b16 %v304
  %v1181 = vunpack.c.h.b16 %v304
  %v1182 = vunpack.c.l.b16 %v305
  %v1183 = vunpack.c.h.b16 %v305
  %v1184 = vunpack.c.l.b16 %v306
  %v1185 = vunpack.c.h.b16 %v306
  %v1186 = vunpack.c.l.b16 %v307
  %v1187 = vunpack.c.h.b16 %v307
  %v1188 = vunpack.c.l.b16 %v308
  %v1189 = vunpack.c.h.b16 %v308
  %v1190 = vunpack.c.l.b16 %v309
  %v1191 = vunpack.c.h.b16 %v309
  %v1192 = vunpack.c.l.b16 %v310
  %v1193 = vunpack.c.h.b16 %v310
  %v1194 = vunpack.c.l.b16 %v311
  %v1195 = vunpack.c.h.b16 %v311
  %v1196 = vunpack.c.l.b16 %v312
  %v1197 = vunpack.c.h.b16 %v312
  %v1198 = vunpack.c.l.b16 %v313
  %v1199 = vunpack.c.h.b16 %v313
  %v1200 = vunpack.c.l.b16 %v314
  %v1201 = vunpack.c.h.b16 %v314
  %v1202 = vunpack.c.l.b16 %v315
  %v1203 = vunpack.c.h.b16 %v315
  %v1204 = vunpack.c.l.b16 %v316
  %v1205 = vunpack.c.h.b16 %v316
  %v1206 = vunpack.c.l.b16 %v317
  %v1207 = vunpack.c.h.b16 %v317
  %v1208 = vunpack.c.l.b16 %v318
  %v1209 = vunpack.c.h.b16 %v318
  %v1210 = vunpack.c.l.b16 %v319
  %v1211 = vunpack.c.h.b16 %v319
  %v1212 = vunpack.c.l.b16 %v320
  %v1213 = vunpack.c.h.b16 %v320
  %v1214 = vunpack.c.l.b16 %v321
  %v1215 = vunpack.c.h.b16 %v321
  %v1216 = vunpack.c.l.b16 %v322
  %v1217 = vunpack.c.h.b16 %v322
  %v1218 = vunpack.c.l.b16 %v323
  %v1219 = vunpack.c.h.b16 %v323
  %v1220 = vunpack.c.l.b16 %v324
  %v1221 = vunpack.c.h.b16 %v324
  %v1222 = vunpack.c.l.b16 %v325
  %v1223 = vunpack.c.h.b16 %v325
  %v1224 = vunpack.c.l.b16 %v326
  %v1225 = vunpack.c.h.b16 %v326
  %v1226 = vunpack.c.l.b16 %v327
  %v1227 = vunpack.c.h.b16 %v327
  %v1228 = vunpack.c.l.b16 %v328
  %v1229 = vunpack.c.h.b16 %v328
  %v1230 = vunpack.c.l.b16 %v329
  %v1231 = vunpack.c.h.b16 %v329
  %v1232 = vunpack.c.l.b16 %v330
  %v1233 = vunpack.c.h.b16 %v330
  %v1234 = vunpack.c.l.b16 %v331
  %v1235 = vunpack.c.h.b16 %v331
  %v1236 = vunpack.c.l.b16 %v332
  %v1237 = vunpack.c.h.b16 %v332
  %v1238 = vunpack.c.l.b16 %v333
  %v1239 = vunpack.c.h.b16 %v333
  %v1240 = vunpack.c.l.b16 %v334
  %v1241 = vunpack.c.h.b16 %v334
  %v1242 = vunpack.c.l.b16 %v335
  %v1243 = vunpack.c.h.b16 %v335
  %v1244 = vunpack.c.l.b16 %v336
  %v1245 = vunpack.c.h.b16 %v336
  %v1246 = vunpack.c.l.b16 %v337
  %v1247 = vunpack.c.h.b16 %v337
  %v1248 = vunpack.c.l.b16 %v338
  %v1249 = vunpack.c.h.b16 %v338
  %v1250 = vunpack.c.l.b16 %v339
  %v1251 = vunpack.c.h.b16 %v339
  %v1252 = vunpack.c.l.b16 %v340
  %v1253 = vunpack.c.h.b16 %v340
  %v1254 = vunpack.c.l.b16 %v341
  %v1255 = vunpack.c.h.b16 %v341
  %v1256 = vunpack.c.l.b16 %v342
  %v1257 = vunpack.c.h.b16 %v342
  %v1258 = vunpack.c.l.b16 %v343
  %v1259 = vunpack.c.h.b16 %v343
  %v1260 = vunpack.c.l.b16 %v344
  %v1261 = vunpack.c.h.b16 %v344
  %v1262 = vunpack.c.l.b16 %v345
  %v1263 = vunpack.c.h.b16 %v345
  %v1264 = vunpack.c.l.b16 %v346
  %v1265 = vunpack.c.h.b16 %v346
  %v1266 = vunpack.c.l.b16 %v347
  %v1267 = vunpack.c.h.b16 %v347
  %v1268 = vunpack.c.l.b16 %v348
  %v1269 = vunpack.c.h.b16 %v348
  %v1270 = vunpack.c.l.b16 %v349
  %v1271 = vunpack.c.h.b16 %v349
  %v1272 = vunpack.c.l.b16 %v350
  %v1273 = vunpack.c.h.b16 %v350
  %v1274 = vunpack.c.l.b16 %v351
  %v1275 = vunpack.c.h.b16 %v351
  %v1276 = vunpack.c.l.b16 %v352
  %v1277 = vunpack.c.h.b16 %v352
  %v1278 = vunpack.c.l.b16 %v353
  %v1279 = vunpack.c.h.b16 %v353
  %v1280 = vunpack.c.l.b16 %v354
  %v1281 = vunpack.c.h.b16 %v354
  %v1282 = vunpack.c.l.b16 %v355
  %v1283 = vunpack.c.h.b16 %v355
  %v1284 = vunpack.c.l.b16 %v356
  %v1285 = vunpack.c.h.b16 %v356
  %v1286 = vunpack.c.l.b16 %v357
  %v1287 = vunpack.c.h.b16 %v357
  %v1288 = vunpack.c.l.b16 %v358
  %v1289 = vunpack.c.h.b16 %v358
  %v1290 = vunpack.c.l.b16 %v359
  %v1291 = vunpack.c.h.b16 %v359
  %v1292 = vunpack.c.l.b16 %v360
  %v1293 = vunpack.c.h.b16 %v360
  %v1294 = vunpack.c.l.b16 %v361
  %v1295 = vunpack.c.h.b16 %v361
  %v1296 = vunpack.c.l.b16 %v362
  %v1297 = vunpack.c.h.b16 %v362
  %v1298 = vunpack.c.l.b16 %v363
  %v1299 = vunpack.c.h.b16 %v363
  %v1300 = vunpack.c.l.b16 %v364
  %v1301 = vunpack.c.h.b16 %v364
  %v1302 = vunpack.c.l.b16 %v365
  %v1303 = vunpack.c.h.b16 %v365
  %v1304 = vunpack.c.l.b16 %v366
  %v1305 = vunpack.c.h.b16 %v366
  %v1306 = vunpack.c.l.b16 %v367
  %v1307 = vunpack.c.h.b16 %v367
  %v1308 = vunpack.c.l.b16 %v368
  %v1309 = vunpack.c.h.b16 %v368
  %v1310 = vunpack.c.l.b16 %v369
  %v1311 = vunpack.c.h.b16 %v369
  %v1312 = vunpack.c.l.b16 %v370
  %v1313 = vunpack.c.h.b16 %v370
  %v1314 = vunpack.c.l.b16 %v371
  %v1315 = vunpack.c.h.b16 %v371
  %v1316 = vunpack.c.l.b16 %v372
  %v1317 = vunpack.c.h.b16 %v372
  %v1318 = vunpack.c.l.b16 %v373
  %v1319 = vunpack.c.h.b16 %v373
  %v1320 = vunpack.c.l.b16 %v374
  %v1321 = vunpack.c.h.b16 %v374
  %v1322 = vunpack.c.l.b16 %v375
  %v1323 = vunpack.c.h.b16 %v375
  %v1324 = vunpack.c.l.b16 %v376
  %v1325 = vunpack.c.h.b16 %v376
  %v1326 = vunpack.c.l.b16 %v377
  %v1327 = vunpack.c.h.b16 %v377
  %v1328 = vunpack.c.l.b16 %v378
  %v1329 = vunpack.c.h.b16 %v378
  %v1330 = vunpack.c.l.b16 %v379
  %v1331 = vunpack.c.h.b16 %v379
  %v1332 = vunpack.c.l.b16 %v380
  %v1333 = vunpack.c.h.b16 %v380
  %v1334 = vunpack.c.l.b16 %v381
  %v1335 = vunpack.c.h.b16 %v381
  %v1336 = vunpack.c.l.b16 %v382
  %v1337 = vunpack.c.h.b16 %v382
  %v1338 = vunpack.c.l.b16 %v383
  %v1339 = vunpack.c.h.b16 %v383
  %v1340 = vunpack.c.l.b16 %v384
  %v1341 = vunpack.c.h.b16 %v384
  %v1342 = vunpack.c.l.b16 %v385
  %v1343 = vunpack.c.h.b16 %v385
  %v1344 = vunpack.c.l.b16 %v386
  %v1345 = vunpack.c.h.b16 %v386
  %v1346 = vunpack.c.l.b16 %v387
  %v1347 = vunpack.c.h.b16 %v387
  %v1348 = vunpack.c.l.b16 %v388
  %v1349 = vunpack.c.h.b16 %v388
  %v1350 = vunpack.c.l.b16 %v389
  %v1351 = vunpack.c.h.b16 %v389
  %v1352 = vunpack.c.l.b16 %v390
  %v1353 = vunpack.c.h.b16 %v390
  %v1354 = vunpack.c.l.b16 %v391
  %v1355 = vunpack.c.h.b16 %v391
  %v1356 = vunpack.c.l.b16 %v392
  %v1357 = vunpack.c.h.b16 %v392
  %v1358 = vunpack.c.l.b16 %v393
  %v1359 = vunpack.c.h.b16 %v393
  %v1360 = vunpack.c.l.b16 %v394
  %v1361 = vunpack.c.h.b16 %v394
  %v1362 = vunpack.c.l.b16 %v395
  %v1363 = vunpack.c.h.b16 %v395
  %v1364 = vunpack.c.l.b16 %v396
  %v1365 = vunpack.c.h.b16 %v396
  %v1366 = vunpack.c.l.b16 %v397
  %v1367 = vunpack.c.h.b16 %v397
  %v1368 = vunpack.c.l.b16 %v398
  %v1369 = vunpack.c.h.b16 %v398
  %v1370 = vunpack.c.l.b16 %v399
  %v1371 = vunpack.c.h.b16 %v399
  %v1372 = vunpack.c.l.b16 %v400
  %v1373 = vunpack.c.h.b16 %v400
  %v1374 = vunpack.c.l.b16 %v401
  %v1375 = vunpack.c.h.b16 %v401
  %v1376 = vunpack.c.l.b16 %v402
  %v1377 = vunpack.c.h.b16 %v402
  %v1378 = vunpack.c.l.b16 %v403
  %v1379 = vunpack.c.h.b16 %v403
  %v1380 = vunpack.c.l.b16 %v404
  %v1381 = vunpack.c.h.b16 %v404
  %v1382 = vunpack.c.l.b16 %v405
  %v1383 = vunpack.c.h.b16 %v405
  %v1384 = vunpack.c.l.b16 %v406
  %v1385 = vunpack.c.h.b16 %v406
  %v1386 = vunpack.c.l.b16 %v407
  %v1387 = vunpack.c.h.b16 %v407
  %v1388 = vunpack.c.l.b16 %v408
  %v1389 = vunpack.c.h.b16 %v408
  %v1390 = vunpack.c.l.b16 %v409
  %v1391 = vunpack.c.h.b16 %v409
  %v1392 = vpack.c.b16 %v756, %v752
  %v1393 = vpack.c.b16 %v757, %v753
  %v1394 = vpack.c.b16 %v758, %v754
  %v1395 = vpack.c.b16 %v759, %v755
  %v1396 = vpack.c.b16 %v764, %v760
  %v1397 = vpack.c.b16 %v765, %v761
  %v1398 = vpack.c.b16 %v766, %v762
  %v1399 = vpack.c.b16 %v767, %v763
  %v1400 = vpack.c.b16 %v772, %v768
  %v1401 = vpack.c.b16 %v773, %v769
  %v1402 = vpack.c.b16 %v774, %v770
  %v1403 = vpack.c.b16 %v775, %v771
  %v1404 = vpack.c.b16 %v780, %v776
  %v1405 = vpack.c.b16 %v781, %v777
  %v1406 = vpack.c.b16 %v782, %v778
  %v1407 = vpack.c.b16 %v783, %v779
  %v1408 = vpack.c.b16 %v788, %v784
  %v1409 = vpack.c.b16 %v789, %v785
  %v1410 = vpack.c.b16 %v790, %v786
  %v1411 = vpack.c.b16 %v791, %v787
  %v1412 = vpack.c.b16 %v796, %v792
  %v1413 = vpack.c.b16 %v797, %v793
  %v1414 = vpack.c.b16 %v798, %v794
  %v1415 = vpack.c.b16 %v799, %v795
  %v1416 = vpack.c.b16 %v804, %v800
  %v1417 = vpack.c.b16 %v805, %v801
  %v1418 = vpack.c.b16 %v806, %v802
  %v1419 = vpack.c.b16 %v807, %v803
  %v1420 = vpack.c.b16 %v812, %v808
  %v1421 = vpack.c.b16 %v813, %v809
  %v1422 = vpack.c.b16 %v814, %v810
  %v1423 = vpack.c.b16 %v815, %v811
  %v1424 = vpack.c.b16 %v820, %v816
  %v1425 = vpack.c.b16 %v821, %v817
  %v1426 = vpack.c.b16 %v822, %v818
  %v1427 = vpack.c.b16 %v823, %v819
  %v1428 = vpack.c.b16 %v828, %v824
  %v1429 = vpack.c.b16 %v829, %v825
  %v1430 = vpack.c.b16 %v830, %v826
  %v1431 = vpack.c.b16 %v831, %v827
  %v1432 = vpack.c.b16 %v836, %v832
  %v1433 = vpack.c.b16 %v837, %v833
  %v1434 = vpack.c.b16 %v838, %v834
  %v1435 = vpack.c.b16 %v839, %v835
  %v1436 = vpack.c.b16 %v844, %v840
  %v1437 = vpack.c.b16 %v845, %v841
  %v1438 = vpack.c.b16 %v846, %v842
  %v1439 = vpack.c.b16 %v847, %v843
  %v1440 = vpack.c.b16 %v852, %v848
  %v1441 = vpack.c.b16 %v853, %v849
  %v1442 = vpack.c.b16 %v854, %v850
  %v1443 = vpack.c.b16 %v855, %v851
  %v1444 = vpack.c.b16 %v860, %v856
  %v1445 = vpack.c.b16 %v861, %v857
  %v1446 = vpack.c.b16 %v862, %v858
  %v1447 = vpack.c.b16 %v863, %v859
  %v1448 = vpack.c.b16 %v868, %v864
  %v1449 = vpack.c.b16 %v869, %v865
  %v1450 = vpack.c.b16 %v870, %v866
  %v1451 = vpack.c.b16 %v871, %v867
  %v1452 = vpack.c.b16 %v876, %v872
  %v1453 = vpack.c.b16 %v877, %v873
  %v1454 = vpack.c.b16 %v878, %v874
  %v1455 = vpack.c.b16 %v879, %v875
  %v1456 = vpack.c.b16 %v884, %v880
  %v1457 = vpack.c.b16 %v885, %v881
  %v1458 = vpack.c.b16 %v886, %v882
  %v1459 = vpack.c.b16 %v887, %v883
  %v1460 = vpack.c.b16 %v892, %v888
  %v1461 = vpack.c.b16 %v893, %v889
  %v1462 = vpack.c.b16 %v894, %v890
  %v1463 = vpack.c.b16 %v895, %v891
  %v1464 = vpack.c.b16 %v900, %v896
  %v1465 = vpack.c.b16 %v901, %v897
  %v1466 = vpack.c.b16 %v902, %v898
  %v1467 = vpack.c.b16 %v903, %v899
  %v1468 = vpack.c.b16 %v908, %v904
  %v1469 = vpack.c.b16 %v909, %v905
  %v1470 = vpack.c.b16 %v910, %v906
  %v1471 = vpack.c.b16 %v911, %v907
  %v1472 = vpack.c.b16 %v916, %v912
  %v1473 = vpack.c.b16 %v917, %v913
  %v1474 = vpack.c.b16 %v918, %v914
  %v1475 = vpack.c.b16 %v919, %v915
  %v1476 = vpack.c.b16 %v924, %v920
  %v1477 = vpack.c.b16 %v925, %v921
  %v1478 = vpack.c.b16 %v926, %v922
  %v1479 = vpack.c.b16 %v927, %v923
  %v1480 = vpack.c.b16 %v932, %v928
  %v1481 = vpack.c.b16 %v933, %v929
  %v1482 = vpack.c.b16 %v934, %v930
  %v1483 = vpack.c.b16 %v935, %v931
  %v1484 = vpack.c.b16 %v940, %v936
  %v1485 = vpack.c.b16 %v941, %v937
  %v1486 = vpack.c.b16 %v942, %v938
  %v1487 = vpack.c.b16 %v943, %v939
  %v1488 = vpack.c.b16 %v948, %v944
  %v1489 = vpack.c.b16 %v949, %v945
  %v1490 = vpack.c.b16 %v950, %v946
  %v1491 = vpack.c.b16 %v951, %v947
  %v1492 = vpack.c.b16 %v956, %v952
  %v1493 = vpack.c.b16 %v957, %v953
  %v1494 = vpack.c.b16 %v958, %v954
  %v1495 = vpack.c.b16 %v959, %v955
  %v1496 = vpack.c.b16 %v964, %v960
  %v1497 = vpack.c.b16 %v965, %v961
  %v1498 = vpack.c.b16 %v966, %v962
  %v1499 = vpack.c.b16 %v967, %v963
  %v1500 = vpack.c.b16 %v972, %v968
  %v1501 = vpack.c.b16 %v973, %v969
  %v1502 = vpack.c.b16 %v974, %v970
  %v1503 = vpack.c.b16 %v975, %v971
  %v1504 = vpack.c.b16 %v980, %v976
  %v1505 = vpack.c.b16 %v981, %v977
  %v1506 = vpack.c.b16 %v982, %v978
  %v1507 = vpack.c.b16 %v983, %v979
  %v1508 = vpack.c.b16 %v988, %v984
  %v1509 = vpack.c.b16 %v989, %v985
  %v1510 = vpack.c.b16 %v990, %v986
  %v1511 = vpack.c.b16 %v991, %v987
  %v1512 = vpack.c.b16 %v996, %v992
  %v1513 = vpack.c.b16 %v997, %v993
  %v1514 = vpack.c.b16 %v998, %v994
  %v1515 = vpack.c.b16 %v999, %v995
  %v1516 = vpack.c.b16 %v1004, %v1000
  %v1517 = vpack.c.b16 %v1005, %v1001
  %v1518 = vpack.c.b16 %v1006, %v1002
  %v1519 = vpack.c.b16 %v1007, %v1003
  %v1520 = vpack.c.b16 %v1012, %v1008
  %v1521 = vpack.c.b16 %v1013, %v1009
  %v1522 = vpack.c.b16 %v1014, %v1010
  %v1523 = vpack.c.b16 %v1015, %v1011
  %v1524 = vpack.c.b16 %v1020, %v1016
  %v1525 = vpack.c.b16 %v1021, %v1017
  %v1526 = vpack.c.b16 %v1022, %v1018
  %v1527 = vpack.c.b16 %v1023, %v1019
  %v1528 = vpack.c.b16 %v1028, %v1024
  %v1529 = vpack.c.b16 %v1029, %v1025
  %v1530 = vpack.c.b16 %v1030, %v1026
  %v1531 = vpack.c.b16 %v1031, %v1027
  %v1532 = vpack.c.b16 %v1036, %v1032
  %v1533 = vpack.c.b16 %v1037, %v1033
  %v1534 = vpack.c.b16 %v1038, %v1034
  %v1535 = vpack.c.b16 %v1039, %v1035
  %v1536 = vpack.c.b16 %v1044, %v1040
  %v1537 = vpack.c.b16 %v1045, %v1041
  %v1538 = vpack.c.b16 %v1046, %v1042
  %v1539 = vpack.c.b16 %v1047, %v1043
  %v1540 = vpack.c.b16 %v1052, %v1048
  %v1541 = vpack.c.b16 %v1053, %v1049
  %v1542 = vpack.c.b16 %v1054, %v1050
  %v1543 = vpack.c.b16 %v1055, %v1051
  %v1544 = vpack.c.b16 %v1060, %v1056
  %v1545 = vpack.c.b16 %v1061, %v1057
  %v1546 = vpack.c.b16 %v1062, %v1058
  %v1547 = vpack.c.b16 %v1063, %v1059
  %v1548 = vpack.c.b16 %v1068, %v1064
  %v1549 = vpack.c.b16 %v1069, %v1065
  %v1550 = vpack.c.b16 %v1070, %v1066
  %v1551 = vpack.c.b16 %v1071, %v1067
  %v1552 = vpack.c.b16 %v1076, %v1072
  %v1553 = vpack.c.b16 %v1077, %v1073
  %v1554 = vpack.c.b16 %v1078, %v1074
  %v1555 = vpack.c.b16 %v1079, %v1075
  %v1556 = vpack.c.b16 %v1084, %v1080
  %v1557 = vpack.c.b16 %v1085, %v1081
  %v1558 = vpack.c.b16 %v1086, %v1082
  %v1559 = vpack.c.b16 %v1087, %v1083
  %v1560 = vpack.c.b16 %v1092, %v1088
  %v1561 = vpack.c.b16 %v1093, %v1089
  %v1562 = vpack.c.b16 %v1094, %v1090
  %v1563 = vpack.c.b16 %v1095, %v1091
  %v1564 = vpack.c.b16 %v1100, %v1096
  %v1565 = vpack.c.b16 %v1101, %v1097
  %v1566 = vpack.c.b16 %v1102, %v1098
  %v1567 = vpack.c.b16 %v1103, %v1099
  %v1568 = vpack.c.b16 %v1108, %v1104
  %v1569 = vpack.c.b16 %v1109, %v1105
  %v1570 = vpack.c.b16 %v1110, %v1106
  %v1571 = vpack.c.b16 %v1111, %v1107
  %v1572 = vpack.c.b16 %v1116, %v1112
  %v1573 = vpack.c.b16 %v1117, %v1113
  %v1574 = vpack.c.b16 %v1118, %v1114
  %v1575 = vpack.c.b16 %v1119, %v1115
  %v1576 = vpack.c.b16 %v1124, %v1120
  %v1577 = vpack.c.b16 %v1125, %v1121
  %v1578 = vpack.c.b16 %v1126, %v1122
  %v1579 = vpack.c.b16 %v1127, %v1123
  %v1580 = vpack.c.b16 %v1132, %v1128
  %v1581 = vpack.c.b16 %v1133, %v1129
  %v1582 = vpack.c.b16 %v1134, %v1130
  %v1583 = vpack.c.b16 %v1135, %v1131
  %v1584 = vpack.c.b16 %v1140, %v1136
  %v1585 = vpack.c.b16 %v1141, %v1137
  %v1586 = vpack.c.b16 %v1142, %v1138
  %v1587 = vpack.c.b16 %v1143, %v1139
  %v1588 = vpack.c.b16 %v1148, %v1144
  %v1589 = vpack.c.b16 %v1149, %v1145
  %v1590 = vpack.c.b16 %v1150, %v1146
  %v1591 = vpack.c.b16 %v1151, %v1147
  %v1592 = vpack.c.b16 %v1156, %v1152
  %v1593 = vpack.c.b16 %v1157, %v1153
  %v1594 = vpack.c.b16 %v1158, %v1154
  %v1595 = vpack.c.b16 %v1159, %v1155
  %v1596 = vpack.c.b16 %v1164, %v1160
  %v1597 = vpack.c.b16 %v1165, %v1161
  %v1598 = vpack.c.b16 %v1166, %v1162
  %v1599 = vpack.c.b16 %v1167, %v1163
  %v1600 = vpack.c.b16 %v1172, %v1168
  %v1601 = vpack.c.b16 %v1173, %v1169
  %v1602 = vpack.c.b16 %v1174, %v1170
  %v1603 = vpack.c.b16 %v1175, %v1171
  %v1604 = vpack.c.b16 %v1180, %v1176
  %v1605 = vpack.c.b16 %v1181, %v1177
  %v1606 = vpack.c.b16 %v1182, %v1178
  %v1607 = vpack.c.b16 %v1183, %v1179
  %v1608 = vpack.c.b16 %v1188, %v1184
  %v1609 = vpack.c.b16 %v1189, %v1185
  %v1610 = vpack.c.b16 %v1190, %v1186
  %v1611 = vpack.c.b16 %v1191, %v1187
  %v1612 = vpack.c.b16 %v1196, %v1192
  %v1613 = vpack.c.b16 %v1197, %v1193
  %v1614 = vpack.c.b16 %v1198, %v1194
  %v1615 = vpack.c.b16 %v1199, %v1195
  %v1616 = vpack.c.b16 %v1204, %v1200
  %v1617 = vpack.c.b16 %v1205, %v1201
  %v1618 = vpack.c.b16 %v1206, %v1202
  %v1619 = vpack.c.b16 %v1207, %v1203
  %v1620 = vpack.c.b16 %v1212, %v1208
  %v1621 = vpack.c.b16 %v1213, %v1209
  %v1622 = vpack.c.b16 %v1214, %v1210
  %v1623 = vpack.c.b16 %v1215, %v1211
  %v1624 = vpack.c.b16 %v1220, %v1216
  %v1625 = vpack.c.b16 %v1221, %v1217
  %v1626 = vpack.c.b16 %v1222, %v1218
  %v1627 = vpack.c.b16 %v1223, %v1219
  %v1628 = vpack.c.b16 %v1228, %v1224
  %v1629 = vpack.c.b16 %v1229, %v1225
  %v1630 = vpack.c.b16 %v1230, %v1226
  %v1631 = vpack.c.b16 %v1231, %v1227
  %v1632 = vpack.c.b16 %v1236, %v1232
  %v1633 = vpack.c.b16 %v1237, %v1233
  %v1634 = vpack.c.b16 %v1238, %v1234
  %v1635 = vpack.c.b16 %v1239, %v1235
  %v1636 = vpack.c.b16 %v1244, %v1240
  %v1637 = vpack.c.b16 %v1245, %v1241
  %v1638 = vpack.c.b16 %v1246, %v1242
  %v1639 = vpack.c.b16 %v1247, %v1243
  %v1640 = vpack.c.b16 %v1252, %v1248
  %v1641 = vpack.c.b16 %v1253, %v1249
  %v1642 = vpack.c.b16 %v1254, %v1250
  %v1643 = vpack.c.b16 %v1255, %v1251
  %v1644 = vpack.c.b16 %v1260, %v1256
  %v1645 = vpack.c.b16 %v1261, %v1257
  %v1646 = vpack.c.b16 %v1262, %v1258
  %v1647 = vpack.c.b16 %v1263, %v1259
  %v1648 = vpack.c.b16 %v1268, %v1264
  %v1649 = vpack.c.b16 %v1269, %v1265
  %v1650 = vpack.c.b16 %v1270, %v1266
  %v1651 = vpack.c.b16 %v1271, %v1267
  %v1652 = vpack.c.b16 %v1276, %v1272
  %v1653 = vpack.c.b16 %v1277, %v1273
  %v1654 = vpack.c.b16 %v1278, %v1274
  %v1655 = vpack.c.b16 %v1279, %v1275
  %v1656 = vpack.c.b16 %v1284, %v1280
  %v1657 = vpack.c.b16 %v1285, %v1281
  %v1658 = vpack.c.b16 %v1286, %v1282
  %v1659 = vpack.c.b16 %v1287, %v1283
  %v1660 = vpack.c.b16 %v1292, %v1288
  %v1661 = vpack.c.b16 %v1293, %v1289
  %v1662 = vpack.c.b16 %v1294, %v1290
  %v1663 = vpack.c.b16 %v1295, %v1291
  %v1664 = vpack.c.b16 %v1300, %v1296
  %v1665 = vpack.c.b16 %v1301, %v1297
  %v1666 = vpack.c.b16 %v1302, %v1298
  %v1667 = vpack.c.b16 %v1303, %v1299
  %v1668 = vpack.c.b16 %v1308, %v1304
  %v1669 = vpack.c.b16 %v1309, %v1305
  %v1670 = vpack.c.b16 %v1310, %v1306
  %v1671 = vpack.c.b16 %v1311, %v1307
  %v1672 = vpack.c.b16 %v1316, %v1312
  %v1673 = vpack.c.b16 %v1317, %v1313
  %v1674 = vpack.c.b16 %v1318, %v1314
  %v1675 = vpack.c.b16 %v1319, %v1315
  %v1676 = vpack.c.b16 %v1324, %v1320
  %v1677 = vpack.c.b16 %v1325, %v1321
  %v1678 = vpack.c.b16 %v1326, %v1322
  %v1679 = vpack.c.b16 %v1327, %v1323
  %v1680 = vpack.c.b16 %v1332, %v1328
  %v1681 = vpack.c.b16 %v1333, %v1329
  %v1682 = vpack.c.b16 %v1334, %v1330
  %v1683 = vpack.c.b16 %v1335, %v1331
  %v1684 = vpack.c.b16 %v1340, %v1336
  %v1685 = vpack.c.b16 %v1341, %v1337
  %v1686 = vpack.c.b16 %v1342, %v1338
  %v1687 = vpack.c.b16 %v1343, %v1339
  %v1688 = vpack.c.b16 %v1348, %v1344
  %v1689 = vpack.c.b16 %v1349, %v1345
  %v1690 = vpack.c.b16 %v1350, %v1346
  %v1691 = vpack.c.b16 %v1351, %v1347
  %v1692 = vpack.c.b16 %v1356, %v1352
  %v1693 = vpack.c.b16 %v1357, %v1353
  %v1694 = vpack.c.b16 %v1358, %v1354
  %v1695 = vpack.c.b16 %v1359, %v1355
  %v1696 = vpack.c.b16 %v1364, %v1360
  %v1697 = vpack.c.b16 %v1365, %v1361
  %v1698 = vpack.c.b16 %v1366, %v1362
  %v1699 = vpack.c.b16 %v1367, %v1363
  %v1700 = vpack.c.b16 %v1372, %v1368
  %v1701 = vpack.c.b16 %v1373, %v1369
  %v1702 = vpack.c.b16 %v1374, %v1370
  %v1703 = vpack.c.b16 %v1375, %v1371
  %v1704 = vpack.c.b16 %v1380, %v1376
  %v1705 = vpack.c.b16 %v1381, %v1377
  %v1706 = vpack.c.b16 %v1382, %v1378
  %v1707 = vpack.c.b16 %v1383, %v1379
  %v1708 = vpack.c.b16 %v1388, %v1384
  %v1709 = vpack.c.b16 %v1389, %v1385
  %v1710 = vpack.c.b16 %v1390, %v1386
  %v1711 = vpack.c.b16 %v1391, %v1387
  %2032 = vmatprep.subr.bf16.mxu0 %v1421
  %2033 = vmatpush1.bf16.msra.mxu0 %v1420
  %2034 = vmatprep.subr.bf16.mxu0 %v1417
  %2035 = vmatpush1.bf16.msra.mxu0 %v1416
  %2036 = vmatprep.subr.bf16.mxu0 %v1413
  %2037 = vmatpush1.bf16.msra.mxu0 %v1412
  %2038 = vmatprep.subr.bf16.mxu0 %v1409
  %2039 = vmatpush1.bf16.msra.mxu0 %v1408
  %2040 = vmatprep.subr.bf16.mxu0 %v1405
  %2041 = vmatpush1.bf16.msra.mxu0 %v1404
  %2042 = vmatprep.subr.bf16.mxu0 %v1401
  %2043 = vmatpush1.bf16.msra.mxu0 %v1400
  %2044 = vmatprep.subr.bf16.mxu0 %v1397
  %2045 = vmatpush1.bf16.msra.mxu0 %v1396
  %2046 = vmatprep.subr.bf16.mxu0 %v1393
  %2047 = vmatpush1.bf16.msra.mxu0 %v1392
  %2048 = vmatprep.subr.bf16.mxu0 %v1453
  %2049 = vmatpush2.bf16.msra.mxu0 %v1452
  %2050 = vmatprep.subr.bf16.mxu0 %v1449
  %2051 = vmatpush2.bf16.msra.mxu0 %v1448
  %2052 = vmatprep.subr.bf16.mxu0 %v1445
  %2053 = vmatpush2.bf16.msra.mxu0 %v1444
  %2054 = vmatprep.subr.bf16.mxu0 %v1441
  %2055 = vmatpush2.bf16.msra.mxu0 %v1440
  %2056 = vmatprep.subr.bf16.mxu0 %v1437
  %2057 = vmatpush2.bf16.msra.mxu0 %v1436
  %2058 = vmatprep.subr.bf16.mxu0 %v1433
  %2059 = vmatpush2.bf16.msra.mxu0 %v1432
  %2060 = vmatprep.subr.bf16.mxu0 %v1429
  %2061 = vmatpush2.bf16.msra.mxu0 %v1428
  %2062 = vmatprep.subr.bf16.mxu0 %v1425
  %2063 = vmatpush2.bf16.msra.mxu0 %v1424
  %2064 = vmatprep.mubr.bf16.mxu0 %v81
  %2065 = vmatmul.mubr.bf16.gmra.mxu0 %v80
  %v2066 = vpop.f32.mrf.mxu0
  %v2067 = vadd.f32 %v415, %v2066
  %v2068 = vpop.f32.mrf.mxu0
  %v2069 = vadd.f32 %v419, %v2068
  %v2070 = vpop.f32.mrf.mxu0
  %v2071 = vpop.f32.mrf.mxu0
  %2072 = vdwg.mxu0
  %2073 = vmatprep.subr.bf16.mxu0 %v1485
  %2074 = vmatpush1.bf16.msra.mxu0 %v1484
  %2075 = vmatprep.subr.bf16.mxu0 %v1481
  %2076 = vmatpush1.bf16.msra.mxu0 %v1480
  %2077 = vmatprep.subr.bf16.mxu0 %v1477
  %2078 = vmatpush1.bf16.msra.mxu0 %v1476
  %2079 = vmatprep.subr.bf16.mxu0 %v1473
  %2080 = vmatpush1.bf16.msra.mxu0 %v1472
  %2081 = vmatprep.subr.bf16.mxu0 %v1469
  %2082 = vmatpush1.bf16.msra.mxu0 %v1468
  %2083 = vmatprep.subr.bf16.mxu0 %v1465
  %2084 = vmatpush1.bf16.msra.mxu0 %v1464
  %2085 = vmatprep.subr.bf16.mxu0 %v1461
  %2086 = vmatpush1.bf16.msra.mxu0 %v1460
  %2087 = vmatprep.subr.bf16.mxu0 %v1457
  %2088 = vmatpush1.bf16.msra.mxu0 %v1456
  %2089 = vmatprep.subr.bf16.mxu0 %v1517
  %2090 = vmatpush2.bf16.msra.mxu0 %v1516
  %2091 = vmatprep.subr.bf16.mxu0 %v1513
  %2092 = vmatpush2.bf16.msra.mxu0 %v1512
  %2093 = vmatprep.subr.bf16.mxu0 %v1509
  %2094 = vmatpush2.bf16.msra.mxu0 %v1508
  %2095 = vmatprep.subr.bf16.mxu0 %v1505
  %2096 = vmatpush2.bf16.msra.mxu0 %v1504
  %2097 = vmatprep.subr.bf16.mxu0 %v1501
  %2098 = vmatpush2.bf16.msra.mxu0 %v1500
  %2099 = vmatprep.subr.bf16.mxu0 %v1497
  %2100 = vmatpush2.bf16.msra.mxu0 %v1496
  %2101 = vmatprep.subr.bf16.mxu0 %v1493
  %2102 = vmatpush2.bf16.msra.mxu0 %v1492
  %2103 = vmatprep.subr.bf16.mxu0 %v1489
  %2104 = vmatpush2.bf16.msra.mxu0 %v1488
  %2105 = vmatprep.mubr.bf16.mxu0 %v83
  %2106 = vmatmul.mubr.bf16.gmra.mxu0 %v82
  %v2107 = vpop.f32.mrf.mxu0
  %v2108 = vadd.f32 %v2067, %v2107
  %v2109 = vpop.f32.mrf.mxu0
  %v2110 = vadd.f32 %v2069, %v2109
  %v2111 = vpop.f32.mrf.mxu0
  %v2112 = vpop.f32.mrf.mxu0
  %2113 = vdwg.mxu0
  %2114 = vmatprep.subr.bf16.mxu0 %v1549
  %2115 = vmatpush1.bf16.msra.mxu0 %v1548
  %2116 = vmatprep.subr.bf16.mxu0 %v1545
  %2117 = vmatpush1.bf16.msra.mxu0 %v1544
  %2118 = vmatprep.subr.bf16.mxu0 %v1541
  %2119 = vmatpush1.bf16.msra.mxu0 %v1540
  %2120 = vmatprep.subr.bf16.mxu0 %v1537
  %2121 = vmatpush1.bf16.msra.mxu0 %v1536
  %2122 = vmatprep.subr.bf16.mxu0 %v1533
  %2123 = vmatpush1.bf16.msra.mxu0 %v1532
  %2124 = vmatprep.subr.bf16.mxu0 %v1529
  %2125 = vmatpush1.bf16.msra.mxu0 %v1528
  %2126 = vmatprep.subr.bf16.mxu0 %v1525
  %2127 = vmatpush1.bf16.msra.mxu0 %v1524
  %2128 = vmatprep.subr.bf16.mxu0 %v1521
  %2129 = vmatpush1.bf16.msra.mxu0 %v1520
  %2130 = vmatprep.subr.bf16.mxu0 %v1581
  %2131 = vmatpush2.bf16.msra.mxu0 %v1580
  %2132 = vmatprep.subr.bf16.mxu0 %v1577
  %2133 = vmatpush2.bf16.msra.mxu0 %v1576
  %2134 = vmatprep.subr.bf16.mxu0 %v1573
  %2135 = vmatpush2.bf16.msra.mxu0 %v1572
  %2136 = vmatprep.subr.bf16.mxu0 %v1569
  %2137 = vmatpush2.bf16.msra.mxu0 %v1568
  %2138 = vmatprep.subr.bf16.mxu0 %v1565
  %2139 = vmatpush2.bf16.msra.mxu0 %v1564
  %2140 = vmatprep.subr.bf16.mxu0 %v1561
  %2141 = vmatpush2.bf16.msra.mxu0 %v1560
  %2142 = vmatprep.subr.bf16.mxu0 %v1557
  %2143 = vmatpush2.bf16.msra.mxu0 %v1556
  %2144 = vmatprep.subr.bf16.mxu0 %v1553
  %2145 = vmatpush2.bf16.msra.mxu0 %v1552
  %2146 = vmatprep.mubr.bf16.mxu0 %v85
  %2147 = vmatmul.mubr.bf16.gmra.mxu0 %v84
  %v2148 = vpop.f32.mrf.mxu0
  %v2149 = vadd.f32 %v2108, %v2148
  %v2150 = vpop.f32.mrf.mxu0
  %v2151 = vadd.f32 %v2110, %v2150
  %v2152 = vpop.f32.mrf.mxu0
  %v2153 = vpop.f32.mrf.mxu0
  %2154 = vdwg.mxu0
  %2155 = vmatprep.subr.bf16.mxu0 %v1613
  %2156 = vmatpush1.bf16.msra.mxu0 %v1612
  %2157 = vmatprep.subr.bf16.mxu0 %v1609
  %2158 = vmatpush1.bf16.msra.mxu0 %v1608
  %2159 = vmatprep.subr.bf16.mxu0 %v1605
  %2160 = vmatpush1.bf16.msra.mxu0 %v1604
  %2161 = vmatprep.subr.bf16.mxu0 %v1601
  %2162 = vmatpush1.bf16.msra.mxu0 %v1600
  %2163 = vmatprep.subr.bf16.mxu0 %v1597
  %2164 = vmatpush1.bf16.msra.mxu0 %v1596
  %2165 = vmatprep.subr.bf16.mxu0 %v1593
  %2166 = vmatpush1.bf16.msra.mxu0 %v1592
  %2167 = vmatprep.subr.bf16.mxu0 %v1589
  %2168 = vmatpush1.bf16.msra.mxu0 %v1588
  %2169 = vmatprep.subr.bf16.mxu0 %v1585
  %2170 = vmatpush1.bf16.msra.mxu0 %v1584
  %2171 = vmatprep.subr.bf16.mxu0 %v1645
  %2172 = vmatpush2.bf16.msra.mxu0 %v1644
  %2173 = vmatprep.subr.bf16.mxu0 %v1641
  %2174 = vmatpush2.bf16.msra.mxu0 %v1640
  %2175 = vmatprep.subr.bf16.mxu0 %v1637
  %2176 = vmatpush2.bf16.msra.mxu0 %v1636
  %2177 = vmatprep.subr.bf16.mxu0 %v1633
  %2178 = vmatpush2.bf16.msra.mxu0 %v1632
  %2179 = vmatprep.subr.bf16.mxu0 %v1629
  %2180 = vmatpush2.bf16.msra.mxu0 %v1628
  %2181 = vmatprep.subr.bf16.mxu0 %v1625
  %2182 = vmatpush2.bf16.msra.mxu0 %v1624
  %2183 = vmatprep.subr.bf16.mxu0 %v1621
  %2184 = vmatpush2.bf16.msra.mxu0 %v1620
  %2185 = vmatprep.subr.bf16.mxu0 %v1617
  %2186 = vmatpush2.bf16.msra.mxu0 %v1616
  %2187 = vmatprep.mubr.bf16.mxu0 %v87
  %2188 = vmatmul.mubr.bf16.gmra.mxu0 %v86
  %v2189 = vpop.f32.mrf.mxu0
  %v2190 = vadd.f32 %v2149, %v2189
  %v2191 = vpop.f32.mrf.mxu0
  %v2192 = vadd.f32 %v2151, %v2191
  %v2193 = vpop.f32.mrf.mxu0
  %v2194 = vpop.f32.mrf.mxu0
  %2195 = vdwg.mxu0
  %2196 = vmatprep.subr.bf16.mxu0 %v1677
  %2197 = vmatpush1.bf16.msra.mxu0 %v1676
  %2198 = vmatprep.subr.bf16.mxu0 %v1673
  %2199 = vmatpush1.bf16.msra.mxu0 %v1672
  %2200 = vmatprep.subr.bf16.mxu0 %v1669
  %2201 = vmatpush1.bf16.msra.mxu0 %v1668
  %2202 = vmatprep.subr.bf16.mxu0 %v1665
  %2203 = vmatpush1.bf16.msra.mxu0 %v1664
  %2204 = vmatprep.subr.bf16.mxu0 %v1661
  %2205 = vmatpush1.bf16.msra.mxu0 %v1660
  %2206 = vmatprep.subr.bf16.mxu0 %v1657
  %2207 = vmatpush1.bf16.msra.mxu0 %v1656
  %2208 = vmatprep.subr.bf16.mxu0 %v1653
  %2209 = vmatpush1.bf16.msra.mxu0 %v1652
  %2210 = vmatprep.subr.bf16.mxu0 %v1649
  %2211 = vmatpush1.bf16.msra.mxu0 %v1648
  %2212 = vmatprep.subr.bf16.mxu0 %v1709
  %2213 = vmatpush2.bf16.msra.mxu0 %v1708
  %2214 = vmatprep.subr.bf16.mxu0 %v1705
  %2215 = vmatpush2.bf16.msra.mxu0 %v1704
  %2216 = vmatprep.subr.bf16.mxu0 %v1701
  %2217 = vmatpush2.bf16.msra.mxu0 %v1700
  %2218 = vmatprep.subr.bf16.mxu0 %v1697
  %2219 = vmatpush2.bf16.msra.mxu0 %v1696
  %2220 = vmatprep.subr.bf16.mxu0 %v1693
  %2221 = vmatpush2.bf16.msra.mxu0 %v1692
  %2222 = vmatprep.subr.bf16.mxu0 %v1689
  %2223 = vmatpush2.bf16.msra.mxu0 %v1688
  %2224 = vmatprep.subr.bf16.mxu0 %v1685
  %2225 = vmatpush2.bf16.msra.mxu0 %v1684
  %2226 = vmatprep.subr.bf16.mxu0 %v1681
  %2227 = vmatpush2.bf16.msra.mxu0 %v1680
  %2228 = vmatprep.mubr.bf16.mxu0 %v89
  %2229 = vmatmul.mubr.bf16.gmra.mxu0 %v88
  %v2230 = vpop.f32.mrf.mxu0
  %v2231 = vadd.f32 %v2190, %v2230
  %v2232 = vpop.f32.mrf.mxu0
  %v2233 = vadd.f32 %v2192, %v2232
  %v2234 = vpop.f32.mrf.mxu0
  %v2235 = vpop.f32.mrf.mxu0
  %2236 = vdwg.mxu0
  %2237 = vmatprep.subr.bf16.mxu0 %v1423
  %2238 = vmatpush1.bf16.msra.mxu0 %v1422
  %2239 = vmatprep.subr.bf16.mxu0 %v1419
  %2240 = vmatpush1.bf16.msra.mxu0 %v1418
  %2241 = vmatprep.subr.bf16.mxu0 %v1415
  %2242 = vmatpush1.bf16.msra.mxu0 %v1414
  %2243 = vmatprep.subr.bf16.mxu0 %v1411
  %2244 = vmatpush1.bf16.msra.mxu0 %v1410
  %2245 = vmatprep.subr.bf16.mxu0 %v1407
  %2246 = vmatpush1.bf16.msra.mxu0 %v1406
  %2247 = vmatprep.subr.bf16.mxu0 %v1403
  %2248 = vmatpush1.bf16.msra.mxu0 %v1402
  %2249 = vmatprep.subr.bf16.mxu0 %v1399
  %2250 = vmatpush1.bf16.msra.mxu0 %v1398
  %2251 = vmatprep.subr.bf16.mxu0 %v1395
  %2252 = vmatpush1.bf16.msra.mxu0 %v1394
  %2253 = vmatprep.subr.bf16.mxu0 %v1455
  %2254 = vmatpush2.bf16.msra.mxu0 %v1454
  %2255 = vmatprep.subr.bf16.mxu0 %v1451
  %2256 = vmatpush2.bf16.msra.mxu0 %v1450
  %2257 = vmatprep.subr.bf16.mxu0 %v1447
  %2258 = vmatpush2.bf16.msra.mxu0 %v1446
  %2259 = vmatprep.subr.bf16.mxu0 %v1443
  %2260 = vmatpush2.bf16.msra.mxu0 %v1442
  %2261 = vmatprep.subr.bf16.mxu0 %v1439
  %2262 = vmatpush2.bf16.msra.mxu0 %v1438
  %2263 = vmatprep.subr.bf16.mxu0 %v1435
  %2264 = vmatpush2.bf16.msra.mxu0 %v1434
  %2265 = vmatprep.subr.bf16.mxu0 %v1431
  %2266 = vmatpush2.bf16.msra.mxu0 %v1430
  %2267 = vmatprep.subr.bf16.mxu0 %v1427
  %2268 = vmatpush2.bf16.msra.mxu0 %v1426
  %2269 = vmatprep.mubr.bf16.mxu0 %v81
  %2270 = vmatmul.mubr.bf16.gmra.mxu0 %v80
  %v2271 = vpop.f32.mrf.mxu0
  %v2272 = vadd.f32 %v423, %v2271
  %v2273 = vpop.f32.mrf.mxu0
  %v2274 = vadd.f32 %v427, %v2273
  %v2275 = vpop.f32.mrf.mxu0
  %v2276 = vpop.f32.mrf.mxu0
  %2277 = vdwg.mxu0
  %2278 = vmatprep.subr.bf16.mxu0 %v1487
  %2279 = vmatpush1.bf16.msra.mxu0 %v1486
  %2280 = vmatprep.subr.bf16.mxu0 %v1483
  %2281 = vmatpush1.bf16.msra.mxu0 %v1482
  %2282 = vmatprep.subr.bf16.mxu0 %v1479
  %2283 = vmatpush1.bf16.msra.mxu0 %v1478
  %2284 = vmatprep.subr.bf16.mxu0 %v1475
  %2285 = vmatpush1.bf16.msra.mxu0 %v1474
  %2286 = vmatprep.subr.bf16.mxu0 %v1471
  %2287 = vmatpush1.bf16.msra.mxu0 %v1470
  %2288 = vmatprep.subr.bf16.mxu0 %v1467
  %2289 = vmatpush1.bf16.msra.mxu0 %v1466
  %2290 = vmatprep.subr.bf16.mxu0 %v1463
  %2291 = vmatpush1.bf16.msra.mxu0 %v1462
  %2292 = vmatprep.subr.bf16.mxu0 %v1459
  %2293 = vmatpush1.bf16.msra.mxu0 %v1458
  %2294 = vmatprep.subr.bf16.mxu0 %v1519
  %2295 = vmatpush2.bf16.msra.mxu0 %v1518
  %2296 = vmatprep.subr.bf16.mxu0 %v1515
  %2297 = vmatpush2.bf16.msra.mxu0 %v1514
  %2298 = vmatprep.subr.bf16.mxu0 %v1511
  %2299 = vmatpush2.bf16.msra.mxu0 %v1510
  %2300 = vmatprep.subr.bf16.mxu0 %v1507
  %2301 = vmatpush2.bf16.msra.mxu0 %v1506
  %2302 = vmatprep.subr.bf16.mxu0 %v1503
  %2303 = vmatpush2.bf16.msra.mxu0 %v1502
  %2304 = vmatprep.subr.bf16.mxu0 %v1499
  %2305 = vmatpush2.bf16.msra.mxu0 %v1498
  %2306 = vmatprep.subr.bf16.mxu0 %v1495
  %2307 = vmatpush2.bf16.msra.mxu0 %v1494
  %2308 = vmatprep.subr.bf16.mxu0 %v1491
  %2309 = vmatpush2.bf16.msra.mxu0 %v1490
  %2310 = vmatprep.mubr.bf16.mxu0 %v83
  %2311 = vmatmul.mubr.bf16.gmra.mxu0 %v82
  %v2312 = vpop.f32.mrf.mxu0
  %v2313 = vadd.f32 %v2272, %v2312
  %v2314 = vpop.f32.mrf.mxu0
  %v2315 = vadd.f32 %v2274, %v2314
  %v2316 = vpop.f32.mrf.mxu0
  %v2317 = vpop.f32.mrf.mxu0
  %2318 = vdwg.mxu0
  %2319 = vmatprep.subr.bf16.mxu0 %v1551
  %2320 = vmatpush1.bf16.msra.mxu0 %v1550
  %2321 = vmatprep.subr.bf16.mxu0 %v1547
  %2322 = vmatpush1.bf16.msra.mxu0 %v1546
  %2323 = vmatprep.subr.bf16.mxu0 %v1543
  %2324 = vmatpush1.bf16.msra.mxu0 %v1542
  %2325 = vmatprep.subr.bf16.mxu0 %v1539
  %2326 = vmatpush1.bf16.msra.mxu0 %v1538
  %2327 = vmatprep.subr.bf16.mxu0 %v1535
  %2328 = vmatpush1.bf16.msra.mxu0 %v1534
  %2329 = vmatprep.subr.bf16.mxu0 %v1531
  %2330 = vmatpush1.bf16.msra.mxu0 %v1530
  %2331 = vmatprep.subr.bf16.mxu0 %v1527
  %2332 = vmatpush1.bf16.msra.mxu0 %v1526
  %2333 = vmatprep.subr.bf16.mxu0 %v1523
  %2334 = vmatpush1.bf16.msra.mxu0 %v1522
  %2335 = vmatprep.subr.bf16.mxu0 %v1583
  %2336 = vmatpush2.bf16.msra.mxu0 %v1582
  %2337 = vmatprep.subr.bf16.mxu0 %v1579
  %2338 = vmatpush2.bf16.msra.mxu0 %v1578
  %2339 = vmatprep.subr.bf16.mxu0 %v1575
  %2340 = vmatpush2.bf16.msra.mxu0 %v1574
  %2341 = vmatprep.subr.bf16.mxu0 %v1571
  %2342 = vmatpush2.bf16.msra.mxu0 %v1570
  %2343 = vmatprep.subr.bf16.mxu0 %v1567
  %2344 = vmatpush2.bf16.msra.mxu0 %v1566
  %2345 = vmatprep.subr.bf16.mxu0 %v1563
  %2346 = vmatpush2.bf16.msra.mxu0 %v1562
  %2347 = vmatprep.subr.bf16.mxu0 %v1559
  %2348 = vmatpush2.bf16.msra.mxu0 %v1558
  %2349 = vmatprep.subr.bf16.mxu0 %v1555
  %2350 = vmatpush2.bf16.msra.mxu0 %v1554
  %2351 = vmatprep.mubr.bf16.mxu0 %v85
  %2352 = vmatmul.mubr.bf16.gmra.mxu0 %v84
  %v2353 = vpop.f32.mrf.mxu0
  %v2354 = vadd.f32 %v2313, %v2353
  %v2355 = vpop.f32.mrf.mxu0
  %v2356 = vadd.f32 %v2315, %v2355
  %v2357 = vpop.f32.mrf.mxu0
  %v2358 = vpop.f32.mrf.mxu0
  %2359 = vdwg.mxu0
  %2360 = vmatprep.subr.bf16.mxu0 %v1615
  %2361 = vmatpush1.bf16.msra.mxu0 %v1614
  %2362 = vmatprep.subr.bf16.mxu0 %v1611
  %2363 = vmatpush1.bf16.msra.mxu0 %v1610
  %2364 = vmatprep.subr.bf16.mxu0 %v1607
  %2365 = vmatpush1.bf16.msra.mxu0 %v1606
  %2366 = vmatprep.subr.bf16.mxu0 %v1603
  %2367 = vmatpush1.bf16.msra.mxu0 %v1602
  %2368 = vmatprep.subr.bf16.mxu0 %v1599
  %2369 = vmatpush1.bf16.msra.mxu0 %v1598
  %2370 = vmatprep.subr.bf16.mxu0 %v1595
  %2371 = vmatpush1.bf16.msra.mxu0 %v1594
  %2372 = vmatprep.subr.bf16.mxu0 %v1591
  %2373 = vmatpush1.bf16.msra.mxu0 %v1590
  %2374 = vmatprep.subr.bf16.mxu0 %v1587
  %2375 = vmatpush1.bf16.msra.mxu0 %v1586
  %2376 = vmatprep.subr.bf16.mxu0 %v1647
  %2377 = vmatpush2.bf16.msra.mxu0 %v1646
  %2378 = vmatprep.subr.bf16.mxu0 %v1643
  %2379 = vmatpush2.bf16.msra.mxu0 %v1642
  %2380 = vmatprep.subr.bf16.mxu0 %v1639
  %2381 = vmatpush2.bf16.msra.mxu0 %v1638
  %2382 = vmatprep.subr.bf16.mxu0 %v1635
  %2383 = vmatpush2.bf16.msra.mxu0 %v1634
  %2384 = vmatprep.subr.bf16.mxu0 %v1631
  %2385 = vmatpush2.bf16.msra.mxu0 %v1630
  %2386 = vmatprep.subr.bf16.mxu0 %v1627
  %2387 = vmatpush2.bf16.msra.mxu0 %v1626
  %2388 = vmatprep.subr.bf16.mxu0 %v1623
  %2389 = vmatpush2.bf16.msra.mxu0 %v1622
  %2390 = vmatprep.subr.bf16.mxu0 %v1619
  %2391 = vmatpush2.bf16.msra.mxu0 %v1618
  %2392 = vmatprep.mubr.bf16.mxu0 %v87
  %2393 = vmatmul.mubr.bf16.gmra.mxu0 %v86
  %v2394 = vpop.f32.mrf.mxu0
  %v2395 = vadd.f32 %v2354, %v2394
  %v2396 = vpop.f32.mrf.mxu0
  %v2397 = vadd.f32 %v2356, %v2396
  %v2398 = vpop.f32.mrf.mxu0
  %v2399 = vpop.f32.mrf.mxu0
  %2400 = vdwg.mxu0
  %2401 = vmatprep.subr.bf16.mxu0 %v1679
  %2402 = vmatpush1.bf16.msra.mxu0 %v1678
  %2403 = vmatprep.subr.bf16.mxu0 %v1675
  %2404 = vmatpush1.bf16.msra.mxu0 %v1674
  %2405 = vmatprep.subr.bf16.mxu0 %v1671
  %2406 = vmatpush1.bf16.msra.mxu0 %v1670
  %2407 = vmatprep.subr.bf16.mxu0 %v1667
  %2408 = vmatpush1.bf16.msra.mxu0 %v1666
  %2409 = vmatprep.subr.bf16.mxu0 %v1663
  %2410 = vmatpush1.bf16.msra.mxu0 %v1662
  %2411 = vmatprep.subr.bf16.mxu0 %v1659
  %2412 = vmatpush1.bf16.msra.mxu0 %v1658
  %2413 = vmatprep.subr.bf16.mxu0 %v1655
  %2414 = vmatpush1.bf16.msra.mxu0 %v1654
  %2415 = vmatprep.subr.bf16.mxu0 %v1651
  %2416 = vmatpush1.bf16.msra.mxu0 %v1650
  %2417 = vmatprep.subr.bf16.mxu0 %v1711
  %2418 = vmatpush2.bf16.msra.mxu0 %v1710
  %2419 = vmatprep.subr.bf16.mxu0 %v1707
  %2420 = vmatpush2.bf16.msra.mxu0 %v1706
  %2421 = vmatprep.subr.bf16.mxu0 %v1703
  %2422 = vmatpush2.bf16.msra.mxu0 %v1702
  %2423 = vmatprep.subr.bf16.mxu0 %v1699
  %2424 = vmatpush2.bf16.msra.mxu0 %v1698
  %2425 = vmatprep.subr.bf16.mxu0 %v1695
  %2426 = vmatpush2.bf16.msra.mxu0 %v1694
  %2427 = vmatprep.subr.bf16.mxu0 %v1691
  %2428 = vmatpush2.bf16.msra.mxu0 %v1690
  %2429 = vmatprep.subr.bf16.mxu0 %v1687
  %2430 = vmatpush2.bf16.msra.mxu0 %v1686
  %2431 = vmatprep.subr.bf16.mxu0 %v1683
  %2432 = vmatpush2.bf16.msra.mxu0 %v1682
  %2433 = vmatprep.mubr.bf16.mxu0 %v89
  %2434 = vmatmul.mubr.bf16.gmra.mxu0 %v88
  %v2435 = vpop.f32.mrf.mxu0
  %v2436 = vadd.f32 %v2395, %v2435
  %v2437 = vpop.f32.mrf.mxu0
  %v2438 = vadd.f32 %v2397, %v2437
  %v2439 = vpop.f32.mrf.mxu0
  %v2440 = vpop.f32.mrf.mxu0
  %2441 = vdwg.mxu0
  %v2442 = vmax.f32 %v2231, 0.0
  %v2443 = vmax.f32 %v2233, 0.0
  %v2444 = vmax.f32 %v2436, 0.0
  %v2445 = vmax.f32 %v2438, 0.0
  %v2446 = vld [vmem:[%s3] sm:$0xf]
  %v2448 = vlaneseq
  %v2449 = vshrl.u32 %v2448, 7
  %v2450 = vsub.s32 0, %v2449
  %v2451 = vrot.slane %v2446, %v2450
  %v2452 = vlaneseq
  %v2453 = vshrl.u32 %v2452, 7
  %v2454 = vsub.s32 1, %v2453
  %v2455 = vrot.slane %v2446, %v2454
  %v2456 = vlaneseq
  %v2457 = vshrl.u32 %v2456, 7
  %v2458 = vsub.s32 2, %v2457
  %v2459 = vrot.slane %v2446, %v2458
  %v2460 = vlaneseq
  %v2461 = vshrl.u32 %v2460, 7
  %v2462 = vsub.s32 3, %v2461
  %v2463 = vrot.slane %v2446, %v2462
  %v2468 = vmul.f32 %v2442, %v2451
  %v2469 = vmul.f32 %v2443, %v2455
  %v2470 = vmul.f32 %v2444, %v2459
  %v2471 = vmul.f32 %v2445, %v2463
  %vm2472 = vcmask 1041408
  %v2473 = vsel %vm2472, %v2468, 0.0
  %v2474 = vsel %vm2472, %v2469, 0.0
  %v2475 = vadd.f32 %v2473, %v2474
  %v2476 = vsel %vm2472, %v2470, 0.0
  %v2477 = vadd.f32 %v2475, %v2476
  %v2478 = vsel %vm2472, %v2471, 0.0
  %v2479 = vadd.f32 %v2477, %v2478
  %2480 = vadd.xlane.f32.xlu0 %v2479
  %v2481 = vpop.xlane.xlu0 %2480
  %v2482 = vld [vmem:[#allocation2] sm:$0x1]
  %v2484 = vlaneseq
  %v2485 = vshrl.u32 %v2484, 7
  %v2486 = vsub.s32 0, %v2485
  %v2487 = vrot.slane %v2482, %v2486
  %v2489 = vadd.f32 %v2481, %v2487
  %2491 = vset.pattern.permute.xlu0 0
  %2492 = vperm.xlu0 %2491, %v2489
  %v2493 = vpop.permute.xlu0 %2492
  %2495 = vst [vmem:[%s5] sm:$0x3] %v2493
  // Predicated region
  $region22: #{_lambda_.3} parent=0 // pred_check
    _
  $region23: #{_lambda_.3} parent=0 // pred_check_branch
    %2497 = sbr.rel (0) target = $region25
  $region24: #{_lambda_.3} parent=0 // pred_region
    _
  $region25: #{_lambda_.3} parent=0 // pred_fallthru
    _
  // Predicated region
  $region26: #{_lambda_.3} parent=0 // pred_check
    _
  $region27: #{_lambda_.3} parent=0 // pred_check_branch
    %2499 = sbr.rel (0) target = $region29
  $region28: #{_lambda_.3} parent=0 // pred_region
    _
  $region29: #{_lambda_.3} parent=0 // pred_fallthru
    _

// kernel: _lambda_.2
$region0: #{_lambda_.2}
  #allocation0 [shape = 'u32[]', space=smem, size = 0x4, offset = 0x4, fixed_abs, tag = 'smem constant byte address 0x4 - core index']
  #allocation1 [shape = 'u32[144,128]{1,0:T(1,128)}', space=vmem, size = 0x12000, scoped, tag = 'internal scratch']
  #allocation2 [shape = 'f32[1,1280]{1,0:T(1,128)}', space=vmem, size = 0x1400, scoped, tag = 'scratch operand']
  %s0 = inlined_call_operand.vmem [shape: bf16[2,256,32], index: 0, kind: input, shape index: {}]
  %s1 = inlined_call_operand.vmem [shape: bf16[32,24], index: 1, kind: input, shape index: {}]
  %s2 = inlined_call_operand.vmem [shape: f32[1,24], index: 2, kind: input, shape index: {}]
  %s3 = inlined_call_operand.vmem [shape: bf16[24,1280], index: 3, kind: input, shape index: {}]
  %s4 = inlined_call_operand.vmem [shape: f32[1,1280], index: 4, kind: input, shape index: {}]
  %s5 = inlined_call_operand.vmem [shape: f32[2,1,1280], index: 5, kind: output, shape index: {}]
  %s6 = sld [smem:[#allocation0]]
  $region61: #{_lambda_.2} parent=0
    _
  %s8 = ssub.s32 1, %s6
  %s9 = scalar_select 0, %s8, %s6
  loop: start=0, step=1, limit=4
  $region2: #{_lambda_.2} parent=0 // loop_pre_header
    _
  $region3: #{_lambda_.2} parent=0 // loop_header
    %s11 = sphi 0, %s15
    %p12 = scmp.ge.s32.totalorder %s11, 4
    %s18 = sphi 0, %s30
    %s19 = sphi 0, %s26
    %s20 = sphi 0, %s18
    %s21 = sphi 0, %s19
    %s22 = sphi 0, %s20
    %s23 = sphi 0, %s21
    %s35 = sphi 0, %s37
    %s38 = sphi 0, %s35
    %s39 = sphi 0, %s38
    %s55 = sphi 0, %s39
    %s59 = sphi 0, %s59
    %s61 = sphi 0, %s59
    %s62 = sphi 0, %s61
    %s76 = sphi 0, %s62
    %s80 = sphi 0, %s80
    %s82 = sphi 0, %s80
    %s83 = sphi 0, %s82
    %s97 = sphi 0, %s83
    %s101 = sphi 0, %s101
    %s103 = sphi 0, %s101
    %s104 = sphi 0, %s103
    %s118 = sphi 0, %s104
    %s122 = sphi 0, %s122
    %s124 = sphi 0, %s122
    %s125 = sphi 0, %s124
    %s139 = sphi 0, %s125
    %s145 = sphi 0, %s147
    %s148 = sphi 0, %s145
    %s149 = sphi 0, %s148
    %s165 = sphi 0, %s149
  $region4: #{_lambda_.2} parent=0 // loop_header_branch
    %14 = sbr.rel (%p12) target = $region8
  $region5: #{_lambda_.2} parent=0 // loop_body
    %s16 = ssub.s32 %s11, 1
    %s17 = ssub.s32 %s11, 2
    %s24 = sadd.s32 1, %s19
    %p25 = scmp.ge.s32.totalorder %s24, 1
    %s26 = scalar_select %p25, 0, %s24
    %s27 = sadd.s32 1, %s18
    %s28 = scalar_select %p25, %s27, %s18
    %p29 = scmp.ge.s32.totalorder %s28, 2
    %s30 = scalar_select %p29, 0, %s28
    %s31 = ssub.s32 %s18, %s30
    %s32 = ssub.s32 %s19, %s26
    %s33 = sor.u32 %s31, %s32
    %p34 = scmp.eq.s32.totalorder %s33, 0
    %s36 = sadd.s32 %s35, 1
    %s37 = scalar_select %p34, %s35, %s36
    %p40 = pneg %p34
    %p41 = scmp.eq.s32.totalorder %s11, 1
    %p42 = por %p40, %p41
    %p43 = scmp.ne.s32.totalorder %s35, %s38
    %p44 = scmp.eq.s32.totalorder %s11, 0
    %p45 = por %p43, %p44
    %p46 = scmp.ne.s32.totalorder %s35, %s38
    %p47 = scmp.eq.s32.totalorder %s16, 1
    %p48 = por %p46, %p47
    %p49 = scmp.ne.s32.totalorder %s38, %s39
    %p50 = scmp.eq.s32.totalorder %s16, 0
    %p51 = por %p49, %p50
    %p52 = scmp.ne.s32.totalorder %s38, %s39
    %p53 = scmp.eq.s32.totalorder %s17, 1
    %p54 = por %p52, %p53
    %p56 = scmp.ne.s32.totalorder %s39, %s55
    %p57 = scmp.eq.s32.totalorder %s17, 0
    %p58 = por %p56, %p57
    %s60 = sadd.s32 %s59, 1
    %p63 = scmp.eq.s32.totalorder %s11, 1
    %p64 = scmp.ne.s32.totalorder %s59, %s61
    %p65 = scmp.eq.s32.totalorder %s11, 0
    %p66 = por %p64, %p65
    %p67 = scmp.ne.s32.totalorder %s59, %s61
    %p68 = scmp.eq.s32.totalorder %s16, 1
    %p69 = por %p67, %p68
    %p70 = scmp.ne.s32.totalorder %s61, %s62
    %p71 = scmp.eq.s32.totalorder %s16, 0
    %p72 = por %p70, %p71
    %p73 = scmp.ne.s32.totalorder %s61, %s62
    %p74 = scmp.eq.s32.totalorder %s17, 1
    %p75 = por %p73, %p74
    %p77 = scmp.ne.s32.totalorder %s62, %s76
    %p78 = scmp.eq.s32.totalorder %s17, 0
    %p79 = por %p77, %p78
    %s81 = sadd.s32 %s80, 1
    %p84 = scmp.eq.s32.totalorder %s11, 1
    %p85 = scmp.ne.s32.totalorder %s80, %s82
    %p86 = scmp.eq.s32.totalorder %s11, 0
    %p87 = por %p85, %p86
    %p88 = scmp.ne.s32.totalorder %s80, %s82
    %p89 = scmp.eq.s32.totalorder %s16, 1
    %p90 = por %p88, %p89
    %p91 = scmp.ne.s32.totalorder %s82, %s83
    %p92 = scmp.eq.s32.totalorder %s16, 0
    %p93 = por %p91, %p92
    %p94 = scmp.ne.s32.totalorder %s82, %s83
    %p95 = scmp.eq.s32.totalorder %s17, 1
    %p96 = por %p94, %p95
    %p98 = scmp.ne.s32.totalorder %s83, %s97
    %p99 = scmp.eq.s32.totalorder %s17, 0
    %p100 = por %p98, %p99
    %s102 = sadd.s32 %s101, 1
    %p105 = scmp.eq.s32.totalorder %s11, 1
    %p106 = scmp.ne.s32.totalorder %s101, %s103
    %p107 = scmp.eq.s32.totalorder %s11, 0
    %p108 = por %p106, %p107
    %p109 = scmp.ne.s32.totalorder %s101, %s103
    %p110 = scmp.eq.s32.totalorder %s16, 1
    %p111 = por %p109, %p110
    %p112 = scmp.ne.s32.totalorder %s103, %s104
    %p113 = scmp.eq.s32.totalorder %s16, 0
    %p114 = por %p112, %p113
    %p115 = scmp.ne.s32.totalorder %s103, %s104
    %p116 = scmp.eq.s32.totalorder %s17, 1
    %p117 = por %p115, %p116
    %p119 = scmp.ne.s32.totalorder %s104, %s118
    %p120 = scmp.eq.s32.totalorder %s17, 0
    %p121 = por %p119, %p120
    %s123 = sadd.s32 %s122, 1
    %p126 = scmp.eq.s32.totalorder %s11, 1
    %p127 = scmp.ne.s32.totalorder %s122, %s124
    %p128 = scmp.eq.s32.totalorder %s11, 0
    %p129 = por %p127, %p128
    %p130 = scmp.ne.s32.totalorder %s122, %s124
    %p131 = scmp.eq.s32.totalorder %s16, 1
    %p132 = por %p130, %p131
    %p133 = scmp.ne.s32.totalorder %s124, %s125
    %p134 = scmp.eq.s32.totalorder %s16, 0
    %p135 = por %p133, %p134
    %p136 = scmp.ne.s32.totalorder %s124, %s125
    %p137 = scmp.eq.s32.totalorder %s17, 1
    %p138 = por %p136, %p137
    %p140 = scmp.ne.s32.totalorder %s125, %s139
    %p141 = scmp.eq.s32.totalorder %s17, 0
    %p142 = por %p140, %p141
    %s143 = ssub.s32 %s18, %s30
    %p144 = scmp.eq.s32.totalorder %s143, 0
    %s146 = sadd.s32 %s145, 1
    %s147 = scalar_select %p144, %s145, %s146
    %p150 = pneg %p144
    %p151 = scmp.eq.s32.totalorder %s11, 1
    %p152 = por %p150, %p151
    %p153 = scmp.ne.s32.totalorder %s145, %s148
    %p154 = scmp.eq.s32.totalorder %s11, 0
    %p155 = por %p153, %p154
    %p156 = scmp.ne.s32.totalorder %s145, %s148
    %p157 = scmp.eq.s32.totalorder %s16, 1
    %p158 = por %p156, %p157
    %p159 = scmp.ne.s32.totalorder %s148, %s149
    %p160 = scmp.eq.s32.totalorder %s16, 0
    %p161 = por %p159, %p160
    %p162 = scmp.ne.s32.totalorder %s148, %s149
    %p163 = scmp.eq.s32.totalorder %s17, 1
    %p164 = por %p162, %p163
    %p166 = scmp.ne.s32.totalorder %s149, %s165
    %p167 = scmp.eq.s32.totalorder %s17, 0
    %p168 = por %p166, %p167
    %p169 = scmp.le.s32.totalorder 1, %s11
    %p170 = scmp.lt.s32.totalorder %s11, 3
    %p171 = pnand %p169, %p170
    %p172 = pneg %p171
    // Predicated region
    $region9: #{_lambda_.2} parent=5 // pred_check
      _
    $region10: #{_lambda_.2} parent=5 // pred_check_branch
      %174 = sbr.rel (%p171) target = $region12
    $region11: #{_lambda_.2} parent=5 // pred_region
      %s175 = ssub.s32 %s11, 1
      // Predicated region
      $region13: #{_lambda_.2} parent=11 // pred_check
        %p176 = pneg %p72
      $region14: #{_lambda_.2} parent=11 // pred_check_branch
        %178 = sbr.rel (%p176) target = $region16
      $region15: #{_lambda_.2} parent=11 // pred_region
        _
      $region16: #{_lambda_.2} parent=11 // pred_fallthru
        _
      // Predicated region
      $region17: #{_lambda_.2} parent=11 // pred_check
        %p179 = pneg %p93
      $region18: #{_lambda_.2} parent=11 // pred_check_branch
        %181 = sbr.rel (%p179) target = $region20
      $region19: #{_lambda_.2} parent=11 // pred_region
        _
      $region20: #{_lambda_.2} parent=11 // pred_fallthru
        _
      // Predicated region
      $region21: #{_lambda_.2} parent=11 // pred_check
        %p182 = pneg %p114
      $region22: #{_lambda_.2} parent=11 // pred_check_branch
        %184 = sbr.rel (%p182) target = $region24
      $region23: #{_lambda_.2} parent=11 // pred_region
        _
      $region24: #{_lambda_.2} parent=11 // pred_fallthru
        _
      // Predicated region
      $region25: #{_lambda_.2} parent=11 // pred_check
        %p185 = pneg %p135
      $region26: #{_lambda_.2} parent=11 // pred_check_branch
        %187 = sbr.rel (%p185) target = $region28
      $region27: #{_lambda_.2} parent=11 // pred_region
        _
      $region28: #{_lambda_.2} parent=11 // pred_fallthru
        _
    $region12: #{_lambda_.2} parent=5 // pred_fallthru
      _
    %p188 = scmp.lt.s32.totalorder %s11, 2
    // Predicated region
    $region29: #{_lambda_.2} parent=5 // pred_check
      %p189 = pneg %p188
    $region30: #{_lambda_.2} parent=5 // pred_check_branch
      %191 = sbr.rel (%p189) target = $region32
    $region31: #{_lambda_.2} parent=5 // pred_region
      // Predicated region
      $region33: #{_lambda_.2} parent=31 // pred_check
        %p192 = pneg %p45
      $region34: #{_lambda_.2} parent=31 // pred_check_branch
        %194 = sbr.rel (%p192) target = $region36
      $region35: #{_lambda_.2} parent=31 // pred_region
        %s195 = smul.u32 32, %s19
        %p196 = scmp.lt.s32.totalorder %s18, 1
        %s197 = scalar_select %p196, %s18, 1
        %p198 = scmp.lt.s32.totalorder %s195, 31
        %s199 = scalar_select %p198, %s195, 31
        %s200 = smul.addr %s197, 32
        %s201 = sadd.s32 %s199, %s200
        %s202 = smul.addr %s201, 4
        %s203 = scalar_lea.vmem %s0, %s202
        %s204 = smul.u32 32, %s19
      $region36: #{_lambda_.2} parent=31 // pred_fallthru
        _
    $region32: #{_lambda_.2} parent=5 // pred_fallthru
      _
    %p205 = scmp.le.s32.totalorder 1, %s11
    %p206 = scmp.lt.s32.totalorder %s11, 3
    %p207 = pnand %p205, %p206
    %p208 = pneg %p207
    // Predicated region
    $region37: #{_lambda_.2} parent=5 // pred_check
      _
    $region38: #{_lambda_.2} parent=5 // pred_check_branch
      %210 = sbr.rel (%p207) target = $region40
    $region39: #{_lambda_.2} parent=5 // pred_region
      %s211 = ssub.s32 %s11, 1
      %s212 = smul.u32 32, %s21
      %p213 = scmp.lt.s32.totalorder %s20, 1
      %s214 = scalar_select %p213, %s20, 1
      %p215 = scmp.lt.s32.totalorder %s212, 31
      %s216 = scalar_select %p215, %s212, 31
      %s217 = smul.addr %s214, 32
      %s218 = sadd.s32 %s216, %s217
      %s219 = smul.addr %s218, 4
      %s220 = scalar_lea.vmem %s0, %s219
      %p221 = pneg %p51
      %p222 = pneg %p48
      %p223 = pneg %p72
      %p224 = pneg %p69
      %p225 = pneg %p93
      %p226 = pneg %p90
      %p227 = pneg %p114
      %p228 = pneg %p111
      %p229 = pneg %p135
      %p230 = pneg %p132
      %p231 = pneg %p161
      %p232 = pneg %p158
      %p233 = scmp.lt.s32.totalorder %s20, 1
      %s234 = scalar_select %p233, %s20, 1
      %s235 = smul.addr %s234, 10
      %s236 = scalar_lea.vmem %s5, %s235
      %s237 = smul.u32 32, %s21
      %p238 = scmp.lt.s32.totalorder %s20, 1
      %s239 = scalar_select %p238, %s20, 1
      %p240 = scmp.lt.s32.totalorder %s237, 31
      %s241 = scalar_select %p240, %s237, 31
      %s242 = smul.addr %s239, 32
      %s243 = sadd.s32 %s241, %s242
      %s244 = smul.addr %s243, 4
      %s245 = scalar_lea.vmem %s0, %s244
      %s246 = smul.u32 32, %s21
      %p247 = scmp.lt.s32.totalorder %s20, 1
      %s248 = scalar_select %p247, %s20, 1
      %s249 = smul.addr %s248, 10
      %s250 = scalar_lea.vmem %s5, %s249
      %p253 = scmp.eq.s32.totalorder %s21, 0
      // Predicated region
      $region41: #{_lambda_.2} parent=39 // pred_check
        %p254 = pneg %p253
      $region42: #{_lambda_.2} parent=39 // pred_check_branch
        %256 = sbr.rel (%p254) target = $region44
      $region43: #{_lambda_.2} parent=39 // pred_region
        %257 = vst [vmem:[#allocation2] sm:$0xff] 0.0
        %v258 = vlaneseq
        %vm259 = vcmp.ge.s32.totalorder %v258, 0
        %vm260 = vcmp.lt.s32.totalorder %v258, 256
        %vm261 = vmand %vm259, %vm260
        %262 = vst.msk [vmem:[#allocation2 + $0x8] sm:$0x3] %vm261, 0.0
      $region44: #{_lambda_.2} parent=39 // pred_fallthru
        _
      %v263 = vld [vmem:[%s245] sm:$0xf]
      %v264 = vld [vmem:[%s245 + $0x4] sm:$0xf]
      %v265 = vld [vmem:[%s245 + $0x8] sm:$0xf]
      %v266 = vld [vmem:[%s245 + $0xc] sm:$0xf]
      %v267 = vld [vmem:[%s245 + $0x10] sm:$0xf]
      %v268 = vld [vmem:[%s245 + $0x14] sm:$0xf]
      %v269 = vld [vmem:[%s245 + $0x18] sm:$0xf]
      %v270 = vld [vmem:[%s245 + $0x1c] sm:$0xf]
      %v271 = vld [vmem:[%s245 + $0x20] sm:$0xf]
      %v272 = vld [vmem:[%s245 + $0x24] sm:$0xf]
      %v273 = vld [vmem:[%s245 + $0x28] sm:$0xf]
      %v274 = vld [vmem:[%s245 + $0x2c] sm:$0xf]
      %v275 = vld [vmem:[%s245 + $0x30] sm:$0xf]
      %v276 = vld [vmem:[%s245 + $0x34] sm:$0xf]
      %v277 = vld [vmem:[%s245 + $0x38] sm:$0xf]
      %v278 = vld [vmem:[%s245 + $0x3c] sm:$0xf]
      %v279 = vld [vmem:[%s245 + $0x40] sm:$0xf]
      %v280 = vld [vmem:[%s245 + $0x44] sm:$0xf]
      %v281 = vld [vmem:[%s245 + $0x48] sm:$0xf]
      %v282 = vld [vmem:[%s245 + $0x4c] sm:$0xf]
      %v283 = vld [vmem:[%s245 + $0x50] sm:$0xf]
      %v284 = vld [vmem:[%s245 + $0x54] sm:$0xf]
      %v285 = vld [vmem:[%s245 + $0x58] sm:$0xf]
      %v286 = vld [vmem:[%s245 + $0x5c] sm:$0xf]
      %v287 = vld [vmem:[%s245 + $0x60] sm:$0xf]
      %v288 = vld [vmem:[%s245 + $0x64] sm:$0xf]
      %v289 = vld [vmem:[%s245 + $0x68] sm:$0xf]
      %v290 = vld [vmem:[%s245 + $0x6c] sm:$0xf]
      %v291 = vld [vmem:[%s245 + $0x70] sm:$0xf]
      %v292 = vld [vmem:[%s245 + $0x74] sm:$0xf]
      %v293 = vld [vmem:[%s245 + $0x78] sm:$0xf]
      %v294 = vld [vmem:[%s245 + $0x7c] sm:$0xf]
      %v295 = vld [vmem:[%s1] sm:$0xf]
      %v296 = vld [vmem:[%s1 + $0x4] sm:$0xf]
      %v297 = vld [vmem:[%s1 + $0x8] sm:$0xf]
      %v298 = vld [vmem:[%s1 + $0xc] sm:$0xf]
      %v299 = vld [vmem:[%s2] sm:$0x1]
      %v301 = vlaneseq
      %v302 = vshrl.u32 %v301, 7
      %v303 = vsub.s32 0, %v302
      %v304 = vrot.slane %v299, %v303
      %v338 = vunpack.c.l.b16 %v263
      %v339 = vunpack.c.l.b16 %v264
      %v340 = vunpack.c.l.b16 %v265
      %v341 = vunpack.c.l.b16 %v266
      %v342 = vunpack.c.l.b16 %v267
      %v343 = vunpack.c.l.b16 %v268
      %v344 = vunpack.c.l.b16 %v269
      %v345 = vunpack.c.l.b16 %v270
      %v346 = vunpack.c.l.b16 %v271
      %v347 = vunpack.c.l.b16 %v272
      %v348 = vunpack.c.l.b16 %v273
      %v349 = vunpack.c.l.b16 %v274
      %v350 = vunpack.c.l.b16 %v275
      %v351 = vunpack.c.l.b16 %v276
      %v352 = vunpack.c.l.b16 %v277
      %v353 = vunpack.c.l.b16 %v278
      %v354 = vunpack.c.l.b16 %v279
      %v355 = vunpack.c.l.b16 %v280
      %v356 = vunpack.c.l.b16 %v281
      %v357 = vunpack.c.l.b16 %v282
      %v358 = vunpack.c.l.b16 %v283
      %v359 = vunpack.c.l.b16 %v284
      %v360 = vunpack.c.l.b16 %v285
      %v361 = vunpack.c.l.b16 %v286
      %v362 = vunpack.c.l.b16 %v287
      %v363 = vunpack.c.l.b16 %v288
      %v364 = vunpack.c.l.b16 %v289
      %v365 = vunpack.c.l.b16 %v290
      %v366 = vunpack.c.l.b16 %v291
      %v367 = vunpack.c.l.b16 %v292
      %v368 = vunpack.c.l.b16 %v293
      %v369 = vunpack.c.l.b16 %v294
      %v370 = vpack.c.b16 %v339, %v338
      %v371 = vpack.c.b16 %v341, %v340
      %v372 = vpack.c.b16 %v343, %v342
      %v373 = vpack.c.b16 %v345, %v344
      %v374 = vpack.c.b16 %v347, %v346
      %v375 = vpack.c.b16 %v349, %v348
      %v376 = vpack.c.b16 %v351, %v350
      %v377 = vpack.c.b16 %v353, %v352
      %v378 = vpack.c.b16 %v355, %v354
      %v379 = vpack.c.b16 %v357, %v356
      %v380 = vpack.c.b16 %v359, %v358
      %v381 = vpack.c.b16 %v361, %v360
      %v382 = vpack.c.b16 %v363, %v362
      %v383 = vpack.c.b16 %v365, %v364
      %v384 = vpack.c.b16 %v367, %v366
      %v385 = vpack.c.b16 %v369, %v368
      %v390 = vunpack.c.l.b16 %v295
      %v391 = vunpack.c.l.b16 %v296
      %v392 = vunpack.c.l.b16 %v297
      %v393 = vunpack.c.l.b16 %v298
      %v394 = vpack.c.b16 %v391, %v390
      %v395 = vpack.c.b16 %v393, %v392
      %vm398 = vcmask 261120
      %v400 = vsel %vm398, %v370, 0
      %v403 = vsel %vm398, %v371, 0
      %v406 = vsel %vm398, %v372, 0
      %v409 = vsel %vm398, %v373, 0
      %v412 = vsel %vm398, %v374, 0
      %v415 = vsel %vm398, %v375, 0
      %v418 = vsel %vm398, %v376, 0
      %v421 = vsel %vm398, %v377, 0
      %v424 = vsel %vm398, %v378, 0
      %v427 = vsel %vm398, %v379, 0
      %v430 = vsel %vm398, %v380, 0
      %v433 = vsel %vm398, %v381, 0
      %v436 = vsel %vm398, %v382, 0
      %v439 = vsel %vm398, %v383, 0
      %v442 = vsel %vm398, %v384, 0
      %v445 = vsel %vm398, %v385, 0
      %447 = vmatprep.subr.bf16.mxu0 0
      %448 = vmatpush1.bf16.msra.mxu0 0
      %449 = vmatprep.subr.bf16.mxu0 0
      %450 = vmatpush1.bf16.msra.mxu0 0
      %451 = vmatprep.subr.bf16.mxu0 0
      %452 = vmatpush1.bf16.msra.mxu0 0
      %453 = vmatprep.subr.bf16.mxu0 0
      %454 = vmatpush1.bf16.msra.mxu0 0
      %455 = vmatprep.subr.bf16.mxu0 0
      %456 = vmatpush1.bf16.msra.mxu0 0
      %457 = vmatprep.subr.bf16.mxu0 0
      %458 = vmatpush1.bf16.msra.mxu0 0
      %459 = vmatprep.subr.bf16.mxu0 0
      %460 = vmatpush1.bf16.msra.mxu0 %v395
      %461 = vmatprep.subr.bf16.mxu0 0
      %462 = vmatpush1.bf16.msra.mxu0 %v394
      %463 = vmatprep.subr.bf16.mxu0 0
      %464 = vmatpush2.bf16.msra.mxu0 0
      %465 = vmatprep.subr.bf16.mxu0 0
      %466 = vmatpush2.bf16.msra.mxu0 0
      %467 = vmatprep.subr.bf16.mxu0 0
      %468 = vmatpush2.bf16.msra.mxu0 0
      %469 = vmatprep.subr.bf16.mxu0 0
      %470 = vmatpush2.bf16.msra.mxu0 0
      %471 = vmatprep.subr.bf16.mxu0 0
      %472 = vmatpush2.bf16.msra.mxu0 0
      %473 = vmatprep.subr.bf16.mxu0 0
      %474 = vmatpush2.bf16.msra.mxu0 0
      %475 = vmatprep.subr.bf16.mxu0 0
      %476 = vmatpush2.bf16.msra.mxu0 0
      %477 = vmatprep.subr.bf16.mxu0 0
      %478 = vmatpush2.bf16.msra.mxu0 0
      %479 = vmatprep.mubr.bf16.mxu0 0
      %480 = vmatmul.mubr.bf16.gmra.mxu0 %v400
      %v481 = vpop.f32.mrf.mxu0
      %v482 = vadd.f32 %v304, %v481
      %v483 = vpop.f32.mrf.mxu0
      %v484 = vpop.f32.mrf.mxu0
      %v485 = vadd.f32 %v304, %v484
      %v486 = vpop.f32.mrf.mxu0
      %487 = vmatprep.mubr.bf16.mxu0 0
      %488 = vmatmul.mubr.bf16.gmra.mxu0 %v403
      %v489 = vpop.f32.mrf.mxu0
      %v490 = vadd.f32 %v304, %v489
      %v491 = vpop.f32.mrf.mxu0
      %v492 = vpop.f32.mrf.mxu0
      %v493 = vadd.f32 %v304, %v492
      %v494 = vpop.f32.mrf.mxu0
      %495 = vmatprep.mubr.bf16.mxu0 0
      %496 = vmatmul.mubr.bf16.gmra.mxu0 %v406
      %v497 = vpop.f32.mrf.mxu0
      %v498 = vadd.f32 %v304, %v497
      %v499 = vpop.f32.mrf.mxu0
      %v500 = vpop.f32.mrf.mxu0
      %v501 = vadd.f32 %v304, %v500
      %v502 = vpop.f32.mrf.mxu0
      %503 = vmatprep.mubr.bf16.mxu0 0
      %504 = vmatmul.mubr.bf16.gmra.mxu0 %v409
      %v505 = vpop.f32.mrf.mxu0
      %v506 = vadd.f32 %v304, %v505
      %v507 = vpop.f32.mrf.mxu0
      %v508 = vpop.f32.mrf.mxu0
      %v509 = vadd.f32 %v304, %v508
      %v510 = vpop.f32.mrf.mxu0
      %511 = vmatprep.mubr.bf16.mxu0 0
      %512 = vmatmul.mubr.bf16.gmra.mxu0 %v412
      %v513 = vpop.f32.mrf.mxu0
      %v514 = vadd.f32 %v304, %v513
      %v515 = vpop.f32.mrf.mxu0
      %v516 = vpop.f32.mrf.mxu0
      %v517 = vadd.f32 %v304, %v516
      %v518 = vpop.f32.mrf.mxu0
      %519 = vmatprep.mubr.bf16.mxu0 0
      %520 = vmatmul.mubr.bf16.gmra.mxu0 %v415
      %v521 = vpop.f32.mrf.mxu0
      %v522 = vadd.f32 %v304, %v521
      %v523 = vpop.f32.mrf.mxu0
      %v524 = vpop.f32.mrf.mxu0
      %v525 = vadd.f32 %v304, %v524
      %v526 = vpop.f32.mrf.mxu0
      %527 = vmatprep.mubr.bf16.mxu0 0
      %528 = vmatmul.mubr.bf16.gmra.mxu0 %v418
      %v529 = vpop.f32.mrf.mxu0
      %v530 = vadd.f32 %v304, %v529
      %v531 = vpop.f32.mrf.mxu0
      %v532 = vpop.f32.mrf.mxu0
      %v533 = vadd.f32 %v304, %v532
      %v534 = vpop.f32.mrf.mxu0
      %535 = vmatprep.mubr.bf16.mxu0 0
      %536 = vmatmul.mubr.bf16.gmra.mxu0 %v421
      %v537 = vpop.f32.mrf.mxu0
      %v538 = vadd.f32 %v304, %v537
      %v539 = vpop.f32.mrf.mxu0
      %v540 = vpop.f32.mrf.mxu0
      %v541 = vadd.f32 %v304, %v540
      %v542 = vpop.f32.mrf.mxu0
      %543 = vmatprep.mubr.bf16.mxu0 0
      %544 = vmatmul.mubr.bf16.gmra.mxu0 %v424
      %v545 = vpop.f32.mrf.mxu0
      %v546 = vadd.f32 %v304, %v545
      %v547 = vpop.f32.mrf.mxu0
      %v548 = vpop.f32.mrf.mxu0
      %v549 = vadd.f32 %v304, %v548
      %v550 = vpop.f32.mrf.mxu0
      %551 = vmatprep.mubr.bf16.mxu0 0
      %552 = vmatmul.mubr.bf16.gmra.mxu0 %v427
      %v553 = vpop.f32.mrf.mxu0
      %v554 = vadd.f32 %v304, %v553
      %v555 = vpop.f32.mrf.mxu0
      %v556 = vpop.f32.mrf.mxu0
      %v557 = vadd.f32 %v304, %v556
      %v558 = vpop.f32.mrf.mxu0
      %559 = vmatprep.mubr.bf16.mxu0 0
      %560 = vmatmul.mubr.bf16.gmra.mxu0 %v430
      %v561 = vpop.f32.mrf.mxu0
      %v562 = vadd.f32 %v304, %v561
      %v563 = vpop.f32.mrf.mxu0
      %v564 = vpop.f32.mrf.mxu0
      %v565 = vadd.f32 %v304, %v564
      %v566 = vpop.f32.mrf.mxu0
      %567 = vmatprep.mubr.bf16.mxu0 0
      %568 = vmatmul.mubr.bf16.gmra.mxu0 %v433
      %v569 = vpop.f32.mrf.mxu0
      %v570 = vadd.f32 %v304, %v569
      %v571 = vpop.f32.mrf.mxu0
      %v572 = vpop.f32.mrf.mxu0
      %v573 = vadd.f32 %v304, %v572
      %v574 = vpop.f32.mrf.mxu0
      %575 = vmatprep.mubr.bf16.mxu0 0
      %576 = vmatmul.mubr.bf16.gmra.mxu0 %v436
      %v577 = vpop.f32.mrf.mxu0
      %v578 = vadd.f32 %v304, %v577
      %v579 = vpop.f32.mrf.mxu0
      %v580 = vpop.f32.mrf.mxu0
      %v581 = vadd.f32 %v304, %v580
      %v582 = vpop.f32.mrf.mxu0
      %583 = vmatprep.mubr.bf16.mxu0 0
      %584 = vmatmul.mubr.bf16.gmra.mxu0 %v439
      %v585 = vpop.f32.mrf.mxu0
      %v586 = vadd.f32 %v304, %v585
      %v587 = vpop.f32.mrf.mxu0
      %v588 = vpop.f32.mrf.mxu0
      %v589 = vadd.f32 %v304, %v588
      %v590 = vpop.f32.mrf.mxu0
      %591 = vmatprep.mubr.bf16.mxu0 0
      %592 = vmatmul.mubr.bf16.gmra.mxu0 %v442
      %v593 = vpop.f32.mrf.mxu0
      %v594 = vadd.f32 %v304, %v593
      %v595 = vpop.f32.mrf.mxu0
      %v596 = vpop.f32.mrf.mxu0
      %v597 = vadd.f32 %v304, %v596
      %v598 = vpop.f32.mrf.mxu0
      %599 = vmatprep.mubr.bf16.mxu0 0
      %600 = vmatmul.mubr.bf16.gmra.mxu0 %v445
      %v601 = vpop.f32.mrf.mxu0
      %v602 = vadd.f32 %v304, %v601
      %v603 = vpop.f32.mrf.mxu0
      %v604 = vpop.f32.mrf.mxu0
      %v605 = vadd.f32 %v304, %v604
      %v606 = vpop.f32.mrf.mxu0
      %607 = vdwg.mxu0
      %v608 = vpack.c.bf16 %v485, %v482
      %v609 = vpack.c.bf16 %v493, %v490
      %v610 = vpack.c.bf16 %v501, %v498
      %v611 = vpack.c.bf16 %v509, %v506
      %v612 = vpack.c.bf16 %v517, %v514
      %v613 = vpack.c.bf16 %v525, %v522
      %v614 = vpack.c.bf16 %v533, %v530
      %v615 = vpack.c.bf16 %v541, %v538
      %v616 = vpack.c.bf16 %v549, %v546
      %v617 = vpack.c.bf16 %v557, %v554
      %v618 = vpack.c.bf16 %v565, %v562
      %v619 = vpack.c.bf16 %v573, %v570
      %v620 = vpack.c.bf16 %v581, %v578
      %v621 = vpack.c.bf16 %v589, %v586
      %v622 = vpack.c.bf16 %v597, %v594
      %v623 = vpack.c.bf16 %v605, %v602
      %v624 = vxor.u32 %v608, 2147516416
      %v625 = vxor.u32 %v609, 2147516416
      %v626 = vxor.u32 %v610, 2147516416
      %v627 = vxor.u32 %v611, 2147516416
      %v628 = vxor.u32 %v612, 2147516416
      %v629 = vxor.u32 %v613, 2147516416
      %v630 = vxor.u32 %v614, 2147516416
      %v631 = vxor.u32 %v615, 2147516416
      %v632 = vxor.u32 %v616, 2147516416
      %v633 = vxor.u32 %v617, 2147516416
      %v634 = vxor.u32 %v618, 2147516416
      %v635 = vxor.u32 %v619, 2147516416
      %v636 = vxor.u32 %v620, 2147516416
      %v637 = vxor.u32 %v621, 2147516416
      %v638 = vxor.u32 %v622, 2147516416
      %v639 = vxor.u32 %v623, 2147516416
      %v641 = vmul.bf16 %v624, 1069105081
      %v642 = vpow.bf16.pop %v641
      %v644 = vmul.bf16 %v625, 1069105081
      %v645 = vpow.bf16.pop %v644
      %v647 = vmul.bf16 %v626, 1069105081
      %v648 = vpow.bf16.pop %v647
      %v650 = vmul.bf16 %v627, 1069105081
      %v651 = vpow.bf16.pop %v650
      %v653 = vmul.bf16 %v628, 1069105081
      %v654 = vpow.bf16.pop %v653
      %v656 = vmul.bf16 %v629, 1069105081
      %v657 = vpow.bf16.pop %v656
      %v659 = vmul.bf16 %v630, 1069105081
      %v660 = vpow.bf16.pop %v659
      %v662 = vmul.bf16 %v631, 1069105081
      %v663 = vpow.bf16.pop %v662
      %v665 = vmul.bf16 %v632, 1069105081
      %v666 = vpow.bf16.pop %v665
      %v668 = vmul.bf16 %v633, 1069105081
      %v669 = vpow.bf16.pop %v668
      %v671 = vmul.bf16 %v634, 1069105081
      %v672 = vpow.bf16.pop %v671
      %v674 = vmul.bf16 %v635, 1069105081
      %v675 = vpow.bf16.pop %v674
      %v677 = vmul.bf16 %v636, 1069105081
      %v678 = vpow.bf16.pop %v677
      %v680 = vmul.bf16 %v637, 1069105081
      %v681 = vpow.bf16.pop %v680
      %v683 = vmul.bf16 %v638, 1069105081
      %v684 = vpow.bf16.pop %v683
      %v686 = vmul.bf16 %v639, 1069105081
      %v687 = vpow.bf16.pop %v686
      %v688 = vadd.bf16 %v642, 1065369472
      %v689 = vadd.bf16 %v645, 1065369472
      %v690 = vadd.bf16 %v648, 1065369472
      %v691 = vadd.bf16 %v651, 1065369472
      %v692 = vadd.bf16 %v654, 1065369472
      %v693 = vadd.bf16 %v657, 1065369472
      %v694 = vadd.bf16 %v660, 1065369472
      %v695 = vadd.bf16 %v663, 1065369472
      %v696 = vadd.bf16 %v666, 1065369472
      %v697 = vadd.bf16 %v669, 1065369472
      %v698 = vadd.bf16 %v672, 1065369472
      %v699 = vadd.bf16 %v675, 1065369472
      %v700 = vadd.bf16 %v678, 1065369472
      %v701 = vadd.bf16 %v681, 1065369472
      %v702 = vadd.bf16 %v684, 1065369472
      %v703 = vadd.bf16 %v687, 1065369472
      %v704 = vrcp.bf16.pop %v688
      %v705 = vmul.bf16 1065369472, %v704
      %v706 = vrcp.bf16.pop %v689
      %v707 = vmul.bf16 1065369472, %v706
      %v708 = vrcp.bf16.pop %v690
      %v709 = vmul.bf16 1065369472, %v708
      %v710 = vrcp.bf16.pop %v691
      %v711 = vmul.bf16 1065369472, %v710
      %v712 = vrcp.bf16.pop %v692
      %v713 = vmul.bf16 1065369472, %v712
      %v714 = vrcp.bf16.pop %v693
      %v715 = vmul.bf16 1065369472, %v714
      %v716 = vrcp.bf16.pop %v694
      %v717 = vmul.bf16 1065369472, %v716
      %v718 = vrcp.bf16.pop %v695
      %v719 = vmul.bf16 1065369472, %v718
      %v720 = vrcp.bf16.pop %v696
      %v721 = vmul.bf16 1065369472, %v720
      %v722 = vrcp.bf16.pop %v697
      %v723 = vmul.bf16 1065369472, %v722
      %v724 = vrcp.bf16.pop %v698
      %v725 = vmul.bf16 1065369472, %v724
      %v726 = vrcp.bf16.pop %v699
      %v727 = vmul.bf16 1065369472, %v726
      %v728 = vrcp.bf16.pop %v700
      %v729 = vmul.bf16 1065369472, %v728
      %v730 = vrcp.bf16.pop %v701
      %v731 = vmul.bf16 1065369472, %v730
      %v732 = vrcp.bf16.pop %v702
      %v733 = vmul.bf16 1065369472, %v732
      %v734 = vrcp.bf16.pop %v703
      %v735 = vmul.bf16 1065369472, %v734
      %v736 = vmul.bf16 %v608, %v705
      %v737 = vmul.bf16 %v609, %v707
      %v738 = vmul.bf16 %v610, %v709
      %v739 = vmul.bf16 %v611, %v711
      %v740 = vmul.bf16 %v612, %v713
      %v741 = vmul.bf16 %v613, %v715
      %v742 = vmul.bf16 %v614, %v717
      %v743 = vmul.bf16 %v615, %v719
      %v744 = vmul.bf16 %v616, %v721
      %v745 = vmul.bf16 %v617, %v723
      %v746 = vmul.bf16 %v618, %v725
      %v747 = vmul.bf16 %v619, %v727
      %v748 = vmul.bf16 %v620, %v729
      %v749 = vmul.bf16 %v621, %v731
      %v750 = vmul.bf16 %v622, %v733
      %v751 = vmul.bf16 %v623, %v735
      %v752 = vld [vmem:[%s3] sm:$0xff]
      %v753 = vld [vmem:[%s3 + $0x8] sm:$0xff]
      %v754 = vld [vmem:[%s3 + $0x10] sm:$0xff]
      %v755 = vld [vmem:[%s3 + $0x18] sm:$0xff]
      %v756 = vld [vmem:[%s3 + $0x20] sm:$0xff]
      %v757 = vld [vmem:[%s3 + $0x28] sm:$0xff]
      %v758 = vld [vmem:[%s3 + $0x30] sm:$0xff]
      %v759 = vld [vmem:[%s3 + $0x38] sm:$0xff]
      %v760 = vld [vmem:[%s3 + $0x40] sm:$0xff]
      %v761 = vld [vmem:[%s3 + $0x48] sm:$0xff]
      %v762 = vld [vmem:[%s3 + $0x50] sm:$0xff]
      %v763 = vld [vmem:[%s3 + $0x58] sm:$0xff]
      %v764 = vld [vmem:[%s3 + $0x60] sm:$0xff]
      %v765 = vld [vmem:[%s3 + $0x68] sm:$0xff]
      %v766 = vld [vmem:[%s3 + $0x70] sm:$0xff]
      %v767 = vld [vmem:[%s4] sm:$0xff]
      %v768 = vld [vmem:[%s4 + $0x8] sm:$0x3]
      %v771 = vlaneseq
      %v772 = vshrl.u32 %v771, 7
      %v773 = vsub.s32 0, %v772
      %v774 = vrot.slane %v767, %v773
      %v775 = vlaneseq
      %v776 = vshrl.u32 %v775, 7
      %v777 = vsub.s32 1, %v776
      %v778 = vrot.slane %v767, %v777
      %v779 = vlaneseq
      %v780 = vshrl.u32 %v779, 7
      %v781 = vsub.s32 2, %v780
      %v782 = vrot.slane %v767, %v781
      %v783 = vlaneseq
      %v784 = vshrl.u32 %v783, 7
      %v785 = vsub.s32 3, %v784
      %v786 = vrot.slane %v767, %v785
      %v787 = vlaneseq
      %v788 = vshrl.u32 %v787, 7
      %v789 = vsub.s32 4, %v788
      %v790 = vrot.slane %v767, %v789
      %v791 = vlaneseq
      %v792 = vshrl.u32 %v791, 7
      %v793 = vsub.s32 5, %v792
      %v794 = vrot.slane %v767, %v793
      %v795 = vlaneseq
      %v796 = vshrl.u32 %v795, 7
      %v797 = vsub.s32 6, %v796
      %v798 = vrot.slane %v767, %v797
      %v799 = vlaneseq
      %v800 = vshrl.u32 %v799, 7
      %v801 = vsub.s32 7, %v800
      %v802 = vrot.slane %v767, %v801
      %v803 = vlaneseq
      %v804 = vshrl.u32 %v803, 7
      %v805 = vsub.s32 0, %v804
      %v806 = vrot.slane %v768, %v805
      %v807 = vlaneseq
      %v808 = vshrl.u32 %v807, 7
      %v809 = vsub.s32 1, %v808
      %v810 = vrot.slane %v768, %v809
      %v836 = vunpack.c.l.b16 %v752
      %v837 = vunpack.c.h.b16 %v752
      %v838 = vunpack.c.l.b16 %v753
      %v839 = vunpack.c.h.b16 %v753
      %v840 = vunpack.c.l.b16 %v754
      %v841 = vunpack.c.h.b16 %v754
      %v842 = vunpack.c.l.b16 %v755
      %v843 = vunpack.c.h.b16 %v755
      %v844 = vunpack.c.l.b16 %v756
      %v845 = vunpack.c.h.b16 %v756
      %v846 = vunpack.c.l.b16 %v757
      %v847 = vunpack.c.h.b16 %v757
      %v848 = vunpack.c.l.b16 %v758
      %v849 = vunpack.c.h.b16 %v758
      %v850 = vunpack.c.l.b16 %v759
      %v851 = vunpack.c.h.b16 %v759
      %v852 = vunpack.c.l.b16 %v760
      %v853 = vunpack.c.h.b16 %v760
      %v854 = vunpack.c.l.b16 %v761
      %v855 = vunpack.c.h.b16 %v761
      %v856 = vunpack.c.l.b16 %v762
      %v857 = vunpack.c.h.b16 %v762
      %v858 = vunpack.c.l.b16 %v763
      %v859 = vunpack.c.h.b16 %v763
      %v860 = vunpack.c.l.b16 %v764
      %v861 = vunpack.c.h.b16 %v764
      %v862 = vunpack.c.l.b16 %v765
      %v863 = vunpack.c.h.b16 %v765
      %v864 = vunpack.c.l.b16 %v766
      %v865 = vunpack.c.h.b16 %v766
      %v866 = vpack.c.b16 %v846, %v836
      %v867 = vpack.c.b16 %v847, %v837
      %v868 = vpack.c.b16 %v848, %v838
      %v869 = vpack.c.b16 %v849, %v839
      %v870 = vpack.c.b16 %v850, %v840
      %v871 = vpack.c.b16 %v851, %v841
      %v872 = vpack.c.b16 %v852, %v842
      %v873 = vpack.c.b16 %v853, %v843
      %v874 = vpack.c.b16 %v854, %v844
      %v875 = vpack.c.b16 %v855, %v845
      %v876 = vpack.c.b16 %v856, %v856
      %v877 = vpack.c.b16 %v857, %v857
      %v878 = vpack.c.b16 %v858, %v858
      %v879 = vpack.c.b16 %v859, %v859
      %v880 = vpack.c.b16 %v860, %v860
      %v881 = vpack.c.b16 %v861, %v861
      %v882 = vpack.c.b16 %v862, %v862
      %v883 = vpack.c.b16 %v863, %v863
      %v884 = vpack.c.b16 %v864, %v864
      %v885 = vpack.c.b16 %v865, %v865
      %vm896 = vcmask 195584
      %v898 = vsel %vm896, %v736, 0
      %v901 = vsel %vm896, %v737, 0
      %v904 = vsel %vm896, %v738, 0
      %v907 = vsel %vm896, %v739, 0
      %v910 = vsel %vm896, %v740, 0
      %v913 = vsel %vm896, %v741, 0
      %v916 = vsel %vm896, %v742, 0
      %v919 = vsel %vm896, %v743, 0
      %v922 = vsel %vm896, %v744, 0
      %v925 = vsel %vm896, %v745, 0
      %v928 = vsel %vm896, %v746, 0
      %v931 = vsel %vm896, %v747, 0
      %v934 = vsel %vm896, %v748, 0
      %v937 = vsel %vm896, %v749, 0
      %v940 = vsel %vm896, %v750, 0
      %v943 = vsel %vm896, %v751, 0
      %vm945 = vcmask 1043456
      %v947 = vsel %vm945, %v876, 0
      %v950 = vsel %vm945, %v877, 0
      %v953 = vsel %vm945, %v878, 0
      %v956 = vsel %vm945, %v879, 0
      %v959 = vsel %vm945, %v880, 0
      %v962 = vsel %vm945, %v881, 0
      %v965 = vsel %vm945, %v882, 0
      %v968 = vsel %vm945, %v883, 0
      %v971 = vsel %vm945, %v884, 0
      %v974 = vsel %vm945, %v885, 0
      %976 = vmatprep.subr.bf16.mxu0 0
      %977 = vmatpush1.bf16.msra.mxu0 0
      %978 = vmatprep.subr.bf16.mxu0 0
      %979 = vmatpush1.bf16.msra.mxu0 0
      %980 = vmatprep.subr.bf16.mxu0 0
      %981 = vmatpush1.bf16.msra.mxu0 0
      %982 = vmatprep.subr.bf16.mxu0 0
      %983 = vmatpush1.bf16.msra.mxu0 0
      %984 = vmatprep.subr.bf16.mxu0 0
      %985 = vmatpush1.bf16.msra.mxu0 0
      %986 = vmatprep.subr.bf16.mxu0 0
      %987 = vmatpush1.bf16.msra.mxu0 0
      %988 = vmatprep.subr.bf16.mxu0 %v950
      %989 = vmatpush1.bf16.msra.mxu0 %v947
      %990 = vmatprep.subr.bf16.mxu0 %v867
      %991 = vmatpush1.bf16.msra.mxu0 %v866
      %992 = vmatprep.subr.bf16.mxu0 0
      %993 = vmatpush2.bf16.msra.mxu0 0
      %994 = vmatprep.subr.bf16.mxu0 0
      %995 = vmatpush2.bf16.msra.mxu0 0
      %996 = vmatprep.subr.bf16.mxu0 0
      %997 = vmatpush2.bf16.msra.mxu0 0
      %998 = vmatprep.subr.bf16.mxu0 0
      %999 = vmatpush2.bf16.msra.mxu0 0
      %1000 = vmatprep.subr.bf16.mxu0 0
      %1001 = vmatpush2.bf16.msra.mxu0 0
      %1002 = vmatprep.subr.bf16.mxu0 0
      %1003 = vmatpush2.bf16.msra.mxu0 0
      %1004 = vmatprep.subr.bf16.mxu0 0
      %1005 = vmatpush2.bf16.msra.mxu0 0
      %1006 = vmatprep.subr.bf16.mxu0 0
      %1007 = vmatpush2.bf16.msra.mxu0 0
      %1008 = vmatprep.mubr.bf16.mxu0 0
      %1009 = vmatmul.mubr.bf16.gmra.mxu0 %v898
      %v1010 = vpop.f32.mrf.mxu0
      %v1011 = vadd.f32 %v774, %v1010
      %v1012 = vpop.f32.mrf.mxu0
      %v1013 = vadd.f32 %v778, %v1012
      %v1014 = vpop.f32.mrf.mxu0
      %v1015 = vadd.f32 %v774, %v1014
      %v1016 = vpop.f32.mrf.mxu0
      %v1017 = vadd.f32 %v778, %v1016
      %1018 = vmatprep.mubr.bf16.mxu0 0
      %1019 = vmatmul.mubr.bf16.gmra.mxu0 %v901
      %v1020 = vpop.f32.mrf.mxu0
      %v1021 = vadd.f32 %v774, %v1020
      %v1022 = vpop.f32.mrf.mxu0
      %v1023 = vadd.f32 %v778, %v1022
      %v1024 = vpop.f32.mrf.mxu0
      %v1025 = vadd.f32 %v774, %v1024
      %v1026 = vpop.f32.mrf.mxu0
      %v1027 = vadd.f32 %v778, %v1026
      %1028 = vmatprep.mubr.bf16.mxu0 0
      %1029 = vmatmul.mubr.bf16.gmra.mxu0 %v904
      %v1030 = vpop.f32.mrf.mxu0
      %v1031 = vadd.f32 %v774, %v1030
      %v1032 = vpop.f32.mrf.mxu0
      %v1033 = vadd.f32 %v778, %v1032
      %v1034 = vpop.f32.mrf.mxu0
      %v1035 = vadd.f32 %v774, %v1034
      %v1036 = vpop.f32.mrf.mxu0
      %v1037 = vadd.f32 %v778, %v1036
      %1038 = vmatprep.mubr.bf16.mxu0 0
      %1039 = vmatmul.mubr.bf16.gmra.mxu0 %v907
      %v1040 = vpop.f32.mrf.mxu0
      %v1041 = vadd.f32 %v774, %v1040
      %v1042 = vpop.f32.mrf.mxu0
      %v1043 = vadd.f32 %v778, %v1042
      %v1044 = vpop.f32.mrf.mxu0
      %v1045 = vadd.f32 %v774, %v1044
      %v1046 = vpop.f32.mrf.mxu0
      %v1047 = vadd.f32 %v778, %v1046
      %1048 = vmatprep.mubr.bf16.mxu0 0
      %1049 = vmatmul.mubr.bf16.gmra.mxu0 %v910
      %v1050 = vpop.f32.mrf.mxu0
      %v1051 = vadd.f32 %v774, %v1050
      %v1052 = vpop.f32.mrf.mxu0
      %v1053 = vadd.f32 %v778, %v1052
      %v1054 = vpop.f32.mrf.mxu0
      %v1055 = vadd.f32 %v774, %v1054
      %v1056 = vpop.f32.mrf.mxu0
      %v1057 = vadd.f32 %v778, %v1056
      %1058 = vmatprep.mubr.bf16.mxu0 0
      %1059 = vmatmul.mubr.bf16.gmra.mxu0 %v913
      %v1060 = vpop.f32.mrf.mxu0
      %v1061 = vadd.f32 %v774, %v1060
      %v1062 = vpop.f32.mrf.mxu0
      %v1063 = vadd.f32 %v778, %v1062
      %v1064 = vpop.f32.mrf.mxu0
      %v1065 = vadd.f32 %v774, %v1064
      %v1066 = vpop.f32.mrf.mxu0
      %v1067 = vadd.f32 %v778, %v1066
      %1068 = vmatprep.mubr.bf16.mxu0 0
      %1069 = vmatmul.mubr.bf16.gmra.mxu0 %v916
      %v1070 = vpop.f32.mrf.mxu0
      %v1071 = vadd.f32 %v774, %v1070
      %v1072 = vpop.f32.mrf.mxu0
      %v1073 = vadd.f32 %v778, %v1072
      %v1074 = vpop.f32.mrf.mxu0
      %v1075 = vadd.f32 %v774, %v1074
      %v1076 = vpop.f32.mrf.mxu0
      %v1077 = vadd.f32 %v778, %v1076
      %1078 = vmatprep.mubr.bf16.mxu0 0
      %1079 = vmatmul.mubr.bf16.gmra.mxu0 %v919
      %v1080 = vpop.f32.mrf.mxu0
      %v1081 = vadd.f32 %v774, %v1080
      %v1082 = vpop.f32.mrf.mxu0
      %v1083 = vadd.f32 %v778, %v1082
      %v1084 = vpop.f32.mrf.mxu0
      %v1085 = vadd.f32 %v774, %v1084
      %v1086 = vpop.f32.mrf.mxu0
      %v1087 = vadd.f32 %v778, %v1086
      %1088 = vmatprep.mubr.bf16.mxu0 0
      %1089 = vmatmul.mubr.bf16.gmra.mxu0 %v922
      %v1090 = vpop.f32.mrf.mxu0
      %v1091 = vadd.f32 %v774, %v1090
      %v1092 = vpop.f32.mrf.mxu0
      %v1093 = vadd.f32 %v778, %v1092
      %v1094 = vpop.f32.mrf.mxu0
      %v1095 = vadd.f32 %v774, %v1094
      %v1096 = vpop.f32.mrf.mxu0
      %v1097 = vadd.f32 %v778, %v1096
      %1098 = vmatprep.mubr.bf16.mxu0 0
      %1099 = vmatmul.mubr.bf16.gmra.mxu0 %v925
      %v1100 = vpop.f32.mrf.mxu0
      %v1101 = vadd.f32 %v774, %v1100
      %v1102 = vpop.f32.mrf.mxu0
      %v1103 = vadd.f32 %v778, %v1102
      %v1104 = vpop.f32.mrf.mxu0
      %v1105 = vadd.f32 %v774, %v1104
      %v1106 = vpop.f32.mrf.mxu0
      %v1107 = vadd.f32 %v778, %v1106
      %1108 = vmatprep.mubr.bf16.mxu0 0
      %1109 = vmatmul.mubr.bf16.gmra.mxu0 %v928
      %v1110 = vpop.f32.mrf.mxu0
      %v1111 = vadd.f32 %v774, %v1110
      %v1112 = vpop.f32.mrf.mxu0
      %v1113 = vadd.f32 %v778, %v1112
      %v1114 = vpop.f32.mrf.mxu0
      %v1115 = vadd.f32 %v774, %v1114
      %v1116 = vpop.f32.mrf.mxu0
      %v1117 = vadd.f32 %v778, %v1116
      %1118 = vmatprep.mubr.bf16.mxu0 0
      %1119 = vmatmul.mubr.bf16.gmra.mxu0 %v931
      %v1120 = vpop.f32.mrf.mxu0
      %v1121 = vadd.f32 %v774, %v1120
      %v1122 = vpop.f32.mrf.mxu0
      %v1123 = vadd.f32 %v778, %v1122
      %v1124 = vpop.f32.mrf.mxu0
      %v1125 = vadd.f32 %v774, %v1124
      %v1126 = vpop.f32.mrf.mxu0
      %v1127 = vadd.f32 %v778, %v1126
      %1128 = vmatprep.mubr.bf16.mxu0 0
      %1129 = vmatmul.mubr.bf16.gmra.mxu0 %v934
      %v1130 = vpop.f32.mrf.mxu0
      %v1131 = vadd.f32 %v774, %v1130
      %v1132 = vpop.f32.mrf.mxu0
      %v1133 = vadd.f32 %v778, %v1132
      %v1134 = vpop.f32.mrf.mxu0
      %v1135 = vadd.f32 %v774, %v1134
      %v1136 = vpop.f32.mrf.mxu0
      %v1137 = vadd.f32 %v778, %v1136
      %1138 = vmatprep.mubr.bf16.mxu0 0
      %1139 = vmatmul.mubr.bf16.gmra.mxu0 %v937
      %v1140 = vpop.f32.mrf.mxu0
      %v1141 = vadd.f32 %v774, %v1140
      %v1142 = vpop.f32.mrf.mxu0
      %v1143 = vadd.f32 %v778, %v1142
      %v1144 = vpop.f32.mrf.mxu0
      %v1145 = vadd.f32 %v774, %v1144
      %v1146 = vpop.f32.mrf.mxu0
      %v1147 = vadd.f32 %v778, %v1146
      %1148 = vmatprep.mubr.bf16.mxu0 0
      %1149 = vmatmul.mubr.bf16.gmra.mxu0 %v940
      %v1150 = vpop.f32.mrf.mxu0
      %v1151 = vadd.f32 %v774, %v1150
      %v1152 = vpop.f32.mrf.mxu0
      %v1153 = vadd.f32 %v778, %v1152
      %v1154 = vpop.f32.mrf.mxu0
      %v1155 = vadd.f32 %v774, %v1154
      %v1156 = vpop.f32.mrf.mxu0
      %v1157 = vadd.f32 %v778, %v1156
      %1158 = vmatprep.mubr.bf16.mxu0 0
      %1159 = vmatmul.mubr.bf16.gmra.mxu0 %v943
      %v1160 = vpop.f32.mrf.mxu0
      %v1161 = vadd.f32 %v774, %v1160
      %v1162 = vpop.f32.mrf.mxu0
      %v1163 = vadd.f32 %v778, %v1162
      %v1164 = vpop.f32.mrf.mxu0
      %v1165 = vadd.f32 %v774, %v1164
      %v1166 = vpop.f32.mrf.mxu0
      %v1167 = vadd.f32 %v778, %v1166
      %1168 = vdwg.mxu0
      %1169 = vmatprep.subr.bf16.mxu0 0
      %1170 = vmatpush1.bf16.msra.mxu0 0
      %1171 = vmatprep.subr.bf16.mxu0 0
      %1172 = vmatpush1.bf16.msra.mxu0 0
      %1173 = vmatprep.subr.bf16.mxu0 0
      %1174 = vmatpush1.bf16.msra.mxu0 0
      %1175 = vmatprep.subr.bf16.mxu0 0
      %1176 = vmatpush1.bf16.msra.mxu0 0
      %1177 = vmatprep.subr.bf16.mxu0 0
      %1178 = vmatpush1.bf16.msra.mxu0 0
      %1179 = vmatprep.subr.bf16.mxu0 0
      %1180 = vmatpush1.bf16.msra.mxu0 0
      %1181 = vmatprep.subr.bf16.mxu0 %v956
      %1182 = vmatpush1.bf16.msra.mxu0 %v953
      %1183 = vmatprep.subr.bf16.mxu0 %v869
      %1184 = vmatpush1.bf16.msra.mxu0 %v868
      %1185 = vmatprep.subr.bf16.mxu0 0
      %1186 = vmatpush2.bf16.msra.mxu0 0
      %1187 = vmatprep.subr.bf16.mxu0 0
      %1188 = vmatpush2.bf16.msra.mxu0 0
      %1189 = vmatprep.subr.bf16.mxu0 0
      %1190 = vmatpush2.bf16.msra.mxu0 0
      %1191 = vmatprep.subr.bf16.mxu0 0
      %1192 = vmatpush2.bf16.msra.mxu0 0
      %1193 = vmatprep.subr.bf16.mxu0 0
      %1194 = vmatpush2.bf16.msra.mxu0 0
      %1195 = vmatprep.subr.bf16.mxu0 0
      %1196 = vmatpush2.bf16.msra.mxu0 0
      %1197 = vmatprep.subr.bf16.mxu0 0
      %1198 = vmatpush2.bf16.msra.mxu0 0
      %1199 = vmatprep.subr.bf16.mxu0 0
      %1200 = vmatpush2.bf16.msra.mxu0 0
      %1201 = vmatprep.mubr.bf16.mxu0 0
      %1202 = vmatmul.mubr.bf16.gmra.mxu0 %v898
      %v1203 = vpop.f32.mrf.mxu0
      %v1204 = vadd.f32 %v782, %v1203
      %v1205 = vpop.f32.mrf.mxu0
      %v1206 = vadd.f32 %v786, %v1205
      %v1207 = vpop.f32.mrf.mxu0
      %v1208 = vadd.f32 %v782, %v1207
      %v1209 = vpop.f32.mrf.mxu0
      %v1210 = vadd.f32 %v786, %v1209
      %1211 = vmatprep.mubr.bf16.mxu0 0
      %1212 = vmatmul.mubr.bf16.gmra.mxu0 %v901
      %v1213 = vpop.f32.mrf.mxu0
      %v1214 = vadd.f32 %v782, %v1213
      %v1215 = vpop.f32.mrf.mxu0
      %v1216 = vadd.f32 %v786, %v1215
      %v1217 = vpop.f32.mrf.mxu0
      %v1218 = vadd.f32 %v782, %v1217
      %v1219 = vpop.f32.mrf.mxu0
      %v1220 = vadd.f32 %v786, %v1219
      %1221 = vmatprep.mubr.bf16.mxu0 0
      %1222 = vmatmul.mubr.bf16.gmra.mxu0 %v904
      %v1223 = vpop.f32.mrf.mxu0
      %v1224 = vadd.f32 %v782, %v1223
      %v1225 = vpop.f32.mrf.mxu0
      %v1226 = vadd.f32 %v786, %v1225
      %v1227 = vpop.f32.mrf.mxu0
      %v1228 = vadd.f32 %v782, %v1227
      %v1229 = vpop.f32.mrf.mxu0
      %v1230 = vadd.f32 %v786, %v1229
      %1231 = vmatprep.mubr.bf16.mxu0 0
      %1232 = vmatmul.mubr.bf16.gmra.mxu0 %v907
      %v1233 = vpop.f32.mrf.mxu0
      %v1234 = vadd.f32 %v782, %v1233
      %v1235 = vpop.f32.mrf.mxu0
      %v1236 = vadd.f32 %v786, %v1235
      %v1237 = vpop.f32.mrf.mxu0
      %v1238 = vadd.f32 %v782, %v1237
      %v1239 = vpop.f32.mrf.mxu0
      %v1240 = vadd.f32 %v786, %v1239
      %1241 = vmatprep.mubr.bf16.mxu0 0
      %1242 = vmatmul.mubr.bf16.gmra.mxu0 %v910
      %v1243 = vpop.f32.mrf.mxu0
      %v1244 = vadd.f32 %v782, %v1243
      %v1245 = vpop.f32.mrf.mxu0
      %v1246 = vadd.f32 %v786, %v1245
      %v1247 = vpop.f32.mrf.mxu0
      %v1248 = vadd.f32 %v782, %v1247
      %v1249 = vpop.f32.mrf.mxu0
      %v1250 = vadd.f32 %v786, %v1249
      %1251 = vmatprep.mubr.bf16.mxu0 0
      %1252 = vmatmul.mubr.bf16.gmra.mxu0 %v913
      %v1253 = vpop.f32.mrf.mxu0
      %v1254 = vadd.f32 %v782, %v1253
      %v1255 = vpop.f32.mrf.mxu0
      %v1256 = vadd.f32 %v786, %v1255
      %v1257 = vpop.f32.mrf.mxu0
      %v1258 = vadd.f32 %v782, %v1257
      %v1259 = vpop.f32.mrf.mxu0
      %v1260 = vadd.f32 %v786, %v1259
      %1261 = vmatprep.mubr.bf16.mxu0 0
      %1262 = vmatmul.mubr.bf16.gmra.mxu0 %v916
      %v1263 = vpop.f32.mrf.mxu0
      %v1264 = vadd.f32 %v782, %v1263
      %v1265 = vpop.f32.mrf.mxu0
      %v1266 = vadd.f32 %v786, %v1265
      %v1267 = vpop.f32.mrf.mxu0
      %v1268 = vadd.f32 %v782, %v1267
      %v1269 = vpop.f32.mrf.mxu0
      %v1270 = vadd.f32 %v786, %v1269
      %1271 = vmatprep.mubr.bf16.mxu0 0
      %1272 = vmatmul.mubr.bf16.gmra.mxu0 %v919
      %v1273 = vpop.f32.mrf.mxu0
      %v1274 = vadd.f32 %v782, %v1273
      %v1275 = vpop.f32.mrf.mxu0
      %v1276 = vadd.f32 %v786, %v1275
      %v1277 = vpop.f32.mrf.mxu0
      %v1278 = vadd.f32 %v782, %v1277
      %v1279 = vpop.f32.mrf.mxu0
      %v1280 = vadd.f32 %v786, %v1279
      %1281 = vmatprep.mubr.bf16.mxu0 0
      %1282 = vmatmul.mubr.bf16.gmra.mxu0 %v922
      %v1283 = vpop.f32.mrf.mxu0
      %v1284 = vadd.f32 %v782, %v1283
      %v1285 = vpop.f32.mrf.mxu0
      %v1286 = vadd.f32 %v786, %v1285
      %v1287 = vpop.f32.mrf.mxu0
      %v1288 = vadd.f32 %v782, %v1287
      %v1289 = vpop.f32.mrf.mxu0
      %v1290 = vadd.f32 %v786, %v1289
      %1291 = vmatprep.mubr.bf16.mxu0 0
      %1292 = vmatmul.mubr.bf16.gmra.mxu0 %v925
      %v1293 = vpop.f32.mrf.mxu0
      %v1294 = vadd.f32 %v782, %v1293
      %v1295 = vpop.f32.mrf.mxu0
      %v1296 = vadd.f32 %v786, %v1295
      %v1297 = vpop.f32.mrf.mxu0
      %v1298 = vadd.f32 %v782, %v1297
      %v1299 = vpop.f32.mrf.mxu0
      %v1300 = vadd.f32 %v786, %v1299
      %1301 = vmatprep.mubr.bf16.mxu0 0
      %1302 = vmatmul.mubr.bf16.gmra.mxu0 %v928
      %v1303 = vpop.f32.mrf.mxu0
      %v1304 = vadd.f32 %v782, %v1303
      %v1305 = vpop.f32.mrf.mxu0
      %v1306 = vadd.f32 %v786, %v1305
      %v1307 = vpop.f32.mrf.mxu0
      %v1308 = vadd.f32 %v782, %v1307
      %v1309 = vpop.f32.mrf.mxu0
      %v1310 = vadd.f32 %v786, %v1309
      %1311 = vmatprep.mubr.bf16.mxu0 0
      %1312 = vmatmul.mubr.bf16.gmra.mxu0 %v931
      %v1313 = vpop.f32.mrf.mxu0
      %v1314 = vadd.f32 %v782, %v1313
      %v1315 = vpop.f32.mrf.mxu0
      %v1316 = vadd.f32 %v786, %v1315
      %v1317 = vpop.f32.mrf.mxu0
      %v1318 = vadd.f32 %v782, %v1317
      %v1319 = vpop.f32.mrf.mxu0
      %v1320 = vadd.f32 %v786, %v1319
      %1321 = vmatprep.mubr.bf16.mxu0 0
      %1322 = vmatmul.mubr.bf16.gmra.mxu0 %v934
      %v1323 = vpop.f32.mrf.mxu0
      %v1324 = vadd.f32 %v782, %v1323
      %v1325 = vpop.f32.mrf.mxu0
      %v1326 = vadd.f32 %v786, %v1325
      %v1327 = vpop.f32.mrf.mxu0
      %v1328 = vadd.f32 %v782, %v1327
      %v1329 = vpop.f32.mrf.mxu0
      %v1330 = vadd.f32 %v786, %v1329
      %1331 = vmatprep.mubr.bf16.mxu0 0
      %1332 = vmatmul.mubr.bf16.gmra.mxu0 %v937
      %v1333 = vpop.f32.mrf.mxu0
      %v1334 = vadd.f32 %v782, %v1333
      %v1335 = vpop.f32.mrf.mxu0
      %v1336 = vadd.f32 %v786, %v1335
      %v1337 = vpop.f32.mrf.mxu0
      %v1338 = vadd.f32 %v782, %v1337
      %v1339 = vpop.f32.mrf.mxu0
      %v1340 = vadd.f32 %v786, %v1339
      %1341 = vmatprep.mubr.bf16.mxu0 0
      %1342 = vmatmul.mubr.bf16.gmra.mxu0 %v940
      %v1343 = vpop.f32.mrf.mxu0
      %v1344 = vadd.f32 %v782, %v1343
      %v1345 = vpop.f32.mrf.mxu0
      %v1346 = vadd.f32 %v786, %v1345
      %v1347 = vpop.f32.mrf.mxu0
      %v1348 = vadd.f32 %v782, %v1347
      %v1349 = vpop.f32.mrf.mxu0
      %v1350 = vadd.f32 %v786, %v1349
      %1351 = vmatprep.mubr.bf16.mxu0 0
      %1352 = vmatmul.mubr.bf16.gmra.mxu0 %v943
      %v1353 = vpop.f32.mrf.mxu0
      %v1354 = vadd.f32 %v782, %v1353
      %v1355 = vpop.f32.mrf.mxu0
      %v1356 = vadd.f32 %v786, %v1355
      %v1357 = vpop.f32.mrf.mxu0
      %v1358 = vadd.f32 %v782, %v1357
      %v1359 = vpop.f32.mrf.mxu0
      %v1360 = vadd.f32 %v786, %v1359
      %1361 = vdwg.mxu0
      %1362 = vmatprep.subr.bf16.mxu0 0
      %1363 = vmatpush1.bf16.msra.mxu0 0
      %1364 = vmatprep.subr.bf16.mxu0 0
      %1365 = vmatpush1.bf16.msra.mxu0 0
      %1366 = vmatprep.subr.bf16.mxu0 0
      %1367 = vmatpush1.bf16.msra.mxu0 0
      %1368 = vmatprep.subr.bf16.mxu0 0
      %1369 = vmatpush1.bf16.msra.mxu0 0
      %1370 = vmatprep.subr.bf16.mxu0 0
      %1371 = vmatpush1.bf16.msra.mxu0 0
      %1372 = vmatprep.subr.bf16.mxu0 0
      %1373 = vmatpush1.bf16.msra.mxu0 0
      %1374 = vmatprep.subr.bf16.mxu0 %v962
      %1375 = vmatpush1.bf16.msra.mxu0 %v959
      %1376 = vmatprep.subr.bf16.mxu0 %v871
      %1377 = vmatpush1.bf16.msra.mxu0 %v870
      %1378 = vmatprep.subr.bf16.mxu0 0
      %1379 = vmatpush2.bf16.msra.mxu0 0
      %1380 = vmatprep.subr.bf16.mxu0 0
      %1381 = vmatpush2.bf16.msra.mxu0 0
      %1382 = vmatprep.subr.bf16.mxu0 0
      %1383 = vmatpush2.bf16.msra.mxu0 0
      %1384 = vmatprep.subr.bf16.mxu0 0
      %1385 = vmatpush2.bf16.msra.mxu0 0
      %1386 = vmatprep.subr.bf16.mxu0 0
      %1387 = vmatpush2.bf16.msra.mxu0 0
      %1388 = vmatprep.subr.bf16.mxu0 0
      %1389 = vmatpush2.bf16.msra.mxu0 0
      %1390 = vmatprep.subr.bf16.mxu0 0
      %1391 = vmatpush2.bf16.msra.mxu0 0
      %1392 = vmatprep.subr.bf16.mxu0 0
      %1393 = vmatpush2.bf16.msra.mxu0 0
      %1394 = vmatprep.mubr.bf16.mxu0 0
      %1395 = vmatmul.mubr.bf16.gmra.mxu0 %v898
      %v1396 = vpop.f32.mrf.mxu0
      %v1397 = vadd.f32 %v790, %v1396
      %v1398 = vpop.f32.mrf.mxu0
      %v1399 = vadd.f32 %v794, %v1398
      %v1400 = vpop.f32.mrf.mxu0
      %v1401 = vadd.f32 %v790, %v1400
      %v1402 = vpop.f32.mrf.mxu0
      %v1403 = vadd.f32 %v794, %v1402
      %1404 = vmatprep.mubr.bf16.mxu0 0
      %1405 = vmatmul.mubr.bf16.gmra.mxu0 %v901
      %v1406 = vpop.f32.mrf.mxu0
      %v1407 = vadd.f32 %v790, %v1406
      %v1408 = vpop.f32.mrf.mxu0
      %v1409 = vadd.f32 %v794, %v1408
      %v1410 = vpop.f32.mrf.mxu0
      %v1411 = vadd.f32 %v790, %v1410
      %v1412 = vpop.f32.mrf.mxu0
      %v1413 = vadd.f32 %v794, %v1412
      %1414 = vmatprep.mubr.bf16.mxu0 0
      %1415 = vmatmul.mubr.bf16.gmra.mxu0 %v904
      %v1416 = vpop.f32.mrf.mxu0
      %v1417 = vadd.f32 %v790, %v1416
      %v1418 = vpop.f32.mrf.mxu0
      %v1419 = vadd.f32 %v794, %v1418
      %v1420 = vpop.f32.mrf.mxu0
      %v1421 = vadd.f32 %v790, %v1420
      %v1422 = vpop.f32.mrf.mxu0
      %v1423 = vadd.f32 %v794, %v1422
      %1424 = vmatprep.mubr.bf16.mxu0 0
      %1425 = vmatmul.mubr.bf16.gmra.mxu0 %v907
      %v1426 = vpop.f32.mrf.mxu0
      %v1427 = vadd.f32 %v790, %v1426
      %v1428 = vpop.f32.mrf.mxu0
      %v1429 = vadd.f32 %v794, %v1428
      %v1430 = vpop.f32.mrf.mxu0
      %v1431 = vadd.f32 %v790, %v1430
      %v1432 = vpop.f32.mrf.mxu0
      %v1433 = vadd.f32 %v794, %v1432
      %1434 = vmatprep.mubr.bf16.mxu0 0
      %1435 = vmatmul.mubr.bf16.gmra.mxu0 %v910
      %v1436 = vpop.f32.mrf.mxu0
      %v1437 = vadd.f32 %v790, %v1436
      %v1438 = vpop.f32.mrf.mxu0
      %v1439 = vadd.f32 %v794, %v1438
      %v1440 = vpop.f32.mrf.mxu0
      %v1441 = vadd.f32 %v790, %v1440
      %v1442 = vpop.f32.mrf.mxu0
      %v1443 = vadd.f32 %v794, %v1442
      %1444 = vmatprep.mubr.bf16.mxu0 0
      %1445 = vmatmul.mubr.bf16.gmra.mxu0 %v913
      %v1446 = vpop.f32.mrf.mxu0
      %v1447 = vadd.f32 %v790, %v1446
      %v1448 = vpop.f32.mrf.mxu0
      %v1449 = vadd.f32 %v794, %v1448
      %v1450 = vpop.f32.mrf.mxu0
      %v1451 = vadd.f32 %v790, %v1450
      %v1452 = vpop.f32.mrf.mxu0
      %v1453 = vadd.f32 %v794, %v1452
      %1454 = vmatprep.mubr.bf16.mxu0 0
      %1455 = vmatmul.mubr.bf16.gmra.mxu0 %v916
      %v1456 = vpop.f32.mrf.mxu0
      %v1457 = vadd.f32 %v790, %v1456
      %v1458 = vpop.f32.mrf.mxu0
      %v1459 = vadd.f32 %v794, %v1458
      %v1460 = vpop.f32.mrf.mxu0
      %v1461 = vadd.f32 %v790, %v1460
      %v1462 = vpop.f32.mrf.mxu0
      %v1463 = vadd.f32 %v794, %v1462
      %1464 = vmatprep.mubr.bf16.mxu0 0
      %1465 = vmatmul.mubr.bf16.gmra.mxu0 %v919
      %v1466 = vpop.f32.mrf.mxu0
      %v1467 = vadd.f32 %v790, %v1466
      %v1468 = vpop.f32.mrf.mxu0
      %v1469 = vadd.f32 %v794, %v1468
      %v1470 = vpop.f32.mrf.mxu0
      %v1471 = vadd.f32 %v790, %v1470
      %v1472 = vpop.f32.mrf.mxu0
      %v1473 = vadd.f32 %v794, %v1472
      %1474 = vmatprep.mubr.bf16.mxu0 0
      %1475 = vmatmul.mubr.bf16.gmra.mxu0 %v922
      %v1476 = vpop.f32.mrf.mxu0
      %v1477 = vadd.f32 %v790, %v1476
      %v1478 = vpop.f32.mrf.mxu0
      %v1479 = vadd.f32 %v794, %v1478
      %v1480 = vpop.f32.mrf.mxu0
      %v1481 = vadd.f32 %v790, %v1480
      %v1482 = vpop.f32.mrf.mxu0
      %v1483 = vadd.f32 %v794, %v1482
      %1484 = vmatprep.mubr.bf16.mxu0 0
      %1485 = vmatmul.mubr.bf16.gmra.mxu0 %v925
      %v1486 = vpop.f32.mrf.mxu0
      %v1487 = vadd.f32 %v790, %v1486
      %v1488 = vpop.f32.mrf.mxu0
      %v1489 = vadd.f32 %v794, %v1488
      %v1490 = vpop.f32.mrf.mxu0
      %v1491 = vadd.f32 %v790, %v1490
      %v1492 = vpop.f32.mrf.mxu0
      %v1493 = vadd.f32 %v794, %v1492
      %1494 = vmatprep.mubr.bf16.mxu0 0
      %1495 = vmatmul.mubr.bf16.gmra.mxu0 %v928
      %v1496 = vpop.f32.mrf.mxu0
      %v1497 = vadd.f32 %v790, %v1496
      %v1498 = vpop.f32.mrf.mxu0
      %v1499 = vadd.f32 %v794, %v1498
      %v1500 = vpop.f32.mrf.mxu0
      %v1501 = vadd.f32 %v790, %v1500
      %v1502 = vpop.f32.mrf.mxu0
      %v1503 = vadd.f32 %v794, %v1502
      %1504 = vmatprep.mubr.bf16.mxu0 0
      %1505 = vmatmul.mubr.bf16.gmra.mxu0 %v931
      %v1506 = vpop.f32.mrf.mxu0
      %v1507 = vadd.f32 %v790, %v1506
      %v1508 = vpop.f32.mrf.mxu0
      %v1509 = vadd.f32 %v794, %v1508
      %v1510 = vpop.f32.mrf.mxu0
      %v1511 = vadd.f32 %v790, %v1510
      %v1512 = vpop.f32.mrf.mxu0
      %v1513 = vadd.f32 %v794, %v1512
      %1514 = vmatprep.mubr.bf16.mxu0 0
      %1515 = vmatmul.mubr.bf16.gmra.mxu0 %v934
      %v1516 = vpop.f32.mrf.mxu0
      %v1517 = vadd.f32 %v790, %v1516
      %v1518 = vpop.f32.mrf.mxu0
      %v1519 = vadd.f32 %v794, %v1518
      %v1520 = vpop.f32.mrf.mxu0
      %v1521 = vadd.f32 %v790, %v1520
      %v1522 = vpop.f32.mrf.mxu0
      %v1523 = vadd.f32 %v794, %v1522
      %1524 = vmatprep.mubr.bf16.mxu0 0
      %1525 = vmatmul.mubr.bf16.gmra.mxu0 %v937
      %v1526 = vpop.f32.mrf.mxu0
      %v1527 = vadd.f32 %v790, %v1526
      %v1528 = vpop.f32.mrf.mxu0
      %v1529 = vadd.f32 %v794, %v1528
      %v1530 = vpop.f32.mrf.mxu0
      %v1531 = vadd.f32 %v790, %v1530
      %v1532 = vpop.f32.mrf.mxu0
      %v1533 = vadd.f32 %v794, %v1532
      %1534 = vmatprep.mubr.bf16.mxu0 0
      %1535 = vmatmul.mubr.bf16.gmra.mxu0 %v940
      %v1536 = vpop.f32.mrf.mxu0
      %v1537 = vadd.f32 %v790, %v1536
      %v1538 = vpop.f32.mrf.mxu0
      %v1539 = vadd.f32 %v794, %v1538
      %v1540 = vpop.f32.mrf.mxu0
      %v1541 = vadd.f32 %v790, %v1540
      %v1542 = vpop.f32.mrf.mxu0
      %v1543 = vadd.f32 %v794, %v1542
      %1544 = vmatprep.mubr.bf16.mxu0 0
      %1545 = vmatmul.mubr.bf16.gmra.mxu0 %v943
      %v1546 = vpop.f32.mrf.mxu0
      %v1547 = vadd.f32 %v790, %v1546
      %v1548 = vpop.f32.mrf.mxu0
      %v1549 = vadd.f32 %v794, %v1548
      %v1550 = vpop.f32.mrf.mxu0
      %v1551 = vadd.f32 %v790, %v1550
      %v1552 = vpop.f32.mrf.mxu0
      %v1553 = vadd.f32 %v794, %v1552
      %1554 = vdwg.mxu0
      %1555 = vmatprep.subr.bf16.mxu0 0
      %1556 = vmatpush1.bf16.msra.mxu0 0
      %1557 = vmatprep.subr.bf16.mxu0 0
      %1558 = vmatpush1.bf16.msra.mxu0 0
      %1559 = vmatprep.subr.bf16.mxu0 0
      %1560 = vmatpush1.bf16.msra.mxu0 0
      %1561 = vmatprep.subr.bf16.mxu0 0
      %1562 = vmatpush1.bf16.msra.mxu0 0
      %1563 = vmatprep.subr.bf16.mxu0 0
      %1564 = vmatpush1.bf16.msra.mxu0 0
      %1565 = vmatprep.subr.bf16.mxu0 0
      %1566 = vmatpush1.bf16.msra.mxu0 0
      %1567 = vmatprep.subr.bf16.mxu0 %v968
      %1568 = vmatpush1.bf16.msra.mxu0 %v965
      %1569 = vmatprep.subr.bf16.mxu0 %v873
      %1570 = vmatpush1.bf16.msra.mxu0 %v872
      %1571 = vmatprep.subr.bf16.mxu0 0
      %1572 = vmatpush2.bf16.msra.mxu0 0
      %1573 = vmatprep.subr.bf16.mxu0 0
      %1574 = vmatpush2.bf16.msra.mxu0 0
      %1575 = vmatprep.subr.bf16.mxu0 0
      %1576 = vmatpush2.bf16.msra.mxu0 0
      %1577 = vmatprep.subr.bf16.mxu0 0
      %1578 = vmatpush2.bf16.msra.mxu0 0
      %1579 = vmatprep.subr.bf16.mxu0 0
      %1580 = vmatpush2.bf16.msra.mxu0 0
      %1581 = vmatprep.subr.bf16.mxu0 0
      %1582 = vmatpush2.bf16.msra.mxu0 0
      %1583 = vmatprep.subr.bf16.mxu0 0
      %1584 = vmatpush2.bf16.msra.mxu0 0
      %1585 = vmatprep.subr.bf16.mxu0 0
      %1586 = vmatpush2.bf16.msra.mxu0 0
      %1587 = vmatprep.mubr.bf16.mxu0 0
      %1588 = vmatmul.mubr.bf16.gmra.mxu0 %v898
      %v1589 = vpop.f32.mrf.mxu0
      %v1590 = vadd.f32 %v798, %v1589
      %v1591 = vpop.f32.mrf.mxu0
      %v1592 = vadd.f32 %v802, %v1591
      %v1593 = vpop.f32.mrf.mxu0
      %v1594 = vadd.f32 %v798, %v1593
      %v1595 = vpop.f32.mrf.mxu0
      %v1596 = vadd.f32 %v802, %v1595
      %1597 = vmatprep.mubr.bf16.mxu0 0
      %1598 = vmatmul.mubr.bf16.gmra.mxu0 %v901
      %v1599 = vpop.f32.mrf.mxu0
      %v1600 = vadd.f32 %v798, %v1599
      %v1601 = vpop.f32.mrf.mxu0
      %v1602 = vadd.f32 %v802, %v1601
      %v1603 = vpop.f32.mrf.mxu0
      %v1604 = vadd.f32 %v798, %v1603
      %v1605 = vpop.f32.mrf.mxu0
      %v1606 = vadd.f32 %v802, %v1605
      %1607 = vmatprep.mubr.bf16.mxu0 0
      %1608 = vmatmul.mubr.bf16.gmra.mxu0 %v904
      %v1609 = vpop.f32.mrf.mxu0
      %v1610 = vadd.f32 %v798, %v1609
      %v1611 = vpop.f32.mrf.mxu0
      %v1612 = vadd.f32 %v802, %v1611
      %v1613 = vpop.f32.mrf.mxu0
      %v1614 = vadd.f32 %v798, %v1613
      %v1615 = vpop.f32.mrf.mxu0
      %v1616 = vadd.f32 %v802, %v1615
      %1617 = vmatprep.mubr.bf16.mxu0 0
      %1618 = vmatmul.mubr.bf16.gmra.mxu0 %v907
      %v1619 = vpop.f32.mrf.mxu0
      %v1620 = vadd.f32 %v798, %v1619
      %v1621 = vpop.f32.mrf.mxu0
      %v1622 = vadd.f32 %v802, %v1621
      %v1623 = vpop.f32.mrf.mxu0
      %v1624 = vadd.f32 %v798, %v1623
      %v1625 = vpop.f32.mrf.mxu0
      %v1626 = vadd.f32 %v802, %v1625
      %1627 = vmatprep.mubr.bf16.mxu0 0
      %1628 = vmatmul.mubr.bf16.gmra.mxu0 %v910
      %v1629 = vpop.f32.mrf.mxu0
      %v1630 = vadd.f32 %v798, %v1629
      %v1631 = vpop.f32.mrf.mxu0
      %v1632 = vadd.f32 %v802, %v1631
      %v1633 = vpop.f32.mrf.mxu0
      %v1634 = vadd.f32 %v798, %v1633
      %v1635 = vpop.f32.mrf.mxu0
      %v1636 = vadd.f32 %v802, %v1635
      %1637 = vmatprep.mubr.bf16.mxu0 0
      %1638 = vmatmul.mubr.bf16.gmra.mxu0 %v913
      %v1639 = vpop.f32.mrf.mxu0
      %v1640 = vadd.f32 %v798, %v1639
      %v1641 = vpop.f32.mrf.mxu0
      %v1642 = vadd.f32 %v802, %v1641
      %v1643 = vpop.f32.mrf.mxu0
      %v1644 = vadd.f32 %v798, %v1643
      %v1645 = vpop.f32.mrf.mxu0
      %v1646 = vadd.f32 %v802, %v1645
      %1647 = vmatprep.mubr.bf16.mxu0 0
      %1648 = vmatmul.mubr.bf16.gmra.mxu0 %v916
      %v1649 = vpop.f32.mrf.mxu0
      %v1650 = vadd.f32 %v798, %v1649
      %v1651 = vpop.f32.mrf.mxu0
      %v1652 = vadd.f32 %v802, %v1651
      %v1653 = vpop.f32.mrf.mxu0
      %v1654 = vadd.f32 %v798, %v1653
      %v1655 = vpop.f32.mrf.mxu0
      %v1656 = vadd.f32 %v802, %v1655
      %1657 = vmatprep.mubr.bf16.mxu0 0
      %1658 = vmatmul.mubr.bf16.gmra.mxu0 %v919
      %v1659 = vpop.f32.mrf.mxu0
      %v1660 = vadd.f32 %v798, %v1659
      %v1661 = vpop.f32.mrf.mxu0
      %v1662 = vadd.f32 %v802, %v1661
      %v1663 = vpop.f32.mrf.mxu0
      %v1664 = vadd.f32 %v798, %v1663
      %v1665 = vpop.f32.mrf.mxu0
      %v1666 = vadd.f32 %v802, %v1665
      %1667 = vmatprep.mubr.bf16.mxu0 0
      %1668 = vmatmul.mubr.bf16.gmra.mxu0 %v922
      %v1669 = vpop.f32.mrf.mxu0
      %v1670 = vadd.f32 %v798, %v1669
      %v1671 = vpop.f32.mrf.mxu0
      %v1672 = vadd.f32 %v802, %v1671
      %v1673 = vpop.f32.mrf.mxu0
      %v1674 = vadd.f32 %v798, %v1673
      %v1675 = vpop.f32.mrf.mxu0
      %v1676 = vadd.f32 %v802, %v1675
      %1677 = vmatprep.mubr.bf16.mxu0 0
      %1678 = vmatmul.mubr.bf16.gmra.mxu0 %v925
      %v1679 = vpop.f32.mrf.mxu0
      %v1680 = vadd.f32 %v798, %v1679
      %v1681 = vpop.f32.mrf.mxu0
      %v1682 = vadd.f32 %v802, %v1681
      %v1683 = vpop.f32.mrf.mxu0
      %v1684 = vadd.f32 %v798, %v1683
      %v1685 = vpop.f32.mrf.mxu0
      %v1686 = vadd.f32 %v802, %v1685
      %1687 = vmatprep.mubr.bf16.mxu0 0
      %1688 = vmatmul.mubr.bf16.gmra.mxu0 %v928
      %v1689 = vpop.f32.mrf.mxu0
      %v1690 = vadd.f32 %v798, %v1689
      %v1691 = vpop.f32.mrf.mxu0
      %v1692 = vadd.f32 %v802, %v1691
      %v1693 = vpop.f32.mrf.mxu0
      %v1694 = vadd.f32 %v798, %v1693
      %v1695 = vpop.f32.mrf.mxu0
      %v1696 = vadd.f32 %v802, %v1695
      %1697 = vmatprep.mubr.bf16.mxu0 0
      %1698 = vmatmul.mubr.bf16.gmra.mxu0 %v931
      %v1699 = vpop.f32.mrf.mxu0
      %v1700 = vadd.f32 %v798, %v1699
      %v1701 = vpop.f32.mrf.mxu0
      %v1702 = vadd.f32 %v802, %v1701
      %v1703 = vpop.f32.mrf.mxu0
      %v1704 = vadd.f32 %v798, %v1703
      %v1705 = vpop.f32.mrf.mxu0
      %v1706 = vadd.f32 %v802, %v1705
      %1707 = vmatprep.mubr.bf16.mxu0 0
      %1708 = vmatmul.mubr.bf16.gmra.mxu0 %v934
      %v1709 = vpop.f32.mrf.mxu0
      %v1710 = vadd.f32 %v798, %v1709
      %v1711 = vpop.f32.mrf.mxu0
      %v1712 = vadd.f32 %v802, %v1711
      %v1713 = vpop.f32.mrf.mxu0
      %v1714 = vadd.f32 %v798, %v1713
      %v1715 = vpop.f32.mrf.mxu0
      %v1716 = vadd.f32 %v802, %v1715
      %1717 = vmatprep.mubr.bf16.mxu0 0
      %1718 = vmatmul.mubr.bf16.gmra.mxu0 %v937
      %v1719 = vpop.f32.mrf.mxu0
      %v1720 = vadd.f32 %v798, %v1719
      %v1721 = vpop.f32.mrf.mxu0
      %v1722 = vadd.f32 %v802, %v1721
      %v1723 = vpop.f32.mrf.mxu0
      %v1724 = vadd.f32 %v798, %v1723
      %v1725 = vpop.f32.mrf.mxu0
      %v1726 = vadd.f32 %v802, %v1725
      %1727 = vmatprep.mubr.bf16.mxu0 0
      %1728 = vmatmul.mubr.bf16.gmra.mxu0 %v940
      %v1729 = vpop.f32.mrf.mxu0
      %v1730 = vadd.f32 %v798, %v1729
      %v1731 = vpop.f32.mrf.mxu0
      %v1732 = vadd.f32 %v802, %v1731
      %v1733 = vpop.f32.mrf.mxu0
      %v1734 = vadd.f32 %v798, %v1733
      %v1735 = vpop.f32.mrf.mxu0
      %v1736 = vadd.f32 %v802, %v1735
      %1737 = vmatprep.mubr.bf16.mxu0 0
      %1738 = vmatmul.mubr.bf16.gmra.mxu0 %v943
      %v1739 = vpop.f32.mrf.mxu0
      %v1740 = vadd.f32 %v798, %v1739
      %v1741 = vpop.f32.mrf.mxu0
      %v1742 = vadd.f32 %v802, %v1741
      %v1743 = vpop.f32.mrf.mxu0
      %v1744 = vadd.f32 %v798, %v1743
      %v1745 = vpop.f32.mrf.mxu0
      %v1746 = vadd.f32 %v802, %v1745
      %1747 = vdwg.mxu0
      %1748 = vmatprep.subr.bf16.mxu0 0
      %1749 = vmatpush1.bf16.msra.mxu0 0
      %1750 = vmatprep.subr.bf16.mxu0 0
      %1751 = vmatpush1.bf16.msra.mxu0 0
      %1752 = vmatprep.subr.bf16.mxu0 0
      %1753 = vmatpush1.bf16.msra.mxu0 0
      %1754 = vmatprep.subr.bf16.mxu0 0
      %1755 = vmatpush1.bf16.msra.mxu0 0
      %1756 = vmatprep.subr.bf16.mxu0 0
      %1757 = vmatpush1.bf16.msra.mxu0 0
      %1758 = vmatprep.subr.bf16.mxu0 0
      %1759 = vmatpush1.bf16.msra.mxu0 0
      %1760 = vmatprep.subr.bf16.mxu0 %v974
      %1761 = vmatpush1.bf16.msra.mxu0 %v971
      %1762 = vmatprep.subr.bf16.mxu0 %v875
      %1763 = vmatpush1.bf16.msra.mxu0 %v874
      %1764 = vmatprep.subr.bf16.mxu0 0
      %1765 = vmatpush2.bf16.msra.mxu0 0
      %1766 = vmatprep.subr.bf16.mxu0 0
      %1767 = vmatpush2.bf16.msra.mxu0 0
      %1768 = vmatprep.subr.bf16.mxu0 0
      %1769 = vmatpush2.bf16.msra.mxu0 0
      %1770 = vmatprep.subr.bf16.mxu0 0
      %1771 = vmatpush2.bf16.msra.mxu0 0
      %1772 = vmatprep.subr.bf16.mxu0 0
      %1773 = vmatpush2.bf16.msra.mxu0 0
      %1774 = vmatprep.subr.bf16.mxu0 0
      %1775 = vmatpush2.bf16.msra.mxu0 0
      %1776 = vmatprep.subr.bf16.mxu0 0
      %1777 = vmatpush2.bf16.msra.mxu0 0
      %1778 = vmatprep.subr.bf16.mxu0 0
      %1779 = vmatpush2.bf16.msra.mxu0 0
      %1780 = vmatprep.mubr.bf16.mxu0 0
      %1781 = vmatmul.mubr.bf16.gmra.mxu0 %v898
      %v1782 = vpop.f32.mrf.mxu0
      %v1783 = vadd.f32 %v806, %v1782
      %v1784 = vpop.f32.mrf.mxu0
      %v1785 = vadd.f32 %v810, %v1784
      %v1786 = vpop.f32.mrf.mxu0
      %v1787 = vadd.f32 %v806, %v1786
      %v1788 = vpop.f32.mrf.mxu0
      %v1789 = vadd.f32 %v810, %v1788
      %1790 = vmatprep.mubr.bf16.mxu0 0
      %1791 = vmatmul.mubr.bf16.gmra.mxu0 %v901
      %v1792 = vpop.f32.mrf.mxu0
      %v1793 = vadd.f32 %v806, %v1792
      %v1794 = vpop.f32.mrf.mxu0
      %v1795 = vadd.f32 %v810, %v1794
      %v1796 = vpop.f32.mrf.mxu0
      %v1797 = vadd.f32 %v806, %v1796
      %v1798 = vpop.f32.mrf.mxu0
      %v1799 = vadd.f32 %v810, %v1798
      %1800 = vmatprep.mubr.bf16.mxu0 0
      %1801 = vmatmul.mubr.bf16.gmra.mxu0 %v904
      %v1802 = vpop.f32.mrf.mxu0
      %v1803 = vadd.f32 %v806, %v1802
      %v1804 = vpop.f32.mrf.mxu0
      %v1805 = vadd.f32 %v810, %v1804
      %v1806 = vpop.f32.mrf.mxu0
      %v1807 = vadd.f32 %v806, %v1806
      %v1808 = vpop.f32.mrf.mxu0
      %v1809 = vadd.f32 %v810, %v1808
      %1810 = vmatprep.mubr.bf16.mxu0 0
      %1811 = vmatmul.mubr.bf16.gmra.mxu0 %v907
      %v1812 = vpop.f32.mrf.mxu0
      %v1813 = vadd.f32 %v806, %v1812
      %v1814 = vpop.f32.mrf.mxu0
      %v1815 = vadd.f32 %v810, %v1814
      %v1816 = vpop.f32.mrf.mxu0
      %v1817 = vadd.f32 %v806, %v1816
      %v1818 = vpop.f32.mrf.mxu0
      %v1819 = vadd.f32 %v810, %v1818
      %1820 = vmatprep.mubr.bf16.mxu0 0
      %1821 = vmatmul.mubr.bf16.gmra.mxu0 %v910
      %v1822 = vpop.f32.mrf.mxu0
      %v1823 = vadd.f32 %v806, %v1822
      %v1824 = vpop.f32.mrf.mxu0
      %v1825 = vadd.f32 %v810, %v1824
      %v1826 = vpop.f32.mrf.mxu0
      %v1827 = vadd.f32 %v806, %v1826
      %v1828 = vpop.f32.mrf.mxu0
      %v1829 = vadd.f32 %v810, %v1828
      %1830 = vmatprep.mubr.bf16.mxu0 0
      %1831 = vmatmul.mubr.bf16.gmra.mxu0 %v913
      %v1832 = vpop.f32.mrf.mxu0
      %v1833 = vadd.f32 %v806, %v1832
      %v1834 = vpop.f32.mrf.mxu0
      %v1835 = vadd.f32 %v810, %v1834
      %v1836 = vpop.f32.mrf.mxu0
      %v1837 = vadd.f32 %v806, %v1836
      %v1838 = vpop.f32.mrf.mxu0
      %v1839 = vadd.f32 %v810, %v1838
      %1840 = vmatprep.mubr.bf16.mxu0 0
      %1841 = vmatmul.mubr.bf16.gmra.mxu0 %v916
      %v1842 = vpop.f32.mrf.mxu0
      %v1843 = vadd.f32 %v806, %v1842
      %v1844 = vpop.f32.mrf.mxu0
      %v1845 = vadd.f32 %v810, %v1844
      %v1846 = vpop.f32.mrf.mxu0
      %v1847 = vadd.f32 %v806, %v1846
      %v1848 = vpop.f32.mrf.mxu0
      %v1849 = vadd.f32 %v810, %v1848
      %1850 = vmatprep.mubr.bf16.mxu0 0
      %1851 = vmatmul.mubr.bf16.gmra.mxu0 %v919
      %v1852 = vpop.f32.mrf.mxu0
      %v1853 = vadd.f32 %v806, %v1852
      %v1854 = vpop.f32.mrf.mxu0
      %v1855 = vadd.f32 %v810, %v1854
      %v1856 = vpop.f32.mrf.mxu0
      %v1857 = vadd.f32 %v806, %v1856
      %v1858 = vpop.f32.mrf.mxu0
      %v1859 = vadd.f32 %v810, %v1858
      %1860 = vmatprep.mubr.bf16.mxu0 0
      %1861 = vmatmul.mubr.bf16.gmra.mxu0 %v922
      %v1862 = vpop.f32.mrf.mxu0
      %v1863 = vadd.f32 %v806, %v1862
      %v1864 = vpop.f32.mrf.mxu0
      %v1865 = vadd.f32 %v810, %v1864
      %v1866 = vpop.f32.mrf.mxu0
      %v1867 = vadd.f32 %v806, %v1866
      %v1868 = vpop.f32.mrf.mxu0
      %v1869 = vadd.f32 %v810, %v1868
      %1870 = vmatprep.mubr.bf16.mxu0 0
      %1871 = vmatmul.mubr.bf16.gmra.mxu0 %v925
      %v1872 = vpop.f32.mrf.mxu0
      %v1873 = vadd.f32 %v806, %v1872
      %v1874 = vpop.f32.mrf.mxu0
      %v1875 = vadd.f32 %v810, %v1874
      %v1876 = vpop.f32.mrf.mxu0
      %v1877 = vadd.f32 %v806, %v1876
      %v1878 = vpop.f32.mrf.mxu0
      %v1879 = vadd.f32 %v810, %v1878
      %1880 = vmatprep.mubr.bf16.mxu0 0
      %1881 = vmatmul.mubr.bf16.gmra.mxu0 %v928
      %v1882 = vpop.f32.mrf.mxu0
      %v1883 = vadd.f32 %v806, %v1882
      %v1884 = vpop.f32.mrf.mxu0
      %v1885 = vadd.f32 %v810, %v1884
      %v1886 = vpop.f32.mrf.mxu0
      %v1887 = vadd.f32 %v806, %v1886
      %v1888 = vpop.f32.mrf.mxu0
      %v1889 = vadd.f32 %v810, %v1888
      %1890 = vmatprep.mubr.bf16.mxu0 0
      %1891 = vmatmul.mubr.bf16.gmra.mxu0 %v931
      %v1892 = vpop.f32.mrf.mxu0
      %v1893 = vadd.f32 %v806, %v1892
      %v1894 = vpop.f32.mrf.mxu0
      %v1895 = vadd.f32 %v810, %v1894
      %v1896 = vpop.f32.mrf.mxu0
      %v1897 = vadd.f32 %v806, %v1896
      %v1898 = vpop.f32.mrf.mxu0
      %v1899 = vadd.f32 %v810, %v1898
      %1900 = vmatprep.mubr.bf16.mxu0 0
      %1901 = vmatmul.mubr.bf16.gmra.mxu0 %v934
      %v1902 = vpop.f32.mrf.mxu0
      %v1903 = vadd.f32 %v806, %v1902
      %v1904 = vpop.f32.mrf.mxu0
      %v1905 = vadd.f32 %v810, %v1904
      %v1906 = vpop.f32.mrf.mxu0
      %v1907 = vadd.f32 %v806, %v1906
      %v1908 = vpop.f32.mrf.mxu0
      %v1909 = vadd.f32 %v810, %v1908
      %1910 = vmatprep.mubr.bf16.mxu0 0
      %1911 = vmatmul.mubr.bf16.gmra.mxu0 %v937
      %v1912 = vpop.f32.mrf.mxu0
      %v1913 = vadd.f32 %v806, %v1912
      %v1914 = vpop.f32.mrf.mxu0
      %v1915 = vadd.f32 %v810, %v1914
      %v1916 = vpop.f32.mrf.mxu0
      %v1917 = vadd.f32 %v806, %v1916
      %v1918 = vpop.f32.mrf.mxu0
      %v1919 = vadd.f32 %v810, %v1918
      %1920 = vmatprep.mubr.bf16.mxu0 0
      %1921 = vmatmul.mubr.bf16.gmra.mxu0 %v940
      %v1922 = vpop.f32.mrf.mxu0
      %v1923 = vadd.f32 %v806, %v1922
      %v1924 = vpop.f32.mrf.mxu0
      %v1925 = vadd.f32 %v810, %v1924
      %v1926 = vpop.f32.mrf.mxu0
      %v1927 = vadd.f32 %v806, %v1926
      %v1928 = vpop.f32.mrf.mxu0
      %v1929 = vadd.f32 %v810, %v1928
      %1930 = vmatprep.mubr.bf16.mxu0 0
      %1931 = vmatmul.mubr.bf16.gmra.mxu0 %v943
      %v1932 = vpop.f32.mrf.mxu0
      %v1933 = vadd.f32 %v806, %v1932
      %v1934 = vpop.f32.mrf.mxu0
      %v1935 = vadd.f32 %v810, %v1934
      %v1936 = vpop.f32.mrf.mxu0
      %v1937 = vadd.f32 %v806, %v1936
      %v1938 = vpop.f32.mrf.mxu0
      %v1939 = vadd.f32 %v810, %v1938
      %1940 = vdwg.mxu0
      %v1941 = vpack.c.bf16 %v1015, %v1011
      %v1942 = vpack.c.bf16 %v1017, %v1013
      %v1943 = vpack.c.bf16 %v1208, %v1204
      %v1944 = vpack.c.bf16 %v1210, %v1206
      %v1945 = vpack.c.bf16 %v1401, %v1397
      %v1946 = vpack.c.bf16 %v1403, %v1399
      %v1947 = vpack.c.bf16 %v1594, %v1590
      %v1948 = vpack.c.bf16 %v1596, %v1592
      %v1949 = vpack.c.bf16 %v1787, %v1783
      %v1950 = vpack.c.bf16 %v1789, %v1785
      %v1951 = vpack.c.bf16 %v1025, %v1021
      %v1952 = vpack.c.bf16 %v1027, %v1023
      %v1953 = vpack.c.bf16 %v1218, %v1214
      %v1954 = vpack.c.bf16 %v1220, %v1216
      %v1955 = vpack.c.bf16 %v1411, %v1407
      %v1956 = vpack.c.bf16 %v1413, %v1409
      %v1957 = vpack.c.bf16 %v1604, %v1600
      %v1958 = vpack.c.bf16 %v1606, %v1602
      %v1959 = vpack.c.bf16 %v1797, %v1793
      %v1960 = vpack.c.bf16 %v1799, %v1795
      %v1961 = vpack.c.bf16 %v1035, %v1031
      %v1962 = vpack.c.bf16 %v1037, %v1033
      %v1963 = vpack.c.bf16 %v1228, %v1224
      %v1964 = vpack.c.bf16 %v1230, %v1226
      %v1965 = vpack.c.bf16 %v1421, %v1417
      %v1966 = vpack.c.bf16 %v1423, %v1419
      %v1967 = vpack.c.bf16 %v1614, %v1610
      %v1968 = vpack.c.bf16 %v1616, %v1612
      %v1969 = vpack.c.bf16 %v1807, %v1803
      %v1970 = vpack.c.bf16 %v1809, %v1805
      %v1971 = vpack.c.bf16 %v1045, %v1041
      %v1972 = vpack.c.bf16 %v1047, %v1043
      %v1973 = vpack.c.bf16 %v1238, %v1234
      %v1974 = vpack.c.bf16 %v1240, %v1236
      %v1975 = vpack.c.bf16 %v1431, %v1427
      %v1976 = vpack.c.bf16 %v1433, %v1429
      %v1977 = vpack.c.bf16 %v1624, %v1620
      %v1978 = vpack.c.bf16 %v1626, %v1622
      %v1979 = vpack.c.bf16 %v1817, %v1813
      %v1980 = vpack.c.bf16 %v1819, %v1815
      %v1981 = vpack.c.bf16 %v1055, %v1051
      %v1982 = vpack.c.bf16 %v1057, %v1053
      %v1983 = vpack.c.bf16 %v1248, %v1244
      %v1984 = vpack.c.bf16 %v1250, %v1246
      %v1985 = vpack.c.bf16 %v1441, %v1437
      %v1986 = vpack.c.bf16 %v1443, %v1439
      %v1987 = vpack.c.bf16 %v1634, %v1630
      %v1988 = vpack.c.bf16 %v1636, %v1632
      %v1989 = vpack.c.bf16 %v1827, %v1823
      %v1990 = vpack.c.bf16 %v1829, %v1825
      %v1991 = vpack.c.bf16 %v1065, %v1061
      %v1992 = vpack.c.bf16 %v1067, %v1063
      %v1993 = vpack.c.bf16 %v1258, %v1254
      %v1994 = vpack.c.bf16 %v1260, %v1256
      %v1995 = vpack.c.bf16 %v1451, %v1447
      %v1996 = vpack.c.bf16 %v1453, %v1449
      %v1997 = vpack.c.bf16 %v1644, %v1640
      %v1998 = vpack.c.bf16 %v1646, %v1642
      %v1999 = vpack.c.bf16 %v1837, %v1833
      %v2000 = vpack.c.bf16 %v1839, %v1835
      %v2001 = vpack.c.bf16 %v1075, %v1071
      %v2002 = vpack.c.bf16 %v1077, %v1073
      %v2003 = vpack.c.bf16 %v1268, %v1264
      %v2004 = vpack.c.bf16 %v1270, %v1266
      %v2005 = vpack.c.bf16 %v1461, %v1457
      %v2006 = vpack.c.bf16 %v1463, %v1459
      %v2007 = vpack.c.bf16 %v1654, %v1650
      %v2008 = vpack.c.bf16 %v1656, %v1652
      %v2009 = vpack.c.bf16 %v1847, %v1843
      %v2010 = vpack.c.bf16 %v1849, %v1845
      %v2011 = vpack.c.bf16 %v1085, %v1081
      %v2012 = vpack.c.bf16 %v1087, %v1083
      %v2013 = vpack.c.bf16 %v1278, %v1274
      %v2014 = vpack.c.bf16 %v1280, %v1276
      %v2015 = vpack.c.bf16 %v1471, %v1467
      %v2016 = vpack.c.bf16 %v1473, %v1469
      %v2017 = vpack.c.bf16 %v1664, %v1660
      %v2018 = vpack.c.bf16 %v1666, %v1662
      %v2019 = vpack.c.bf16 %v1857, %v1853
      %v2020 = vpack.c.bf16 %v1859, %v1855
      %v2021 = vpack.c.bf16 %v1095, %v1091
      %v2022 = vpack.c.bf16 %v1097, %v1093
      %v2023 = vpack.c.bf16 %v1288, %v1284
      %v2024 = vpack.c.bf16 %v1290, %v1286
      %v2025 = vpack.c.bf16 %v1481, %v1477
      %v2026 = vpack.c.bf16 %v1483, %v1479
      %v2027 = vpack.c.bf16 %v1674, %v1670
      %v2028 = vpack.c.bf16 %v1676, %v1672
      %v2029 = vpack.c.bf16 %v1867, %v1863
      %v2030 = vpack.c.bf16 %v1869, %v1865
      %v2031 = vpack.c.bf16 %v1105, %v1101
      %v2032 = vpack.c.bf16 %v1107, %v1103
      %v2033 = vpack.c.bf16 %v1298, %v1294
      %v2034 = vpack.c.bf16 %v1300, %v1296
      %v2035 = vpack.c.bf16 %v1491, %v1487
      %v2036 = vpack.c.bf16 %v1493, %v1489
      %v2037 = vpack.c.bf16 %v1684, %v1680
      %v2038 = vpack.c.bf16 %v1686, %v1682
      %v2039 = vpack.c.bf16 %v1877, %v1873
      %v2040 = vpack.c.bf16 %v1879, %v1875
      %v2041 = vpack.c.bf16 %v1115, %v1111
      %v2042 = vpack.c.bf16 %v1117, %v1113
      %v2043 = vpack.c.bf16 %v1308, %v1304
      %v2044 = vpack.c.bf16 %v1310, %v1306
      %v2045 = vpack.c.bf16 %v1501, %v1497
      %v2046 = vpack.c.bf16 %v1503, %v1499
      %v2047 = vpack.c.bf16 %v1694, %v1690
      %v2048 = vpack.c.bf16 %v1696, %v1692
      %v2049 = vpack.c.bf16 %v1887, %v1883
      %v2050 = vpack.c.bf16 %v1889, %v1885
      %v2051 = vpack.c.bf16 %v1125, %v1121
      %v2052 = vpack.c.bf16 %v1127, %v1123
      %v2053 = vpack.c.bf16 %v1318, %v1314
      %v2054 = vpack.c.bf16 %v1320, %v1316
      %v2055 = vpack.c.bf16 %v1511, %v1507
      %v2056 = vpack.c.bf16 %v1513, %v1509
      %v2057 = vpack.c.bf16 %v1704, %v1700
      %v2058 = vpack.c.bf16 %v1706, %v1702
      %v2059 = vpack.c.bf16 %v1897, %v1893
      %v2060 = vpack.c.bf16 %v1899, %v1895
      %v2061 = vpack.c.bf16 %v1135, %v1131
      %v2062 = vpack.c.bf16 %v1137, %v1133
      %v2063 = vpack.c.bf16 %v1328, %v1324
      %v2064 = vpack.c.bf16 %v1330, %v1326
      %v2065 = vpack.c.bf16 %v1521, %v1517
      %v2066 = vpack.c.bf16 %v1523, %v1519
      %v2067 = vpack.c.bf16 %v1714, %v1710
      %v2068 = vpack.c.bf16 %v1716, %v1712
      %v2069 = vpack.c.bf16 %v1907, %v1903
      %v2070 = vpack.c.bf16 %v1909, %v1905
      %v2071 = vpack.c.bf16 %v1145, %v1141
      %v2072 = vpack.c.bf16 %v1147, %v1143
      %v2073 = vpack.c.bf16 %v1338, %v1334
      %v2074 = vpack.c.bf16 %v1340, %v1336
      %v2075 = vpack.c.bf16 %v1531, %v1527
      %v2076 = vpack.c.bf16 %v1533, %v1529
      %v2077 = vpack.c.bf16 %v1724, %v1720
      %v2078 = vpack.c.bf16 %v1726, %v1722
      %v2079 = vpack.c.bf16 %v1917, %v1913
      %v2080 = vpack.c.bf16 %v1919, %v1915
      %v2081 = vpack.c.bf16 %v1155, %v1151
      %v2082 = vpack.c.bf16 %v1157, %v1153
      %v2083 = vpack.c.bf16 %v1348, %v1344
      %v2084 = vpack.c.bf16 %v1350, %v1346
      %v2085 = vpack.c.bf16 %v1541, %v1537
      %v2086 = vpack.c.bf16 %v1543, %v1539
      %v2087 = vpack.c.bf16 %v1734, %v1730
      %v2088 = vpack.c.bf16 %v1736, %v1732
      %v2089 = vpack.c.bf16 %v1927, %v1923
      %v2090 = vpack.c.bf16 %v1929, %v1925
      %v2091 = vpack.c.bf16 %v1165, %v1161
      %v2092 = vpack.c.bf16 %v1167, %v1163
      %v2093 = vpack.c.bf16 %v1358, %v1354
      %v2094 = vpack.c.bf16 %v1360, %v1356
      %v2095 = vpack.c.bf16 %v1551, %v1547
      %v2096 = vpack.c.bf16 %v1553, %v1549
      %v2097 = vpack.c.bf16 %v1744, %v1740
      %v2098 = vpack.c.bf16 %v1746, %v1742
      %v2099 = vpack.c.bf16 %v1937, %v1933
      %v2100 = vpack.c.bf16 %v1939, %v1935
      %v2101 = vxor.u32 %v1941, 2147516416
      %v2102 = vxor.u32 %v1942, 2147516416
      %v2103 = vxor.u32 %v1943, 2147516416
      %v2104 = vxor.u32 %v1944, 2147516416
      %v2105 = vxor.u32 %v1945, 2147516416
      %v2106 = vxor.u32 %v1946, 2147516416
      %v2107 = vxor.u32 %v1947, 2147516416
      %v2108 = vxor.u32 %v1948, 2147516416
      %v2109 = vxor.u32 %v1949, 2147516416
      %v2110 = vxor.u32 %v1950, 2147516416
      %v2111 = vxor.u32 %v1951, 2147516416
      %v2112 = vxor.u32 %v1952, 2147516416
      %v2113 = vxor.u32 %v1953, 2147516416
      %v2114 = vxor.u32 %v1954, 2147516416
      %v2115 = vxor.u32 %v1955, 2147516416
      %v2116 = vxor.u32 %v1956, 2147516416
      %v2117 = vxor.u32 %v1957, 2147516416
      %v2118 = vxor.u32 %v1958, 2147516416
      %v2119 = vxor.u32 %v1959, 2147516416
      %v2120 = vxor.u32 %v1960, 2147516416
      %v2121 = vxor.u32 %v1961, 2147516416
      %v2122 = vxor.u32 %v1962, 2147516416
      %v2123 = vxor.u32 %v1963, 2147516416
      %v2124 = vxor.u32 %v1964, 2147516416
      %v2125 = vxor.u32 %v1965, 2147516416
      %v2126 = vxor.u32 %v1966, 2147516416
      %v2127 = vxor.u32 %v1967, 2147516416
      %v2128 = vxor.u32 %v1968, 2147516416
      %v2129 = vxor.u32 %v1969, 2147516416
      %v2130 = vxor.u32 %v1970, 2147516416
      %v2131 = vxor.u32 %v1971, 2147516416
      %v2132 = vxor.u32 %v1972, 2147516416
      %v2133 = vxor.u32 %v1973, 2147516416
      %v2134 = vxor.u32 %v1974, 2147516416
      %v2135 = vxor.u32 %v1975, 2147516416
      %v2136 = vxor.u32 %v1976, 2147516416
      %v2137 = vxor.u32 %v1977, 2147516416
      %v2138 = vxor.u32 %v1978, 2147516416
      %v2139 = vxor.u32 %v1979, 2147516416
      %v2140 = vxor.u32 %v1980, 2147516416
      %v2141 = vxor.u32 %v1981, 2147516416
      %v2142 = vxor.u32 %v1982, 2147516416
      %v2143 = vxor.u32 %v1983, 2147516416
      %v2144 = vxor.u32 %v1984, 2147516416
      %v2145 = vxor.u32 %v1985, 2147516416
      %v2146 = vxor.u32 %v1986, 2147516416
      %v2147 = vxor.u32 %v1987, 2147516416
      %v2148 = vxor.u32 %v1988, 2147516416
      %v2149 = vxor.u32 %v1989, 2147516416
      %v2150 = vxor.u32 %v1990, 2147516416
      %v2151 = vxor.u32 %v1991, 2147516416
      %v2152 = vxor.u32 %v1992, 2147516416
      %v2153 = vxor.u32 %v1993, 2147516416
      %v2154 = vxor.u32 %v1994, 2147516416
      %v2155 = vxor.u32 %v1995, 2147516416
      %v2156 = vxor.u32 %v1996, 2147516416
      %v2157 = vxor.u32 %v1997, 2147516416
      %v2158 = vxor.u32 %v1998, 2147516416
      %v2159 = vxor.u32 %v1999, 2147516416
      %v2160 = vxor.u32 %v2000, 2147516416
      %v2161 = vxor.u32 %v2001, 2147516416
      %v2162 = vxor.u32 %v2002, 2147516416
      %v2163 = vxor.u32 %v2003, 2147516416
      %v2164 = vxor.u32 %v2004, 2147516416
      %v2165 = vxor.u32 %v2005, 2147516416
      %v2166 = vxor.u32 %v2006, 2147516416
      %v2167 = vxor.u32 %v2007, 2147516416
      %v2168 = vxor.u32 %v2008, 2147516416
      %v2169 = vxor.u32 %v2009, 2147516416
      %v2170 = vxor.u32 %v2010, 2147516416
      %v2171 = vxor.u32 %v2011, 2147516416
      %v2172 = vxor.u32 %v2012, 2147516416
      %v2173 = vxor.u32 %v2013, 2147516416
      %v2174 = vxor.u32 %v2014, 2147516416
      %v2175 = vxor.u32 %v2015, 2147516416
      %v2176 = vxor.u32 %v2016, 2147516416
      %v2177 = vxor.u32 %v2017, 2147516416
      %v2178 = vxor.u32 %v2018, 2147516416
      %v2179 = vxor.u32 %v2019, 2147516416
      %v2180 = vxor.u32 %v2020, 2147516416
      %v2181 = vxor.u32 %v2021, 2147516416
      %v2182 = vxor.u32 %v2022, 2147516416
      %v2183 = vxor.u32 %v2023, 2147516416
      %v2184 = vxor.u32 %v2024, 2147516416
      %v2185 = vxor.u32 %v2025, 2147516416
      %v2186 = vxor.u32 %v2026, 2147516416
      %v2187 = vxor.u32 %v2027, 2147516416
      %v2188 = vxor.u32 %v2028, 2147516416
      %v2189 = vxor.u32 %v2029, 2147516416
      %v2190 = vxor.u32 %v2030, 2147516416
      %v2191 = vxor.u32 %v2031, 2147516416
      %v2192 = vxor.u32 %v2032, 2147516416
      %v2193 = vxor.u32 %v2033, 2147516416
      %v2194 = vxor.u32 %v2034, 2147516416
      %v2195 = vxor.u32 %v2035, 2147516416
      %v2196 = vxor.u32 %v2036, 2147516416
      %v2197 = vxor.u32 %v2037, 2147516416
      %v2198 = vxor.u32 %v2038, 2147516416
      %v2199 = vxor.u32 %v2039, 2147516416
      %v2200 = vxor.u32 %v2040, 2147516416
      %v2201 = vxor.u32 %v2041, 2147516416
      %v2202 = vxor.u32 %v2042, 2147516416
      %v2203 = vxor.u32 %v2043, 2147516416
      %v2204 = vxor.u32 %v2044, 2147516416
      %v2205 = vxor.u32 %v2045, 2147516416
      %v2206 = vxor.u32 %v2046, 2147516416
      %v2207 = vxor.u32 %v2047, 2147516416
      %v2208 = vxor.u32 %v2048, 2147516416
      %v2209 = vxor.u32 %v2049, 2147516416
      %v2210 = vxor.u32 %v2050, 2147516416
      %v2211 = vxor.u32 %v2051, 2147516416
      %v2212 = vxor.u32 %v2052, 2147516416
      %v2213 = vxor.u32 %v2053, 2147516416
      %v2214 = vxor.u32 %v2054, 2147516416
      %v2215 = vxor.u32 %v2055, 2147516416
      %v2216 = vxor.u32 %v2056, 2147516416
      %v2217 = vxor.u32 %v2057, 2147516416
      %v2218 = vxor.u32 %v2058, 2147516416
      %v2219 = vxor.u32 %v2059, 2147516416
      %v2220 = vxor.u32 %v2060, 2147516416
      %v2221 = vxor.u32 %v2061, 2147516416
      %v2222 = vxor.u32 %v2062, 2147516416
      %v2223 = vxor.u32 %v2063, 2147516416
      %v2224 = vxor.u32 %v2064, 2147516416
      %v2225 = vxor.u32 %v2065, 2147516416
      %v2226 = vxor.u32 %v2066, 2147516416
      %v2227 = vxor.u32 %v2067, 2147516416
      %v2228 = vxor.u32 %v2068, 2147516416
      %v2229 = vxor.u32 %v2069, 2147516416
      %v2230 = vxor.u32 %v2070, 2147516416
      %v2231 = vxor.u32 %v2071, 2147516416
      %v2232 = vxor.u32 %v2072, 2147516416
      %v2233 = vxor.u32 %v2073, 2147516416
      %v2234 = vxor.u32 %v2074, 2147516416
      %v2235 = vxor.u32 %v2075, 2147516416
      %v2236 = vxor.u32 %v2076, 2147516416
      %v2237 = vxor.u32 %v2077, 2147516416
      %v2238 = vxor.u32 %v2078, 2147516416
      %v2239 = vxor.u32 %v2079, 2147516416
      %v2240 = vxor.u32 %v2080, 2147516416
      %v2241 = vxor.u32 %v2081, 2147516416
      %v2242 = vxor.u32 %v2082, 2147516416
      %v2243 = vxor.u32 %v2083, 2147516416
      %v2244 = vxor.u32 %v2084, 2147516416
      %v2245 = vxor.u32 %v2085, 2147516416
      %v2246 = vxor.u32 %v2086, 2147516416
      %v2247 = vxor.u32 %v2087, 2147516416
      %v2248 = vxor.u32 %v2088, 2147516416
      %v2249 = vxor.u32 %v2089, 2147516416
      %v2250 = vxor.u32 %v2090, 2147516416
      %v2251 = vxor.u32 %v2091, 2147516416
      %v2252 = vxor.u32 %v2092, 2147516416
      %v2253 = vxor.u32 %v2093, 2147516416
      %v2254 = vxor.u32 %v2094, 2147516416
      %v2255 = vxor.u32 %v2095, 2147516416
      %v2256 = vxor.u32 %v2096, 2147516416
      %v2257 = vxor.u32 %v2097, 2147516416
      %v2258 = vxor.u32 %v2098, 2147516416
      %v2259 = vxor.u32 %v2099, 2147516416
      %v2260 = vxor.u32 %v2100, 2147516416
      %v2262 = vmul.bf16 %v2101, 1069105081
      %v2263 = vpow.bf16.pop %v2262
      %v2265 = vmul.bf16 %v2102, 1069105081
      %v2266 = vpow.bf16.pop %v2265
      %v2268 = vmul.bf16 %v2103, 1069105081
      %v2269 = vpow.bf16.pop %v2268
      %v2271 = vmul.bf16 %v2104, 1069105081
      %v2272 = vpow.bf16.pop %v2271
      %v2274 = vmul.bf16 %v2105, 1069105081
      %v2275 = vpow.bf16.pop %v2274
      %v2277 = vmul.bf16 %v2106, 1069105081
      %v2278 = vpow.bf16.pop %v2277
      %v2280 = vmul.bf16 %v2107, 1069105081
      %v2281 = vpow.bf16.pop %v2280
      %v2283 = vmul.bf16 %v2108, 1069105081
      %v2284 = vpow.bf16.pop %v2283
      %v2286 = vmul.bf16 %v2109, 1069105081
      %v2287 = vpow.bf16.pop %v2286
      %v2289 = vmul.bf16 %v2110, 1069105081
      %v2290 = vpow.bf16.pop %v2289
      %v2292 = vmul.bf16 %v2111, 1069105081
      %v2293 = vpow.bf16.pop %v2292
      %v2295 = vmul.bf16 %v2112, 1069105081
      %v2296 = vpow.bf16.pop %v2295
      %v2298 = vmul.bf16 %v2113, 1069105081
      %v2299 = vpow.bf16.pop %v2298
      %v2301 = vmul.bf16 %v2114, 1069105081
      %v2302 = vpow.bf16.pop %v2301
      %v2304 = vmul.bf16 %v2115, 1069105081
      %v2305 = vpow.bf16.pop %v2304
      %v2307 = vmul.bf16 %v2116, 1069105081
      %v2308 = vpow.bf16.pop %v2307
      %v2310 = vmul.bf16 %v2117, 1069105081
      %v2311 = vpow.bf16.pop %v2310
      %v2313 = vmul.bf16 %v2118, 1069105081
      %v2314 = vpow.bf16.pop %v2313
      %v2316 = vmul.bf16 %v2119, 1069105081
      %v2317 = vpow.bf16.pop %v2316
      %v2319 = vmul.bf16 %v2120, 1069105081
      %v2320 = vpow.bf16.pop %v2319
      %v2322 = vmul.bf16 %v2121, 1069105081
      %v2323 = vpow.bf16.pop %v2322
      %v2325 = vmul.bf16 %v2122, 1069105081
      %v2326 = vpow.bf16.pop %v2325
      %v2328 = vmul.bf16 %v2123, 1069105081
      %v2329 = vpow.bf16.pop %v2328
      %v2331 = vmul.bf16 %v2124, 1069105081
      %v2332 = vpow.bf16.pop %v2331
      %v2334 = vmul.bf16 %v2125, 1069105081
      %v2335 = vpow.bf16.pop %v2334
      %v2337 = vmul.bf16 %v2126, 1069105081
      %v2338 = vpow.bf16.pop %v2337
      %v2340 = vmul.bf16 %v2127, 1069105081
      %v2341 = vpow.bf16.pop %v2340
      %v2343 = vmul.bf16 %v2128, 1069105081
      %v2344 = vpow.bf16.pop %v2343
      %v2346 = vmul.bf16 %v2129, 1069105081
      %v2347 = vpow.bf16.pop %v2346
      %v2349 = vmul.bf16 %v2130, 1069105081
      %v2350 = vpow.bf16.pop %v2349
      %v2352 = vmul.bf16 %v2131, 1069105081
      %v2353 = vpow.bf16.pop %v2352
      %v2355 = vmul.bf16 %v2132, 1069105081
      %v2356 = vpow.bf16.pop %v2355
      %v2358 = vmul.bf16 %v2133, 1069105081
      %v2359 = vpow.bf16.pop %v2358
      %v2361 = vmul.bf16 %v2134, 1069105081
      %v2362 = vpow.bf16.pop %v2361
      %v2364 = vmul.bf16 %v2135, 1069105081
      %v2365 = vpow.bf16.pop %v2364
      %v2367 = vmul.bf16 %v2136, 1069105081
      %v2368 = vpow.bf16.pop %v2367
      %v2370 = vmul.bf16 %v2137, 1069105081
      %v2371 = vpow.bf16.pop %v2370
      %v2373 = vmul.bf16 %v2138, 1069105081
      %v2374 = vpow.bf16.pop %v2373
      %v2376 = vmul.bf16 %v2139, 1069105081
      %v2377 = vpow.bf16.pop %v2376
      %v2379 = vmul.bf16 %v2140, 1069105081
      %v2380 = vpow.bf16.pop %v2379
      %v2382 = vmul.bf16 %v2141, 1069105081
      %v2383 = vpow.bf16.pop %v2382
      %v2385 = vmul.bf16 %v2142, 1069105081
      %v2386 = vpow.bf16.pop %v2385
      %v2388 = vmul.bf16 %v2143, 1069105081
      %v2389 = vpow.bf16.pop %v2388
      %v2391 = vmul.bf16 %v2144, 1069105081
      %v2392 = vpow.bf16.pop %v2391
      %v2394 = vmul.bf16 %v2145, 1069105081
      %v2395 = vpow.bf16.pop %v2394
      %v2397 = vmul.bf16 %v2146, 1069105081
      %v2398 = vpow.bf16.pop %v2397
      %v2400 = vmul.bf16 %v2147, 1069105081
      %v2401 = vpow.bf16.pop %v2400
      %v2403 = vmul.bf16 %v2148, 1069105081
      %v2404 = vpow.bf16.pop %v2403
      %v2406 = vmul.bf16 %v2149, 1069105081
      %v2407 = vpow.bf16.pop %v2406
      %v2409 = vmul.bf16 %v2150, 1069105081
      %v2410 = vpow.bf16.pop %v2409
      %v2412 = vmul.bf16 %v2151, 1069105081
      %v2413 = vpow.bf16.pop %v2412
      %v2415 = vmul.bf16 %v2152, 1069105081
      %v2416 = vpow.bf16.pop %v2415
      %v2418 = vmul.bf16 %v2153, 1069105081
      %v2419 = vpow.bf16.pop %v2418
      %v2421 = vmul.bf16 %v2154, 1069105081
      %v2422 = vpow.bf16.pop %v2421
      %v2424 = vmul.bf16 %v2155, 1069105081
      %v2425 = vpow.bf16.pop %v2424
      %v2427 = vmul.bf16 %v2156, 1069105081
      %v2428 = vpow.bf16.pop %v2427
      %v2430 = vmul.bf16 %v2157, 1069105081
      %v2431 = vpow.bf16.pop %v2430
      %v2433 = vmul.bf16 %v2158, 1069105081
      %v2434 = vpow.bf16.pop %v2433
      %v2436 = vmul.bf16 %v2159, 1069105081
      %v2437 = vpow.bf16.pop %v2436
      %v2439 = vmul.bf16 %v2160, 1069105081
      %v2440 = vpow.bf16.pop %v2439
      %v2442 = vmul.bf16 %v2161, 1069105081
      %v2443 = vpow.bf16.pop %v2442
      %v2445 = vmul.bf16 %v2162, 1069105081
      %v2446 = vpow.bf16.pop %v2445
      %v2448 = vmul.bf16 %v2163, 1069105081
      %v2449 = vpow.bf16.pop %v2448
      %v2451 = vmul.bf16 %v2164, 1069105081
      %v2452 = vpow.bf16.pop %v2451
      %v2454 = vmul.bf16 %v2165, 1069105081
      %v2455 = vpow.bf16.pop %v2454
      %v2457 = vmul.bf16 %v2166, 1069105081
      %v2458 = vpow.bf16.pop %v2457
      %v2460 = vmul.bf16 %v2167, 1069105081
      %v2461 = vpow.bf16.pop %v2460
      %v2463 = vmul.bf16 %v2168, 1069105081
      %v2464 = vpow.bf16.pop %v2463
      %v2466 = vmul.bf16 %v2169, 1069105081
      %v2467 = vpow.bf16.pop %v2466
      %v2469 = vmul.bf16 %v2170, 1069105081
      %v2470 = vpow.bf16.pop %v2469
      %v2472 = vmul.bf16 %v2171, 1069105081
      %v2473 = vpow.bf16.pop %v2472
      %v2475 = vmul.bf16 %v2172, 1069105081
      %v2476 = vpow.bf16.pop %v2475
      %v2478 = vmul.bf16 %v2173, 1069105081
      %v2479 = vpow.bf16.pop %v2478
      %v2481 = vmul.bf16 %v2174, 1069105081
      %v2482 = vpow.bf16.pop %v2481
      %v2484 = vmul.bf16 %v2175, 1069105081
      %v2485 = vpow.bf16.pop %v2484
      %v2487 = vmul.bf16 %v2176, 1069105081
      %v2488 = vpow.bf16.pop %v2487
      %v2490 = vmul.bf16 %v2177, 1069105081
      %v2491 = vpow.bf16.pop %v2490
      %v2493 = vmul.bf16 %v2178, 1069105081
      %v2494 = vpow.bf16.pop %v2493
      %v2496 = vmul.bf16 %v2179, 1069105081
      %v2497 = vpow.bf16.pop %v2496
      %v2499 = vmul.bf16 %v2180, 1069105081
      %v2500 = vpow.bf16.pop %v2499
      %v2502 = vmul.bf16 %v2181, 1069105081
      %v2503 = vpow.bf16.pop %v2502
      %v2505 = vmul.bf16 %v2182, 1069105081
      %v2506 = vpow.bf16.pop %v2505
      %v2508 = vmul.bf16 %v2183, 1069105081
      %v2509 = vpow.bf16.pop %v2508
      %v2511 = vmul.bf16 %v2184, 1069105081
      %v2512 = vpow.bf16.pop %v2511
      %v2514 = vmul.bf16 %v2185, 1069105081
      %v2515 = vpow.bf16.pop %v2514
      %v2517 = vmul.bf16 %v2186, 1069105081
      %v2518 = vpow.bf16.pop %v2517
      %v2520 = vmul.bf16 %v2187, 1069105081
      %v2521 = vpow.bf16.pop %v2520
      %v2523 = vmul.bf16 %v2188, 1069105081
      %v2524 = vpow.bf16.pop %v2523
      %v2526 = vmul.bf16 %v2189, 1069105081
      %v2527 = vpow.bf16.pop %v2526
      %v2529 = vmul.bf16 %v2190, 1069105081
      %v2530 = vpow.bf16.pop %v2529
      %v2532 = vmul.bf16 %v2191, 1069105081
      %v2533 = vpow.bf16.pop %v2532
      %v2535 = vmul.bf16 %v2192, 1069105081
      %v2536 = vpow.bf16.pop %v2535
      %v2538 = vmul.bf16 %v2193, 1069105081
      %v2539 = vpow.bf16.pop %v2538
      %v2541 = vmul.bf16 %v2194, 1069105081
      %v2542 = vpow.bf16.pop %v2541
      %v2544 = vmul.bf16 %v2195, 1069105081
      %v2545 = vpow.bf16.pop %v2544
      %v2547 = vmul.bf16 %v2196, 1069105081
      %v2548 = vpow.bf16.pop %v2547
      %v2550 = vmul.bf16 %v2197, 1069105081
      %v2551 = vpow.bf16.pop %v2550
      %v2553 = vmul.bf16 %v2198, 1069105081
      %v2554 = vpow.bf16.pop %v2553
      %v2556 = vmul.bf16 %v2199, 1069105081
      %v2557 = vpow.bf16.pop %v2556
      %v2559 = vmul.bf16 %v2200, 1069105081
      %v2560 = vpow.bf16.pop %v2559
      %v2562 = vmul.bf16 %v2201, 1069105081
      %v2563 = vpow.bf16.pop %v2562
      %v2565 = vmul.bf16 %v2202, 1069105081
      %v2566 = vpow.bf16.pop %v2565
      %v2568 = vmul.bf16 %v2203, 1069105081
      %v2569 = vpow.bf16.pop %v2568
      %v2571 = vmul.bf16 %v2204, 1069105081
      %v2572 = vpow.bf16.pop %v2571
      %v2574 = vmul.bf16 %v2205, 1069105081
      %v2575 = vpow.bf16.pop %v2574
      %v2577 = vmul.bf16 %v2206, 1069105081
      %v2578 = vpow.bf16.pop %v2577
      %v2580 = vmul.bf16 %v2207, 1069105081
      %v2581 = vpow.bf16.pop %v2580
      %v2583 = vmul.bf16 %v2208, 1069105081
      %v2584 = vpow.bf16.pop %v2583
      %v2586 = vmul.bf16 %v2209, 1069105081
      %v2587 = vpow.bf16.pop %v2586
      %v2589 = vmul.bf16 %v2210, 1069105081
      %v2590 = vpow.bf16.pop %v2589
      %v2592 = vmul.bf16 %v2211, 1069105081
      %v2593 = vpow.bf16.pop %v2592
      %v2595 = vmul.bf16 %v2212, 1069105081
      %v2596 = vpow.bf16.pop %v2595
      %v2598 = vmul.bf16 %v2213, 1069105081
      %v2599 = vpow.bf16.pop %v2598
      %v2601 = vmul.bf16 %v2214, 1069105081
      %v2602 = vpow.bf16.pop %v2601
      %v2604 = vmul.bf16 %v2215, 1069105081
      %v2605 = vpow.bf16.pop %v2604
      %v2607 = vmul.bf16 %v2216, 1069105081
      %v2608 = vpow.bf16.pop %v2607
      %v2610 = vmul.bf16 %v2217, 1069105081
      %v2611 = vpow.bf16.pop %v2610
      %v2613 = vmul.bf16 %v2218, 1069105081
      %v2614 = vpow.bf16.pop %v2613
      %v2616 = vmul.bf16 %v2219, 1069105081
      %v2617 = vpow.bf16.pop %v2616
      %v2619 = vmul.bf16 %v2220, 1069105081
      %v2620 = vpow.bf16.pop %v2619
      %v2622 = vmul.bf16 %v2221, 1069105081
      %v2623 = vpow.bf16.pop %v2622
      %v2625 = vmul.bf16 %v2222, 1069105081
      %v2626 = vpow.bf16.pop %v2625
      %v2628 = vmul.bf16 %v2223, 1069105081
      %v2629 = vpow.bf16.pop %v2628
      %v2631 = vmul.bf16 %v2224, 1069105081
      %v2632 = vpow.bf16.pop %v2631
      %v2634 = vmul.bf16 %v2225, 1069105081
      %v2635 = vpow.bf16.pop %v2634
      %v2637 = vmul.bf16 %v2226, 1069105081
      %v2638 = vpow.bf16.pop %v2637
      %v2640 = vmul.bf16 %v2227, 1069105081
      %v2641 = vpow.bf16.pop %v2640
      %v2643 = vmul.bf16 %v2228, 1069105081
      %v2644 = vpow.bf16.pop %v2643
      %v2646 = vmul.bf16 %v2229, 1069105081
      %v2647 = vpow.bf16.pop %v2646
      %v2649 = vmul.bf16 %v2230, 1069105081
      %v2650 = vpow.bf16.pop %v2649
      %v2652 = vmul.bf16 %v2231, 1069105081
      %v2653 = vpow.bf16.pop %v2652
      %v2655 = vmul.bf16 %v2232, 1069105081
      %v2656 = vpow.bf16.pop %v2655
      %v2658 = vmul.bf16 %v2233, 1069105081
      %v2659 = vpow.bf16.pop %v2658
      %v2661 = vmul.bf16 %v2234, 1069105081
      %v2662 = vpow.bf16.pop %v2661
      %v2664 = vmul.bf16 %v2235, 1069105081
      %v2665 = vpow.bf16.pop %v2664
      %v2667 = vmul.bf16 %v2236, 1069105081
      %v2668 = vpow.bf16.pop %v2667
      %v2670 = vmul.bf16 %v2237, 1069105081
      %v2671 = vpow.bf16.pop %v2670
      %v2673 = vmul.bf16 %v2238, 1069105081
      %v2674 = vpow.bf16.pop %v2673
      %v2676 = vmul.bf16 %v2239, 1069105081
      %v2677 = vpow.bf16.pop %v2676
      %v2679 = vmul.bf16 %v2240, 1069105081
      %v2680 = vpow.bf16.pop %v2679
      %v2682 = vmul.bf16 %v2241, 1069105081
      %v2683 = vpow.bf16.pop %v2682
      %v2685 = vmul.bf16 %v2242, 1069105081
      %v2686 = vpow.bf16.pop %v2685
      %v2688 = vmul.bf16 %v2243, 1069105081
      %v2689 = vpow.bf16.pop %v2688
      %v2691 = vmul.bf16 %v2244, 1069105081
      %v2692 = vpow.bf16.pop %v2691
      %v2694 = vmul.bf16 %v2245, 1069105081
      %v2695 = vpow.bf16.pop %v2694
      %v2697 = vmul.bf16 %v2246, 1069105081
      %v2698 = vpow.bf16.pop %v2697
      %v2700 = vmul.bf16 %v2247, 1069105081
      %v2701 = vpow.bf16.pop %v2700
      %v2703 = vmul.bf16 %v2248, 1069105081
      %v2704 = vpow.bf16.pop %v2703
      %v2706 = vmul.bf16 %v2249, 1069105081
      %v2707 = vpow.bf16.pop %v2706
      %v2709 = vmul.bf16 %v2250, 1069105081
      %v2710 = vpow.bf16.pop %v2709
      %v2712 = vmul.bf16 %v2251, 1069105081
      %v2713 = vpow.bf16.pop %v2712
      %v2715 = vmul.bf16 %v2252, 1069105081
      %v2716 = vpow.bf16.pop %v2715
      %v2718 = vmul.bf16 %v2253, 1069105081
      %v2719 = vpow.bf16.pop %v2718
      %v2721 = vmul.bf16 %v2254, 1069105081
      %v2722 = vpow.bf16.pop %v2721
      %v2724 = vmul.bf16 %v2255, 1069105081
      %v2725 = vpow.bf16.pop %v2724
      %v2727 = vmul.bf16 %v2256, 1069105081
      %v2728 = vpow.bf16.pop %v2727
      %v2730 = vmul.bf16 %v2257, 1069105081
      %v2731 = vpow.bf16.pop %v2730
      %v2733 = vmul.bf16 %v2258, 1069105081
      %v2734 = vpow.bf16.pop %v2733
      %v2736 = vmul.bf16 %v2259, 1069105081
      %v2737 = vpow.bf16.pop %v2736
      %v2739 = vmul.bf16 %v2260, 1069105081
      %v2740 = vpow.bf16.pop %v2739
      %v2741 = vadd.bf16 %v2263, 1065369472
      %v2742 = vadd.bf16 %v2266, 1065369472
      %v2743 = vadd.bf16 %v2269, 1065369472
      %v2744 = vadd.bf16 %v2272, 1065369472
      %v2745 = vadd.bf16 %v2275, 1065369472
      %v2746 = vadd.bf16 %v2278, 1065369472
      %v2747 = vadd.bf16 %v2281, 1065369472
      %v2748 = vadd.bf16 %v2284, 1065369472
      %v2749 = vadd.bf16 %v2287, 1065369472
      %v2750 = vadd.bf16 %v2290, 1065369472
      %v2751 = vadd.bf16 %v2293, 1065369472
      %v2752 = vadd.bf16 %v2296, 1065369472
      %v2753 = vadd.bf16 %v2299, 1065369472
      %v2754 = vadd.bf16 %v2302, 1065369472
      %v2755 = vadd.bf16 %v2305, 1065369472
      %v2756 = vadd.bf16 %v2308, 1065369472
      %v2757 = vadd.bf16 %v2311, 1065369472
      %v2758 = vadd.bf16 %v2314, 1065369472
      %v2759 = vadd.bf16 %v2317, 1065369472
      %v2760 = vadd.bf16 %v2320, 1065369472
      %v2761 = vadd.bf16 %v2323, 1065369472
      %v2762 = vadd.bf16 %v2326, 1065369472
      %v2763 = vadd.bf16 %v2329, 1065369472
      %v2764 = vadd.bf16 %v2332, 1065369472
      %v2765 = vadd.bf16 %v2335, 1065369472
      %v2766 = vadd.bf16 %v2338, 1065369472
      %v2767 = vadd.bf16 %v2341, 1065369472
      %v2768 = vadd.bf16 %v2344, 1065369472
      %v2769 = vadd.bf16 %v2347, 1065369472
      %v2770 = vadd.bf16 %v2350, 1065369472
      %v2771 = vadd.bf16 %v2353, 1065369472
      %v2772 = vadd.bf16 %v2356, 1065369472
      %v2773 = vadd.bf16 %v2359, 1065369472
      %v2774 = vadd.bf16 %v2362, 1065369472
      %v2775 = vadd.bf16 %v2365, 1065369472
      %v2776 = vadd.bf16 %v2368, 1065369472
      %v2777 = vadd.bf16 %v2371, 1065369472
      %v2778 = vadd.bf16 %v2374, 1065369472
      %v2779 = vadd.bf16 %v2377, 1065369472
      %v2780 = vadd.bf16 %v2380, 1065369472
      %v2781 = vadd.bf16 %v2383, 1065369472
      %v2782 = vadd.bf16 %v2386, 1065369472
      %v2783 = vadd.bf16 %v2389, 1065369472
      %v2784 = vadd.bf16 %v2392, 1065369472
      %v2785 = vadd.bf16 %v2395, 1065369472
      %v2786 = vadd.bf16 %v2398, 1065369472
      %v2787 = vadd.bf16 %v2401, 1065369472
      %v2788 = vadd.bf16 %v2404, 1065369472
      %v2789 = vadd.bf16 %v2407, 1065369472
      %v2790 = vadd.bf16 %v2410, 1065369472
      %v2791 = vadd.bf16 %v2413, 1065369472
      %v2792 = vadd.bf16 %v2416, 1065369472
      %v2793 = vadd.bf16 %v2419, 1065369472
      %v2794 = vadd.bf16 %v2422, 1065369472
      %v2795 = vadd.bf16 %v2425, 1065369472
      %v2796 = vadd.bf16 %v2428, 1065369472
      %v2797 = vadd.bf16 %v2431, 1065369472
      %v2798 = vadd.bf16 %v2434, 1065369472
      %v2799 = vadd.bf16 %v2437, 1065369472
      %v2800 = vadd.bf16 %v2440, 1065369472
      %v2801 = vadd.bf16 %v2443, 1065369472
      %v2802 = vadd.bf16 %v2446, 1065369472
      %v2803 = vadd.bf16 %v2449, 1065369472
      %v2804 = vadd.bf16 %v2452, 1065369472
      %v2805 = vadd.bf16 %v2455, 1065369472
      %v2806 = vadd.bf16 %v2458, 1065369472
      %v2807 = vadd.bf16 %v2461, 1065369472
      %v2808 = vadd.bf16 %v2464, 1065369472
      %v2809 = vadd.bf16 %v2467, 1065369472
      %v2810 = vadd.bf16 %v2470, 1065369472
      %v2811 = vadd.bf16 %v2473, 1065369472
      %v2812 = vadd.bf16 %v2476, 1065369472
      %v2813 = vadd.bf16 %v2479, 1065369472
      %v2814 = vadd.bf16 %v2482, 1065369472
      %v2815 = vadd.bf16 %v2485, 1065369472
      %v2816 = vadd.bf16 %v2488, 1065369472
      %v2817 = vadd.bf16 %v2491, 1065369472
      %v2818 = vadd.bf16 %v2494, 1065369472
      %v2819 = vadd.bf16 %v2497, 1065369472
      %v2820 = vadd.bf16 %v2500, 1065369472
      %v2821 = vadd.bf16 %v2503, 1065369472
      %v2822 = vadd.bf16 %v2506, 1065369472
      %v2823 = vadd.bf16 %v2509, 1065369472
      %v2824 = vadd.bf16 %v2512, 1065369472
      %v2825 = vadd.bf16 %v2515, 1065369472
      %v2826 = vadd.bf16 %v2518, 1065369472
      %v2827 = vadd.bf16 %v2521, 1065369472
      %v2828 = vadd.bf16 %v2524, 1065369472
      %v2829 = vadd.bf16 %v2527, 1065369472
      %v2830 = vadd.bf16 %v2530, 1065369472
      %v2831 = vadd.bf16 %v2533, 1065369472
      %v2832 = vadd.bf16 %v2536, 1065369472
      %v2833 = vadd.bf16 %v2539, 1065369472
      %v2834 = vadd.bf16 %v2542, 1065369472
      %v2835 = vadd.bf16 %v2545, 1065369472
      %v2836 = vadd.bf16 %v2548, 1065369472
      %v2837 = vadd.bf16 %v2551, 1065369472
      %v2838 = vadd.bf16 %v2554, 1065369472
      %v2839 = vadd.bf16 %v2557, 1065369472
      %v2840 = vadd.bf16 %v2560, 1065369472
      %v2841 = vadd.bf16 %v2563, 1065369472
      %v2842 = vadd.bf16 %v2566, 1065369472
      %v2843 = vadd.bf16 %v2569, 1065369472
      %v2844 = vadd.bf16 %v2572, 1065369472
      %v2845 = vadd.bf16 %v2575, 1065369472
      %v2846 = vadd.bf16 %v2578, 1065369472
      %v2847 = vadd.bf16 %v2581, 1065369472
      %v2848 = vadd.bf16 %v2584, 1065369472
      %v2849 = vadd.bf16 %v2587, 1065369472
      %v2850 = vadd.bf16 %v2590, 1065369472
      %v2851 = vadd.bf16 %v2593, 1065369472
      %v2852 = vadd.bf16 %v2596, 1065369472
      %v2853 = vadd.bf16 %v2599, 1065369472
      %v2854 = vadd.bf16 %v2602, 1065369472
      %v2855 = vadd.bf16 %v2605, 1065369472
      %v2856 = vadd.bf16 %v2608, 1065369472
      %v2857 = vadd.bf16 %v2611, 1065369472
      %v2858 = vadd.bf16 %v2614, 1065369472
      %v2859 = vadd.bf16 %v2617, 1065369472
      %v2860 = vadd.bf16 %v2620, 1065369472
      %v2861 = vadd.bf16 %v2623, 1065369472
      %v2862 = vadd.bf16 %v2626, 1065369472
      %v2863 = vadd.bf16 %v2629, 1065369472
      %v2864 = vadd.bf16 %v2632, 1065369472
      %v2865 = vadd.bf16 %v2635, 1065369472
      %v2866 = vadd.bf16 %v2638, 1065369472
      %v2867 = vadd.bf16 %v2641, 1065369472
      %v2868 = vadd.bf16 %v2644, 1065369472
      %v2869 = vadd.bf16 %v2647, 1065369472
      %v2870 = vadd.bf16 %v2650, 1065369472
      %v2871 = vadd.bf16 %v2653, 1065369472
      %v2872 = vadd.bf16 %v2656, 1065369472
      %v2873 = vadd.bf16 %v2659, 1065369472
      %v2874 = vadd.bf16 %v2662, 1065369472
      %v2875 = vadd.bf16 %v2665, 1065369472
      %v2876 = vadd.bf16 %v2668, 1065369472
      %v2877 = vadd.bf16 %v2671, 1065369472
      %v2878 = vadd.bf16 %v2674, 1065369472
      %v2879 = vadd.bf16 %v2677, 1065369472
      %v2880 = vadd.bf16 %v2680, 1065369472
      %v2881 = vadd.bf16 %v2683, 1065369472
      %v2882 = vadd.bf16 %v2686, 1065369472
      %v2883 = vadd.bf16 %v2689, 1065369472
      %v2884 = vadd.bf16 %v2692, 1065369472
      %v2885 = vadd.bf16 %v2695, 1065369472
      %v2886 = vadd.bf16 %v2698, 1065369472
      %v2887 = vadd.bf16 %v2701, 1065369472
      %v2888 = vadd.bf16 %v2704, 1065369472
      %v2889 = vadd.bf16 %v2707, 1065369472
      %v2890 = vadd.bf16 %v2710, 1065369472
      %v2891 = vadd.bf16 %v2713, 1065369472
      %v2892 = vadd.bf16 %v2716, 1065369472
      %v2893 = vadd.bf16 %v2719, 1065369472
      %v2894 = vadd.bf16 %v2722, 1065369472
      %v2895 = vadd.bf16 %v2725, 1065369472
      %v2896 = vadd.bf16 %v2728, 1065369472
      %v2897 = vadd.bf16 %v2731, 1065369472
      %v2898 = vadd.bf16 %v2734, 1065369472
      %v2899 = vadd.bf16 %v2737, 1065369472
      %v2900 = vadd.bf16 %v2740, 1065369472
      %v2901 = vrcp.bf16.pop %v2741
      %v2902 = vmul.bf16 1065369472, %v2901
      %v2903 = vrcp.bf16.pop %v2742
      %v2904 = vmul.bf16 1065369472, %v2903
      %v2905 = vrcp.bf16.pop %v2743
      %v2906 = vmul.bf16 1065369472, %v2905
      %v2907 = vrcp.bf16.pop %v2744
      %v2908 = vmul.bf16 1065369472, %v2907
      %v2909 = vrcp.bf16.pop %v2745
      %v2910 = vmul.bf16 1065369472, %v2909
      %v2911 = vrcp.bf16.pop %v2746
      %v2912 = vmul.bf16 1065369472, %v2911
      %v2913 = vrcp.bf16.pop %v2747
      %v2914 = vmul.bf16 1065369472, %v2913
      %v2915 = vrcp.bf16.pop %v2748
      %v2916 = vmul.bf16 1065369472, %v2915
      %v2917 = vrcp.bf16.pop %v2749
      %v2918 = vmul.bf16 1065369472, %v2917
      %v2919 = vrcp.bf16.pop %v2750
      %v2920 = vmul.bf16 1065369472, %v2919
      %v2921 = vrcp.bf16.pop %v2751
      %v2922 = vmul.bf16 1065369472, %v2921
      %v2923 = vrcp.bf16.pop %v2752
      %v2924 = vmul.bf16 1065369472, %v2923
      %v2925 = vrcp.bf16.pop %v2753
      %v2926 = vmul.bf16 1065369472, %v2925
      %v2927 = vrcp.bf16.pop %v2754
      %v2928 = vmul.bf16 1065369472, %v2927
      %v2929 = vrcp.bf16.pop %v2755
      %v2930 = vmul.bf16 1065369472, %v2929
      %v2931 = vrcp.bf16.pop %v2756
      %v2932 = vmul.bf16 1065369472, %v2931
      %v2933 = vrcp.bf16.pop %v2757
      %v2934 = vmul.bf16 1065369472, %v2933
      %v2935 = vrcp.bf16.pop %v2758
      %v2936 = vmul.bf16 1065369472, %v2935
      %v2937 = vrcp.bf16.pop %v2759
      %v2938 = vmul.bf16 1065369472, %v2937
      %v2939 = vrcp.bf16.pop %v2760
      %v2940 = vmul.bf16 1065369472, %v2939
      %v2941 = vrcp.bf16.pop %v2761
      %v2942 = vmul.bf16 1065369472, %v2941
      %v2943 = vrcp.bf16.pop %v2762
      %v2944 = vmul.bf16 1065369472, %v2943
      %v2945 = vrcp.bf16.pop %v2763
      %v2946 = vmul.bf16 1065369472, %v2945
      %v2947 = vrcp.bf16.pop %v2764
      %v2948 = vmul.bf16 1065369472, %v2947
      %v2949 = vrcp.bf16.pop %v2765
      %v2950 = vmul.bf16 1065369472, %v2949
      %v2951 = vrcp.bf16.pop %v2766
      %v2952 = vmul.bf16 1065369472, %v2951
      %v2953 = vrcp.bf16.pop %v2767
      %v2954 = vmul.bf16 1065369472, %v2953
      %v2955 = vrcp.bf16.pop %v2768
      %v2956 = vmul.bf16 1065369472, %v2955
      %v2957 = vrcp.bf16.pop %v2769
      %v2958 = vmul.bf16 1065369472, %v2957
      %v2959 = vrcp.bf16.pop %v2770
      %v2960 = vmul.bf16 1065369472, %v2959
      %v2961 = vrcp.bf16.pop %v2771
      %v2962 = vmul.bf16 1065369472, %v2961
      %v2963 = vrcp.bf16.pop %v2772
      %v2964 = vmul.bf16 1065369472, %v2963
      %v2965 = vrcp.bf16.pop %v2773
      %v2966 = vmul.bf16 1065369472, %v2965
      %v2967 = vrcp.bf16.pop %v2774
      %v2968 = vmul.bf16 1065369472, %v2967
      %v2969 = vrcp.bf16.pop %v2775
      %v2970 = vmul.bf16 1065369472, %v2969
      %v2971 = vrcp.bf16.pop %v2776
      %v2972 = vmul.bf16 1065369472, %v2971
      %v2973 = vrcp.bf16.pop %v2777
      %v2974 = vmul.bf16 1065369472, %v2973
      %v2975 = vrcp.bf16.pop %v2778
      %v2976 = vmul.bf16 1065369472, %v2975
      %v2977 = vrcp.bf16.pop %v2779
      %v2978 = vmul.bf16 1065369472, %v2977
      %v2979 = vrcp.bf16.pop %v2780
      %v2980 = vmul.bf16 1065369472, %v2979
      %v2981 = vrcp.bf16.pop %v2781
      %v2982 = vmul.bf16 1065369472, %v2981
      %v2983 = vrcp.bf16.pop %v2782
      %v2984 = vmul.bf16 1065369472, %v2983
      %v2985 = vrcp.bf16.pop %v2783
      %v2986 = vmul.bf16 1065369472, %v2985
      %v2987 = vrcp.bf16.pop %v2784
      %v2988 = vmul.bf16 1065369472, %v2987
      %v2989 = vrcp.bf16.pop %v2785
      %v2990 = vmul.bf16 1065369472, %v2989
      %v2991 = vrcp.bf16.pop %v2786
      %v2992 = vmul.bf16 1065369472, %v2991
      %v2993 = vrcp.bf16.pop %v2787
      %v2994 = vmul.bf16 1065369472, %v2993
      %v2995 = vrcp.bf16.pop %v2788
      %v2996 = vmul.bf16 1065369472, %v2995
      %v2997 = vrcp.bf16.pop %v2789
      %v2998 = vmul.bf16 1065369472, %v2997
      %v2999 = vrcp.bf16.pop %v2790
      %v3000 = vmul.bf16 1065369472, %v2999
      %v3001 = vrcp.bf16.pop %v2791
      %v3002 = vmul.bf16 1065369472, %v3001
      %v3003 = vrcp.bf16.pop %v2792
      %v3004 = vmul.bf16 1065369472, %v3003
      %v3005 = vrcp.bf16.pop %v2793
      %v3006 = vmul.bf16 1065369472, %v3005
      %v3007 = vrcp.bf16.pop %v2794
      %v3008 = vmul.bf16 1065369472, %v3007
      %v3009 = vrcp.bf16.pop %v2795
      %v3010 = vmul.bf16 1065369472, %v3009
      %v3011 = vrcp.bf16.pop %v2796
      %v3012 = vmul.bf16 1065369472, %v3011
      %v3013 = vrcp.bf16.pop %v2797
      %v3014 = vmul.bf16 1065369472, %v3013
      %v3015 = vrcp.bf16.pop %v2798
      %v3016 = vmul.bf16 1065369472, %v3015
      %v3017 = vrcp.bf16.pop %v2799
      %v3018 = vmul.bf16 1065369472, %v3017
      %v3019 = vrcp.bf16.pop %v2800
      %v3020 = vmul.bf16 1065369472, %v3019
      %v3021 = vrcp.bf16.pop %v2801
      %v3022 = vmul.bf16 1065369472, %v3021
      %v3023 = vrcp.bf16.pop %v2802
      %v3024 = vmul.bf16 1065369472, %v3023
      %v3025 = vrcp.bf16.pop %v2803
      %v3026 = vmul.bf16 1065369472, %v3025
      %v3027 = vrcp.bf16.pop %v2804
      %v3028 = vmul.bf16 1065369472, %v3027
      %v3029 = vrcp.bf16.pop %v2805
      %v3030 = vmul.bf16 1065369472, %v3029
      %v3031 = vrcp.bf16.pop %v2806
      %v3032 = vmul.bf16 1065369472, %v3031
      %v3033 = vrcp.bf16.pop %v2807
      %v3034 = vmul.bf16 1065369472, %v3033
      %v3035 = vrcp.bf16.pop %v2808
      %v3036 = vmul.bf16 1065369472, %v3035
      %v3037 = vrcp.bf16.pop %v2809
      %v3038 = vmul.bf16 1065369472, %v3037
      %v3039 = vrcp.bf16.pop %v2810
      %v3040 = vmul.bf16 1065369472, %v3039
      %v3041 = vrcp.bf16.pop %v2811
      %v3042 = vmul.bf16 1065369472, %v3041
      %v3043 = vrcp.bf16.pop %v2812
      %v3044 = vmul.bf16 1065369472, %v3043
      %v3045 = vrcp.bf16.pop %v2813
      %v3046 = vmul.bf16 1065369472, %v3045
      %v3047 = vrcp.bf16.pop %v2814
      %v3048 = vmul.bf16 1065369472, %v3047
      %v3049 = vrcp.bf16.pop %v2815
      %v3050 = vmul.bf16 1065369472, %v3049
      %v3051 = vrcp.bf16.pop %v2816
      %v3052 = vmul.bf16 1065369472, %v3051
      %v3053 = vrcp.bf16.pop %v2817
      %v3054 = vmul.bf16 1065369472, %v3053
      %v3055 = vrcp.bf16.pop %v2818
      %v3056 = vmul.bf16 1065369472, %v3055
      %v3057 = vrcp.bf16.pop %v2819
      %v3058 = vmul.bf16 1065369472, %v3057
      %v3059 = vrcp.bf16.pop %v2820
      %v3060 = vmul.bf16 1065369472, %v3059
      %v3061 = vrcp.bf16.pop %v2821
      %v3062 = vmul.bf16 1065369472, %v3061
      %v3063 = vrcp.bf16.pop %v2822
      %v3064 = vmul.bf16 1065369472, %v3063
      %v3065 = vrcp.bf16.pop %v2823
      %v3066 = vmul.bf16 1065369472, %v3065
      %v3067 = vrcp.bf16.pop %v2824
      %v3068 = vmul.bf16 1065369472, %v3067
      %v3069 = vrcp.bf16.pop %v2825
      %v3070 = vmul.bf16 1065369472, %v3069
      %v3071 = vrcp.bf16.pop %v2826
      %v3072 = vmul.bf16 1065369472, %v3071
      %v3073 = vrcp.bf16.pop %v2827
      %v3074 = vmul.bf16 1065369472, %v3073
      %v3075 = vrcp.bf16.pop %v2828
      %v3076 = vmul.bf16 1065369472, %v3075
      %v3077 = vrcp.bf16.pop %v2829
      %v3078 = vmul.bf16 1065369472, %v3077
      %v3079 = vrcp.bf16.pop %v2830
      %v3080 = vmul.bf16 1065369472, %v3079
      %v3081 = vrcp.bf16.pop %v2831
      %v3082 = vmul.bf16 1065369472, %v3081
      %v3083 = vrcp.bf16.pop %v2832
      %v3084 = vmul.bf16 1065369472, %v3083
      %v3085 = vrcp.bf16.pop %v2833
      %v3086 = vmul.bf16 1065369472, %v3085
      %v3087 = vrcp.bf16.pop %v2834
      %v3088 = vmul.bf16 1065369472, %v3087
      %v3089 = vrcp.bf16.pop %v2835
      %v3090 = vmul.bf16 1065369472, %v3089
      %v3091 = vrcp.bf16.pop %v2836
      %v3092 = vmul.bf16 1065369472, %v3091
      %v3093 = vrcp.bf16.pop %v2837
      %v3094 = vmul.bf16 1065369472, %v3093
      %v3095 = vrcp.bf16.pop %v2838
      %v3096 = vmul.bf16 1065369472, %v3095
      %v3097 = vrcp.bf16.pop %v2839
      %v3098 = vmul.bf16 1065369472, %v3097
      %v3099 = vrcp.bf16.pop %v2840
      %v3100 = vmul.bf16 1065369472, %v3099
      %v3101 = vrcp.bf16.pop %v2841
      %v3102 = vmul.bf16 1065369472, %v3101
      %v3103 = vrcp.bf16.pop %v2842
      %v3104 = vmul.bf16 1065369472, %v3103
      %v3105 = vrcp.bf16.pop %v2843
      %v3106 = vmul.bf16 1065369472, %v3105
      %v3107 = vrcp.bf16.pop %v2844
      %v3108 = vmul.bf16 1065369472, %v3107
      %v3109 = vrcp.bf16.pop %v2845
      %v3110 = vmul.bf16 1065369472, %v3109
      %v3111 = vrcp.bf16.pop %v2846
      %v3112 = vmul.bf16 1065369472, %v3111
      %v3113 = vrcp.bf16.pop %v2847
      %v3114 = vmul.bf16 1065369472, %v3113
      %v3115 = vrcp.bf16.pop %v2848
      %v3116 = vmul.bf16 1065369472, %v3115
      %v3117 = vrcp.bf16.pop %v2849
      %v3118 = vmul.bf16 1065369472, %v3117
      %v3119 = vrcp.bf16.pop %v2850
      %v3120 = vmul.bf16 1065369472, %v3119
      %v3121 = vrcp.bf16.pop %v2851
      %v3122 = vmul.bf16 1065369472, %v3121
      %v3123 = vrcp.bf16.pop %v2852
      %v3124 = vmul.bf16 1065369472, %v3123
      %v3125 = vrcp.bf16.pop %v2853
      %v3126 = vmul.bf16 1065369472, %v3125
      %v3127 = vrcp.bf16.pop %v2854
      %v3128 = vmul.bf16 1065369472, %v3127
      %v3129 = vrcp.bf16.pop %v2855
      %v3130 = vmul.bf16 1065369472, %v3129
      %v3131 = vrcp.bf16.pop %v2856
      %v3132 = vmul.bf16 1065369472, %v3131
      %v3133 = vrcp.bf16.pop %v2857
      %v3134 = vmul.bf16 1065369472, %v3133
      %v3135 = vrcp.bf16.pop %v2858
      %v3136 = vmul.bf16 1065369472, %v3135
      %v3137 = vrcp.bf16.pop %v2859
      %v3138 = vmul.bf16 1065369472, %v3137
      %v3139 = vrcp.bf16.pop %v2860
      %v3140 = vmul.bf16 1065369472, %v3139
      %v3141 = vrcp.bf16.pop %v2861
      %v3142 = vmul.bf16 1065369472, %v3141
      %v3143 = vrcp.bf16.pop %v2862
      %v3144 = vmul.bf16 1065369472, %v3143
      %v3145 = vrcp.bf16.pop %v2863
      %v3146 = vmul.bf16 1065369472, %v3145
      %v3147 = vrcp.bf16.pop %v2864
      %v3148 = vmul.bf16 1065369472, %v3147
      %v3149 = vrcp.bf16.pop %v2865
      %v3150 = vmul.bf16 1065369472, %v3149
      %v3151 = vrcp.bf16.pop %v2866
      %v3152 = vmul.bf16 1065369472, %v3151
      %v3153 = vrcp.bf16.pop %v2867
      %v3154 = vmul.bf16 1065369472, %v3153
      %v3155 = vrcp.bf16.pop %v2868
      %v3156 = vmul.bf16 1065369472, %v3155
      %v3157 = vrcp.bf16.pop %v2869
      %v3158 = vmul.bf16 1065369472, %v3157
      %v3159 = vrcp.bf16.pop %v2870
      %v3160 = vmul.bf16 1065369472, %v3159
      %v3161 = vrcp.bf16.pop %v2871
      %v3162 = vmul.bf16 1065369472, %v3161
      %v3163 = vrcp.bf16.pop %v2872
      %v3164 = vmul.bf16 1065369472, %v3163
      %v3165 = vrcp.bf16.pop %v2873
      %v3166 = vmul.bf16 1065369472, %v3165
      %v3167 = vrcp.bf16.pop %v2874
      %v3168 = vmul.bf16 1065369472, %v3167
      %v3169 = vrcp.bf16.pop %v2875
      %v3170 = vmul.bf16 1065369472, %v3169
      %v3171 = vrcp.bf16.pop %v2876
      %v3172 = vmul.bf16 1065369472, %v3171
      %v3173 = vrcp.bf16.pop %v2877
      %v3174 = vmul.bf16 1065369472, %v3173
      %v3175 = vrcp.bf16.pop %v2878
      %v3176 = vmul.bf16 1065369472, %v3175
      %v3177 = vrcp.bf16.pop %v2879
      %v3178 = vmul.bf16 1065369472, %v3177
      %v3179 = vrcp.bf16.pop %v2880
      %v3180 = vmul.bf16 1065369472, %v3179
      %v3181 = vrcp.bf16.pop %v2881
      %v3182 = vmul.bf16 1065369472, %v3181
      %v3183 = vrcp.bf16.pop %v2882
      %v3184 = vmul.bf16 1065369472, %v3183
      %v3185 = vrcp.bf16.pop %v2883
      %v3186 = vmul.bf16 1065369472, %v3185
      %v3187 = vrcp.bf16.pop %v2884
      %v3188 = vmul.bf16 1065369472, %v3187
      %v3189 = vrcp.bf16.pop %v2885
      %v3190 = vmul.bf16 1065369472, %v3189
      %v3191 = vrcp.bf16.pop %v2886
      %v3192 = vmul.bf16 1065369472, %v3191
      %v3193 = vrcp.bf16.pop %v2887
      %v3194 = vmul.bf16 1065369472, %v3193
      %v3195 = vrcp.bf16.pop %v2888
      %v3196 = vmul.bf16 1065369472, %v3195
      %v3197 = vrcp.bf16.pop %v2889
      %v3198 = vmul.bf16 1065369472, %v3197
      %v3199 = vrcp.bf16.pop %v2890
      %v3200 = vmul.bf16 1065369472, %v3199
      %v3201 = vrcp.bf16.pop %v2891
      %v3202 = vmul.bf16 1065369472, %v3201
      %v3203 = vrcp.bf16.pop %v2892
      %v3204 = vmul.bf16 1065369472, %v3203
      %v3205 = vrcp.bf16.pop %v2893
      %v3206 = vmul.bf16 1065369472, %v3205
      %v3207 = vrcp.bf16.pop %v2894
      %v3208 = vmul.bf16 1065369472, %v3207
      %v3209 = vrcp.bf16.pop %v2895
      %v3210 = vmul.bf16 1065369472, %v3209
      %v3211 = vrcp.bf16.pop %v2896
      %v3212 = vmul.bf16 1065369472, %v3211
      %v3213 = vrcp.bf16.pop %v2897
      %v3214 = vmul.bf16 1065369472, %v3213
      %v3215 = vrcp.bf16.pop %v2898
      %v3216 = vmul.bf16 1065369472, %v3215
      %v3217 = vrcp.bf16.pop %v2899
      %v3218 = vmul.bf16 1065369472, %v3217
      %v3219 = vrcp.bf16.pop %v2900
      %v3220 = vmul.bf16 1065369472, %v3219
      %v3221 = vmul.bf16 %v1941, %v2902
      %v3222 = vmul.bf16 %v1942, %v2904
      %v3223 = vmul.bf16 %v1943, %v2906
      %v3224 = vmul.bf16 %v1944, %v2908
      %v3225 = vmul.bf16 %v1945, %v2910
      %v3226 = vmul.bf16 %v1946, %v2912
      %v3227 = vmul.bf16 %v1947, %v2914
      %v3228 = vmul.bf16 %v1948, %v2916
      %v3229 = vmul.bf16 %v1949, %v2918
      %v3230 = vmul.bf16 %v1950, %v2920
      %v3231 = vmul.bf16 %v1951, %v2922
      %v3232 = vmul.bf16 %v1952, %v2924
      %v3233 = vmul.bf16 %v1953, %v2926
      %v3234 = vmul.bf16 %v1954, %v2928
      %v3235 = vmul.bf16 %v1955, %v2930
      %v3236 = vmul.bf16 %v1956, %v2932
      %v3237 = vmul.bf16 %v1957, %v2934
      %v3238 = vmul.bf16 %v1958, %v2936
      %v3239 = vmul.bf16 %v1959, %v2938
      %v3240 = vmul.bf16 %v1960, %v2940
      %v3241 = vmul.bf16 %v1961, %v2942
      %v3242 = vmul.bf16 %v1962, %v2944
      %v3243 = vmul.bf16 %v1963, %v2946
      %v3244 = vmul.bf16 %v1964, %v2948
      %v3245 = vmul.bf16 %v1965, %v2950
      %v3246 = vmul.bf16 %v1966, %v2952
      %v3247 = vmul.bf16 %v1967, %v2954
      %v3248 = vmul.bf16 %v1968, %v2956
      %v3249 = vmul.bf16 %v1969, %v2958
      %v3250 = vmul.bf16 %v1970, %v2960
      %v3251 = vmul.bf16 %v1971, %v2962
      %v3252 = vmul.bf16 %v1972, %v2964
      %v3253 = vmul.bf16 %v1973, %v2966
      %v3254 = vmul.bf16 %v1974, %v2968
      %v3255 = vmul.bf16 %v1975, %v2970
      %v3256 = vmul.bf16 %v1976, %v2972
      %v3257 = vmul.bf16 %v1977, %v2974
      %v3258 = vmul.bf16 %v1978, %v2976
      %v3259 = vmul.bf16 %v1979, %v2978
      %v3260 = vmul.bf16 %v1980, %v2980
      %v3261 = vmul.bf16 %v1981, %v2982
      %v3262 = vmul.bf16 %v1982, %v2984
      %v3263 = vmul.bf16 %v1983, %v2986
      %v3264 = vmul.bf16 %v1984, %v2988
      %v3265 = vmul.bf16 %v1985, %v2990
      %v3266 = vmul.bf16 %v1986, %v2992
      %v3267 = vmul.bf16 %v1987, %v2994
      %v3268 = vmul.bf16 %v1988, %v2996
      %v3269 = vmul.bf16 %v1989, %v2998
      %v3270 = vmul.bf16 %v1990, %v3000
      %v3271 = vmul.bf16 %v1991, %v3002
      %v3272 = vmul.bf16 %v1992, %v3004
      %v3273 = vmul.bf16 %v1993, %v3006
      %v3274 = vmul.bf16 %v1994, %v3008
      %v3275 = vmul.bf16 %v1995, %v3010
      %v3276 = vmul.bf16 %v1996, %v3012
      %v3277 = vmul.bf16 %v1997, %v3014
      %v3278 = vmul.bf16 %v1998, %v3016
      %v3279 = vmul.bf16 %v1999, %v3018
      %v3280 = vmul.bf16 %v2000, %v3020
      %v3281 = vmul.bf16 %v2001, %v3022
      %v3282 = vmul.bf16 %v2002, %v3024
      %v3283 = vmul.bf16 %v2003, %v3026
      %v3284 = vmul.bf16 %v2004, %v3028
      %v3285 = vmul.bf16 %v2005, %v3030
      %v3286 = vmul.bf16 %v2006, %v3032
      %v3287 = vmul.bf16 %v2007, %v3034
      %v3288 = vmul.bf16 %v2008, %v3036
      %v3289 = vmul.bf16 %v2009, %v3038
      %v3290 = vmul.bf16 %v2010, %v3040
      %v3291 = vmul.bf16 %v2011, %v3042
      %v3292 = vmul.bf16 %v2012, %v3044
      %v3293 = vmul.bf16 %v2013, %v3046
      %v3294 = vmul.bf16 %v2014, %v3048
      %v3295 = vmul.bf16 %v2015, %v3050
      %v3296 = vmul.bf16 %v2016, %v3052
      %v3297 = vmul.bf16 %v2017, %v3054
      %v3298 = vmul.bf16 %v2018, %v3056
      %v3299 = vmul.bf16 %v2019, %v3058
      %v3300 = vmul.bf16 %v2020, %v3060
      %v3301 = vmul.bf16 %v2021, %v3062
      %v3302 = vmul.bf16 %v2022, %v3064
      %v3303 = vmul.bf16 %v2023, %v3066
      %v3304 = vmul.bf16 %v2024, %v3068
      %v3305 = vmul.bf16 %v2025, %v3070
      %v3306 = vmul.bf16 %v2026, %v3072
      %v3307 = vmul.bf16 %v2027, %v3074
      %v3308 = vmul.bf16 %v2028, %v3076
      %v3309 = vmul.bf16 %v2029, %v3078
      %v3310 = vmul.bf16 %v2030, %v3080
      %v3311 = vmul.bf16 %v2031, %v3082
      %v3312 = vmul.bf16 %v2032, %v3084
      %v3313 = vmul.bf16 %v2033, %v3086
      %v3314 = vmul.bf16 %v2034, %v3088
      %v3315 = vmul.bf16 %v2035, %v3090
      %v3316 = vmul.bf16 %v2036, %v3092
      %v3317 = vmul.bf16 %v2037, %v3094
      %v3318 = vmul.bf16 %v2038, %v3096
      %v3319 = vmul.bf16 %v2039, %v3098
      %v3320 = vmul.bf16 %v2040, %v3100
      %v3321 = vmul.bf16 %v2041, %v3102
      %v3322 = vmul.bf16 %v2042, %v3104
      %v3323 = vmul.bf16 %v2043, %v3106
      %v3324 = vmul.bf16 %v2044, %v3108
      %v3325 = vmul.bf16 %v2045, %v3110
      %v3326 = vmul.bf16 %v2046, %v3112
      %v3327 = vmul.bf16 %v2047, %v3114
      %v3328 = vmul.bf16 %v2048, %v3116
      %v3329 = vmul.bf16 %v2049, %v3118
      %v3330 = vmul.bf16 %v2050, %v3120
      %v3331 = vmul.bf16 %v2051, %v3122
      %v3332 = vmul.bf16 %v2052, %v3124
      %v3333 = vmul.bf16 %v2053, %v3126
      %v3334 = vmul.bf16 %v2054, %v3128
      %v3335 = vmul.bf16 %v2055, %v3130
      %v3336 = vmul.bf16 %v2056, %v3132
      %v3337 = vmul.bf16 %v2057, %v3134
      %v3338 = vmul.bf16 %v2058, %v3136
      %v3339 = vmul.bf16 %v2059, %v3138
      %v3340 = vmul.bf16 %v2060, %v3140
      %v3341 = vmul.bf16 %v2061, %v3142
      %v3342 = vmul.bf16 %v2062, %v3144
      %v3343 = vmul.bf16 %v2063, %v3146
      %v3344 = vmul.bf16 %v2064, %v3148
      %v3345 = vmul.bf16 %v2065, %v3150
      %v3346 = vmul.bf16 %v2066, %v3152
      %v3347 = vmul.bf16 %v2067, %v3154
      %v3348 = vmul.bf16 %v2068, %v3156
      %v3349 = vmul.bf16 %v2069, %v3158
      %v3350 = vmul.bf16 %v2070, %v3160
      %v3351 = vmul.bf16 %v2071, %v3162
      %v3352 = vmul.bf16 %v2072, %v3164
      %v3353 = vmul.bf16 %v2073, %v3166
      %v3354 = vmul.bf16 %v2074, %v3168
      %v3355 = vmul.bf16 %v2075, %v3170
      %v3356 = vmul.bf16 %v2076, %v3172
      %v3357 = vmul.bf16 %v2077, %v3174
      %v3358 = vmul.bf16 %v2078, %v3176
      %v3359 = vmul.bf16 %v2079, %v3178
      %v3360 = vmul.bf16 %v2080, %v3180
      %v3361 = vmul.bf16 %v2081, %v3182
      %v3362 = vmul.bf16 %v2082, %v3184
      %v3363 = vmul.bf16 %v2083, %v3186
      %v3364 = vmul.bf16 %v2084, %v3188
      %v3365 = vmul.bf16 %v2085, %v3190
      %v3366 = vmul.bf16 %v2086, %v3192
      %v3367 = vmul.bf16 %v2087, %v3194
      %v3368 = vmul.bf16 %v2088, %v3196
      %v3369 = vmul.bf16 %v2089, %v3198
      %v3370 = vmul.bf16 %v2090, %v3200
      %v3371 = vmul.bf16 %v2091, %v3202
      %v3372 = vmul.bf16 %v2092, %v3204
      %v3373 = vmul.bf16 %v2093, %v3206
      %v3374 = vmul.bf16 %v2094, %v3208
      %v3375 = vmul.bf16 %v2095, %v3210
      %v3376 = vmul.bf16 %v2096, %v3212
      %v3377 = vmul.bf16 %v2097, %v3214
      %v3378 = vmul.bf16 %v2098, %v3216
      %v3379 = vmul.bf16 %v2099, %v3218
      %v3380 = vmul.bf16 %v2100, %v3220
      %v3381 = vld [vmem:[#allocation2] sm:$0xff]
      %v3382 = vld [vmem:[#allocation2 + $0x8] sm:$0x3]
      %v3383 = vunpack.c.l.bf16 %v3221
      %v3384 = vunpack.c.l.bf16 %v3222
      %v3385 = vunpack.c.l.bf16 %v3223
      %v3386 = vunpack.c.l.bf16 %v3224
      %v3387 = vunpack.c.l.bf16 %v3225
      %v3388 = vunpack.c.l.bf16 %v3226
      %v3389 = vunpack.c.l.bf16 %v3227
      %v3390 = vunpack.c.l.bf16 %v3228
      %v3391 = vunpack.c.l.bf16 %v3229
      %v3392 = vunpack.c.l.bf16 %v3230
      %v3393 = vunpack.c.h.bf16 %v3221
      %v3394 = vunpack.c.h.bf16 %v3222
      %v3395 = vunpack.c.h.bf16 %v3223
      %v3396 = vunpack.c.h.bf16 %v3224
      %v3397 = vunpack.c.h.bf16 %v3225
      %v3398 = vunpack.c.h.bf16 %v3226
      %v3399 = vunpack.c.h.bf16 %v3227
      %v3400 = vunpack.c.h.bf16 %v3228
      %v3401 = vunpack.c.h.bf16 %v3229
      %v3402 = vunpack.c.h.bf16 %v3230
      %v3403 = vunpack.c.l.bf16 %v3231
      %v3404 = vunpack.c.l.bf16 %v3232
      %v3405 = vunpack.c.l.bf16 %v3233
      %v3406 = vunpack.c.l.bf16 %v3234
      %v3407 = vunpack.c.l.bf16 %v3235
      %v3408 = vunpack.c.l.bf16 %v3236
      %v3409 = vunpack.c.l.bf16 %v3237
      %v3410 = vunpack.c.l.bf16 %v3238
      %v3411 = vunpack.c.l.bf16 %v3239
      %v3412 = vunpack.c.l.bf16 %v3240
      %v3413 = vunpack.c.h.bf16 %v3231
      %v3414 = vunpack.c.h.bf16 %v3232
      %v3415 = vunpack.c.h.bf16 %v3233
      %v3416 = vunpack.c.h.bf16 %v3234
      %v3417 = vunpack.c.h.bf16 %v3235
      %v3418 = vunpack.c.h.bf16 %v3236
      %v3419 = vunpack.c.h.bf16 %v3237
      %v3420 = vunpack.c.h.bf16 %v3238
      %v3421 = vunpack.c.h.bf16 %v3239
      %v3422 = vunpack.c.h.bf16 %v3240
      %v3423 = vunpack.c.l.bf16 %v3241
      %v3424 = vunpack.c.l.bf16 %v3242
      %v3425 = vunpack.c.l.bf16 %v3243
      %v3426 = vunpack.c.l.bf16 %v3244
      %v3427 = vunpack.c.l.bf16 %v3245
      %v3428 = vunpack.c.l.bf16 %v3246
      %v3429 = vunpack.c.l.bf16 %v3247
      %v3430 = vunpack.c.l.bf16 %v3248
      %v3431 = vunpack.c.l.bf16 %v3249
      %v3432 = vunpack.c.l.bf16 %v3250
      %v3433 = vunpack.c.h.bf16 %v3241
      %v3434 = vunpack.c.h.bf16 %v3242
      %v3435 = vunpack.c.h.bf16 %v3243
      %v3436 = vunpack.c.h.bf16 %v3244
      %v3437 = vunpack.c.h.bf16 %v3245
      %v3438 = vunpack.c.h.bf16 %v3246
      %v3439 = vunpack.c.h.bf16 %v3247
      %v3440 = vunpack.c.h.bf16 %v3248
      %v3441 = vunpack.c.h.bf16 %v3249
      %v3442 = vunpack.c.h.bf16 %v3250
      %v3443 = vunpack.c.l.bf16 %v3251
      %v3444 = vunpack.c.l.bf16 %v3252
      %v3445 = vunpack.c.l.bf16 %v3253
      %v3446 = vunpack.c.l.bf16 %v3254
      %v3447 = vunpack.c.l.bf16 %v3255
      %v3448 = vunpack.c.l.bf16 %v3256
      %v3449 = vunpack.c.l.bf16 %v3257
      %v3450 = vunpack.c.l.bf16 %v3258
      %v3451 = vunpack.c.l.bf16 %v3259
      %v3452 = vunpack.c.l.bf16 %v3260
      %v3453 = vunpack.c.h.bf16 %v3251
      %v3454 = vunpack.c.h.bf16 %v3252
      %v3455 = vunpack.c.h.bf16 %v3253
      %v3456 = vunpack.c.h.bf16 %v3254
      %v3457 = vunpack.c.h.bf16 %v3255
      %v3458 = vunpack.c.h.bf16 %v3256
      %v3459 = vunpack.c.h.bf16 %v3257
      %v3460 = vunpack.c.h.bf16 %v3258
      %v3461 = vunpack.c.h.bf16 %v3259
      %v3462 = vunpack.c.h.bf16 %v3260
      %v3463 = vunpack.c.l.bf16 %v3261
      %v3464 = vunpack.c.l.bf16 %v3262
      %v3465 = vunpack.c.l.bf16 %v3263
      %v3466 = vunpack.c.l.bf16 %v3264
      %v3467 = vunpack.c.l.bf16 %v3265
      %v3468 = vunpack.c.l.bf16 %v3266
      %v3469 = vunpack.c.l.bf16 %v3267
      %v3470 = vunpack.c.l.bf16 %v3268
      %v3471 = vunpack.c.l.bf16 %v3269
      %v3472 = vunpack.c.l.bf16 %v3270
      %v3473 = vunpack.c.h.bf16 %v3261
      %v3474 = vunpack.c.h.bf16 %v3262
      %v3475 = vunpack.c.h.bf16 %v3263
      %v3476 = vunpack.c.h.bf16 %v3264
      %v3477 = vunpack.c.h.bf16 %v3265
      %v3478 = vunpack.c.h.bf16 %v3266
      %v3479 = vunpack.c.h.bf16 %v3267
      %v3480 = vunpack.c.h.bf16 %v3268
      %v3481 = vunpack.c.h.bf16 %v3269
      %v3482 = vunpack.c.h.bf16 %v3270
      %v3483 = vunpack.c.l.bf16 %v3271
      %v3484 = vunpack.c.l.bf16 %v3272
      %v3485 = vunpack.c.l.bf16 %v3273
      %v3486 = vunpack.c.l.bf16 %v3274
      %v3487 = vunpack.c.l.bf16 %v3275
      %v3488 = vunpack.c.l.bf16 %v3276
      %v3489 = vunpack.c.l.bf16 %v3277
      %v3490 = vunpack.c.l.bf16 %v3278
      %v3491 = vunpack.c.l.bf16 %v3279
      %v3492 = vunpack.c.l.bf16 %v3280
      %v3493 = vunpack.c.h.bf16 %v3271
      %v3494 = vunpack.c.h.bf16 %v3272
      %v3495 = vunpack.c.h.bf16 %v3273
      %v3496 = vunpack.c.h.bf16 %v3274
      %v3497 = vunpack.c.h.bf16 %v3275
      %v3498 = vunpack.c.h.bf16 %v3276
      %v3499 = vunpack.c.h.bf16 %v3277
      %v3500 = vunpack.c.h.bf16 %v3278
      %v3501 = vunpack.c.h.bf16 %v3279
      %v3502 = vunpack.c.h.bf16 %v3280
      %v3503 = vunpack.c.l.bf16 %v3281
      %v3504 = vunpack.c.l.bf16 %v3282
      %v3505 = vunpack.c.l.bf16 %v3283
      %v3506 = vunpack.c.l.bf16 %v3284
      %v3507 = vunpack.c.l.bf16 %v3285
      %v3508 = vunpack.c.l.bf16 %v3286
      %v3509 = vunpack.c.l.bf16 %v3287
      %v3510 = vunpack.c.l.bf16 %v3288
      %v3511 = vunpack.c.l.bf16 %v3289
      %v3512 = vunpack.c.l.bf16 %v3290
      %v3513 = vunpack.c.h.bf16 %v3281
      %v3514 = vunpack.c.h.bf16 %v3282
      %v3515 = vunpack.c.h.bf16 %v3283
      %v3516 = vunpack.c.h.bf16 %v3284
      %v3517 = vunpack.c.h.bf16 %v3285
      %v3518 = vunpack.c.h.bf16 %v3286
      %v3519 = vunpack.c.h.bf16 %v3287
      %v3520 = vunpack.c.h.bf16 %v3288
      %v3521 = vunpack.c.h.bf16 %v3289
      %v3522 = vunpack.c.h.bf16 %v3290
      %v3523 = vunpack.c.l.bf16 %v3291
      %v3524 = vunpack.c.l.bf16 %v3292
      %v3525 = vunpack.c.l.bf16 %v3293
      %v3526 = vunpack.c.l.bf16 %v3294
      %v3527 = vunpack.c.l.bf16 %v3295
      %v3528 = vunpack.c.l.bf16 %v3296
      %v3529 = vunpack.c.l.bf16 %v3297
      %v3530 = vunpack.c.l.bf16 %v3298
      %v3531 = vunpack.c.l.bf16 %v3299
      %v3532 = vunpack.c.l.bf16 %v3300
      %v3533 = vunpack.c.h.bf16 %v3291
      %v3534 = vunpack.c.h.bf16 %v3292
      %v3535 = vunpack.c.h.bf16 %v3293
      %v3536 = vunpack.c.h.bf16 %v3294
      %v3537 = vunpack.c.h.bf16 %v3295
      %v3538 = vunpack.c.h.bf16 %v3296
      %v3539 = vunpack.c.h.bf16 %v3297
      %v3540 = vunpack.c.h.bf16 %v3298
      %v3541 = vunpack.c.h.bf16 %v3299
      %v3542 = vunpack.c.h.bf16 %v3300
      %v3543 = vunpack.c.l.bf16 %v3301
      %v3544 = vunpack.c.l.bf16 %v3302
      %v3545 = vunpack.c.l.bf16 %v3303
      %v3546 = vunpack.c.l.bf16 %v3304
      %v3547 = vunpack.c.l.bf16 %v3305
      %v3548 = vunpack.c.l.bf16 %v3306
      %v3549 = vunpack.c.l.bf16 %v3307
      %v3550 = vunpack.c.l.bf16 %v3308
      %v3551 = vunpack.c.l.bf16 %v3309
      %v3552 = vunpack.c.l.bf16 %v3310
      %v3553 = vunpack.c.h.bf16 %v3301
      %v3554 = vunpack.c.h.bf16 %v3302
      %v3555 = vunpack.c.h.bf16 %v3303
      %v3556 = vunpack.c.h.bf16 %v3304
      %v3557 = vunpack.c.h.bf16 %v3305
      %v3558 = vunpack.c.h.bf16 %v3306
      %v3559 = vunpack.c.h.bf16 %v3307
      %v3560 = vunpack.c.h.bf16 %v3308
      %v3561 = vunpack.c.h.bf16 %v3309
      %v3562 = vunpack.c.h.bf16 %v3310
      %v3563 = vunpack.c.l.bf16 %v3311
      %v3564 = vunpack.c.l.bf16 %v3312
      %v3565 = vunpack.c.l.bf16 %v3313
      %v3566 = vunpack.c.l.bf16 %v3314
      %v3567 = vunpack.c.l.bf16 %v3315
      %v3568 = vunpack.c.l.bf16 %v3316
      %v3569 = vunpack.c.l.bf16 %v3317
      %v3570 = vunpack.c.l.bf16 %v3318
      %v3571 = vunpack.c.l.bf16 %v3319
      %v3572 = vunpack.c.l.bf16 %v3320
      %v3573 = vunpack.c.h.bf16 %v3311
      %v3574 = vunpack.c.h.bf16 %v3312
      %v3575 = vunpack.c.h.bf16 %v3313
      %v3576 = vunpack.c.h.bf16 %v3314
      %v3577 = vunpack.c.h.bf16 %v3315
      %v3578 = vunpack.c.h.bf16 %v3316
      %v3579 = vunpack.c.h.bf16 %v3317
      %v3580 = vunpack.c.h.bf16 %v3318
      %v3581 = vunpack.c.h.bf16 %v3319
      %v3582 = vunpack.c.h.bf16 %v3320
      %v3583 = vunpack.c.l.bf16 %v3321
      %v3584 = vunpack.c.l.bf16 %v3322
      %v3585 = vunpack.c.l.bf16 %v3323
      %v3586 = vunpack.c.l.bf16 %v3324
      %v3587 = vunpack.c.l.bf16 %v3325
      %v3588 = vunpack.c.l.bf16 %v3326
      %v3589 = vunpack.c.l.bf16 %v3327
      %v3590 = vunpack.c.l.bf16 %v3328
      %v3591 = vunpack.c.l.bf16 %v3329
      %v3592 = vunpack.c.l.bf16 %v3330
      %v3593 = vunpack.c.h.bf16 %v3321
      %v3594 = vunpack.c.h.bf16 %v3322
      %v3595 = vunpack.c.h.bf16 %v3323
      %v3596 = vunpack.c.h.bf16 %v3324
      %v3597 = vunpack.c.h.bf16 %v3325
      %v3598 = vunpack.c.h.bf16 %v3326
      %v3599 = vunpack.c.h.bf16 %v3327
      %v3600 = vunpack.c.h.bf16 %v3328
      %v3601 = vunpack.c.h.bf16 %v3329
      %v3602 = vunpack.c.h.bf16 %v3330
      %v3603 = vunpack.c.l.bf16 %v3331
      %v3604 = vunpack.c.l.bf16 %v3332
      %v3605 = vunpack.c.l.bf16 %v3333
      %v3606 = vunpack.c.l.bf16 %v3334
      %v3607 = vunpack.c.l.bf16 %v3335
      %v3608 = vunpack.c.l.bf16 %v3336
      %v3609 = vunpack.c.l.bf16 %v3337
      %v3610 = vunpack.c.l.bf16 %v3338
      %v3611 = vunpack.c.l.bf16 %v3339
      %v3612 = vunpack.c.l.bf16 %v3340
      %v3613 = vunpack.c.h.bf16 %v3331
      %v3614 = vunpack.c.h.bf16 %v3332
      %v3615 = vunpack.c.h.bf16 %v3333
      %v3616 = vunpack.c.h.bf16 %v3334
      %v3617 = vunpack.c.h.bf16 %v3335
      %v3618 = vunpack.c.h.bf16 %v3336
      %v3619 = vunpack.c.h.bf16 %v3337
      %v3620 = vunpack.c.h.bf16 %v3338
      %v3621 = vunpack.c.h.bf16 %v3339
      %v3622 = vunpack.c.h.bf16 %v3340
      %v3623 = vunpack.c.l.bf16 %v3341
      %v3624 = vunpack.c.l.bf16 %v3342
      %v3625 = vunpack.c.l.bf16 %v3343
      %v3626 = vunpack.c.l.bf16 %v3344
      %v3627 = vunpack.c.l.bf16 %v3345
      %v3628 = vunpack.c.l.bf16 %v3346
      %v3629 = vunpack.c.l.bf16 %v3347
      %v3630 = vunpack.c.l.bf16 %v3348
      %v3631 = vunpack.c.l.bf16 %v3349
      %v3632 = vunpack.c.l.bf16 %v3350
      %v3633 = vunpack.c.h.bf16 %v3341
      %v3634 = vunpack.c.h.bf16 %v3342
      %v3635 = vunpack.c.h.bf16 %v3343
      %v3636 = vunpack.c.h.bf16 %v3344
      %v3637 = vunpack.c.h.bf16 %v3345
      %v3638 = vunpack.c.h.bf16 %v3346
      %v3639 = vunpack.c.h.bf16 %v3347
      %v3640 = vunpack.c.h.bf16 %v3348
      %v3641 = vunpack.c.h.bf16 %v3349
      %v3642 = vunpack.c.h.bf16 %v3350
      %v3643 = vunpack.c.l.bf16 %v3351
      %v3644 = vunpack.c.l.bf16 %v3352
      %v3645 = vunpack.c.l.bf16 %v3353
      %v3646 = vunpack.c.l.bf16 %v3354
      %v3647 = vunpack.c.l.bf16 %v3355
      %v3648 = vunpack.c.l.bf16 %v3356
      %v3649 = vunpack.c.l.bf16 %v3357
      %v3650 = vunpack.c.l.bf16 %v3358
      %v3651 = vunpack.c.l.bf16 %v3359
      %v3652 = vunpack.c.l.bf16 %v3360
      %v3653 = vunpack.c.h.bf16 %v3351
      %v3654 = vunpack.c.h.bf16 %v3352
      %v3655 = vunpack.c.h.bf16 %v3353
      %v3656 = vunpack.c.h.bf16 %v3354
      %v3657 = vunpack.c.h.bf16 %v3355
      %v3658 = vunpack.c.h.bf16 %v3356
      %v3659 = vunpack.c.h.bf16 %v3357
      %v3660 = vunpack.c.h.bf16 %v3358
      %v3661 = vunpack.c.h.bf16 %v3359
      %v3662 = vunpack.c.h.bf16 %v3360
      %v3663 = vunpack.c.l.bf16 %v3361
      %v3664 = vunpack.c.l.bf16 %v3362
      %v3665 = vunpack.c.l.bf16 %v3363
      %v3666 = vunpack.c.l.bf16 %v3364
      %v3667 = vunpack.c.l.bf16 %v3365
      %v3668 = vunpack.c.l.bf16 %v3366
      %v3669 = vunpack.c.l.bf16 %v3367
      %v3670 = vunpack.c.l.bf16 %v3368
      %v3671 = vunpack.c.l.bf16 %v3369
      %v3672 = vunpack.c.l.bf16 %v3370
      %v3673 = vunpack.c.h.bf16 %v3361
      %v3674 = vunpack.c.h.bf16 %v3362
      %v3675 = vunpack.c.h.bf16 %v3363
      %v3676 = vunpack.c.h.bf16 %v3364
      %v3677 = vunpack.c.h.bf16 %v3365
      %v3678 = vunpack.c.h.bf16 %v3366
      %v3679 = vunpack.c.h.bf16 %v3367
      %v3680 = vunpack.c.h.bf16 %v3368
      %v3681 = vunpack.c.h.bf16 %v3369
      %v3682 = vunpack.c.h.bf16 %v3370
      %v3683 = vunpack.c.l.bf16 %v3371
      %v3684 = vunpack.c.l.bf16 %v3372
      %v3685 = vunpack.c.l.bf16 %v3373
      %v3686 = vunpack.c.l.bf16 %v3374
      %v3687 = vunpack.c.l.bf16 %v3375
      %v3688 = vunpack.c.l.bf16 %v3376
      %v3689 = vunpack.c.l.bf16 %v3377
      %v3690 = vunpack.c.l.bf16 %v3378
      %v3691 = vunpack.c.l.bf16 %v3379
      %v3692 = vunpack.c.l.bf16 %v3380
      %v3693 = vunpack.c.h.bf16 %v3371
      %v3694 = vunpack.c.h.bf16 %v3372
      %v3695 = vunpack.c.h.bf16 %v3373
      %v3696 = vunpack.c.h.bf16 %v3374
      %v3697 = vunpack.c.h.bf16 %v3375
      %v3698 = vunpack.c.h.bf16 %v3376
      %v3699 = vunpack.c.h.bf16 %v3377
      %v3700 = vunpack.c.h.bf16 %v3378
      %v3701 = vunpack.c.h.bf16 %v3379
      %v3702 = vunpack.c.h.bf16 %v3380
      %v3703 = vadd.f32 %v3383, %v3393
      %v3704 = vadd.f32 %v3703, %v3403
      %v3705 = vadd.f32 %v3704, %v3413
      %v3706 = vadd.f32 %v3705, %v3423
      %v3707 = vadd.f32 %v3706, %v3433
      %v3708 = vadd.f32 %v3707, %v3443
      %v3709 = vadd.f32 %v3708, %v3453
      %v3710 = vadd.f32 %v3709, %v3463
      %v3711 = vadd.f32 %v3710, %v3473
      %v3712 = vadd.f32 %v3711, %v3483
      %v3713 = vadd.f32 %v3712, %v3493
      %v3714 = vadd.f32 %v3713, %v3503
      %v3715 = vadd.f32 %v3714, %v3513
      %v3716 = vadd.f32 %v3715, %v3523
      %v3717 = vadd.f32 %v3716, %v3533
      %v3718 = vadd.f32 %v3717, %v3543
      %v3719 = vadd.f32 %v3718, %v3553
      %v3720 = vadd.f32 %v3719, %v3563
      %v3721 = vadd.f32 %v3720, %v3573
      %v3722 = vadd.f32 %v3721, %v3583
      %v3723 = vadd.f32 %v3722, %v3593
      %v3724 = vadd.f32 %v3723, %v3603
      %v3725 = vadd.f32 %v3724, %v3613
      %v3726 = vadd.f32 %v3725, %v3623
      %v3727 = vadd.f32 %v3726, %v3633
      %v3728 = vadd.f32 %v3727, %v3643
      %v3729 = vadd.f32 %v3728, %v3653
      %v3730 = vadd.f32 %v3729, %v3663
      %v3731 = vadd.f32 %v3730, %v3673
      %v3732 = vadd.f32 %v3731, %v3683
      %v3733 = vadd.f32 %v3732, %v3693
      %v3734 = vrot.slane %v3733, 4
      %v3735 = vadd.f32 %v3733, %v3734
      %v3736 = vrot.slane %v3735, 2
      %v3737 = vadd.f32 %v3735, %v3736
      %v3738 = vrot.slane %v3737, 1
      %v3739 = vadd.f32 %v3737, %v3738
      %v3740 = vadd.f32 %v3384, %v3394
      %v3741 = vadd.f32 %v3740, %v3404
      %v3742 = vadd.f32 %v3741, %v3414
      %v3743 = vadd.f32 %v3742, %v3424
      %v3744 = vadd.f32 %v3743, %v3434
      %v3745 = vadd.f32 %v3744, %v3444
      %v3746 = vadd.f32 %v3745, %v3454
      %v3747 = vadd.f32 %v3746, %v3464
      %v3748 = vadd.f32 %v3747, %v3474
      %v3749 = vadd.f32 %v3748, %v3484
      %v3750 = vadd.f32 %v3749, %v3494
      %v3751 = vadd.f32 %v3750, %v3504
      %v3752 = vadd.f32 %v3751, %v3514
      %v3753 = vadd.f32 %v3752, %v3524
      %v3754 = vadd.f32 %v3753, %v3534
      %v3755 = vadd.f32 %v3754, %v3544
      %v3756 = vadd.f32 %v3755, %v3554
      %v3757 = vadd.f32 %v3756, %v3564
      %v3758 = vadd.f32 %v3757, %v3574
      %v3759 = vadd.f32 %v3758, %v3584
      %v3760 = vadd.f32 %v3759, %v3594
      %v3761 = vadd.f32 %v3760, %v3604
      %v3762 = vadd.f32 %v3761, %v3614
      %v3763 = vadd.f32 %v3762, %v3624
      %v3764 = vadd.f32 %v3763, %v3634
      %v3765 = vadd.f32 %v3764, %v3644
      %v3766 = vadd.f32 %v3765, %v3654
      %v3767 = vadd.f32 %v3766, %v3664
      %v3768 = vadd.f32 %v3767, %v3674
      %v3769 = vadd.f32 %v3768, %v3684
      %v3770 = vadd.f32 %v3769, %v3694
      %v3771 = vrot.slane %v3770, 4
      %v3772 = vadd.f32 %v3770, %v3771
      %v3773 = vrot.slane %v3772, 2
      %v3774 = vadd.f32 %v3772, %v3773
      %v3775 = vrot.slane %v3774, 1
      %v3776 = vadd.f32 %v3774, %v3775
      %v3777 = vadd.f32 %v3385, %v3395
      %v3778 = vadd.f32 %v3777, %v3405
      %v3779 = vadd.f32 %v3778, %v3415
      %v3780 = vadd.f32 %v3779, %v3425
      %v3781 = vadd.f32 %v3780, %v3435
      %v3782 = vadd.f32 %v3781, %v3445
      %v3783 = vadd.f32 %v3782, %v3455
      %v3784 = vadd.f32 %v3783, %v3465
      %v3785 = vadd.f32 %v3784, %v3475
      %v3786 = vadd.f32 %v3785, %v3485
      %v3787 = vadd.f32 %v3786, %v3495
      %v3788 = vadd.f32 %v3787, %v3505
      %v3789 = vadd.f32 %v3788, %v3515
      %v3790 = vadd.f32 %v3789, %v3525
      %v3791 = vadd.f32 %v3790, %v3535
      %v3792 = vadd.f32 %v3791, %v3545
      %v3793 = vadd.f32 %v3792, %v3555
      %v3794 = vadd.f32 %v3793, %v3565
      %v3795 = vadd.f32 %v3794, %v3575
      %v3796 = vadd.f32 %v3795, %v3585
      %v3797 = vadd.f32 %v3796, %v3595
      %v3798 = vadd.f32 %v3797, %v3605
      %v3799 = vadd.f32 %v3798, %v3615
      %v3800 = vadd.f32 %v3799, %v3625
      %v3801 = vadd.f32 %v3800, %v3635
      %v3802 = vadd.f32 %v3801, %v3645
      %v3803 = vadd.f32 %v3802, %v3655
      %v3804 = vadd.f32 %v3803, %v3665
      %v3805 = vadd.f32 %v3804, %v3675
      %v3806 = vadd.f32 %v3805, %v3685
      %v3807 = vadd.f32 %v3806, %v3695
      %v3808 = vrot.slane %v3807, 4
      %v3809 = vadd.f32 %v3807, %v3808
      %v3810 = vrot.slane %v3809, 2
      %v3811 = vadd.f32 %v3809, %v3810
      %v3812 = vrot.slane %v3811, 1
      %v3813 = vadd.f32 %v3811, %v3812
      %v3814 = vadd.f32 %v3386, %v3396
      %v3815 = vadd.f32 %v3814, %v3406
      %v3816 = vadd.f32 %v3815, %v3416
      %v3817 = vadd.f32 %v3816, %v3426
      %v3818 = vadd.f32 %v3817, %v3436
      %v3819 = vadd.f32 %v3818, %v3446
      %v3820 = vadd.f32 %v3819, %v3456
      %v3821 = vadd.f32 %v3820, %v3466
      %v3822 = vadd.f32 %v3821, %v3476
      %v3823 = vadd.f32 %v3822, %v3486
      %v3824 = vadd.f32 %v3823, %v3496
      %v3825 = vadd.f32 %v3824, %v3506
      %v3826 = vadd.f32 %v3825, %v3516
      %v3827 = vadd.f32 %v3826, %v3526
      %v3828 = vadd.f32 %v3827, %v3536
      %v3829 = vadd.f32 %v3828, %v3546
      %v3830 = vadd.f32 %v3829, %v3556
      %v3831 = vadd.f32 %v3830, %v3566
      %v3832 = vadd.f32 %v3831, %v3576
      %v3833 = vadd.f32 %v3832, %v3586
      %v3834 = vadd.f32 %v3833, %v3596
      %v3835 = vadd.f32 %v3834, %v3606
      %v3836 = vadd.f32 %v3835, %v3616
      %v3837 = vadd.f32 %v3836, %v3626
      %v3838 = vadd.f32 %v3837, %v3636
      %v3839 = vadd.f32 %v3838, %v3646
      %v3840 = vadd.f32 %v3839, %v3656
      %v3841 = vadd.f32 %v3840, %v3666
      %v3842 = vadd.f32 %v3841, %v3676
      %v3843 = vadd.f32 %v3842, %v3686
      %v3844 = vadd.f32 %v3843, %v3696
      %v3845 = vrot.slane %v3844, 4
      %v3846 = vadd.f32 %v3844, %v3845
      %v3847 = vrot.slane %v3846, 2
      %v3848 = vadd.f32 %v3846, %v3847
      %v3849 = vrot.slane %v3848, 1
      %v3850 = vadd.f32 %v3848, %v3849
      %v3851 = vadd.f32 %v3387, %v3397
      %v3852 = vadd.f32 %v3851, %v3407
      %v3853 = vadd.f32 %v3852, %v3417
      %v3854 = vadd.f32 %v3853, %v3427
      %v3855 = vadd.f32 %v3854, %v3437
      %v3856 = vadd.f32 %v3855, %v3447
      %v3857 = vadd.f32 %v3856, %v3457
      %v3858 = vadd.f32 %v3857, %v3467
      %v3859 = vadd.f32 %v3858, %v3477
      %v3860 = vadd.f32 %v3859, %v3487
      %v3861 = vadd.f32 %v3860, %v3497
      %v3862 = vadd.f32 %v3861, %v3507
      %v3863 = vadd.f32 %v3862, %v3517
      %v3864 = vadd.f32 %v3863, %v3527
      %v3865 = vadd.f32 %v3864, %v3537
      %v3866 = vadd.f32 %v3865, %v3547
      %v3867 = vadd.f32 %v3866, %v3557
      %v3868 = vadd.f32 %v3867, %v3567
      %v3869 = vadd.f32 %v3868, %v3577
      %v3870 = vadd.f32 %v3869, %v3587
      %v3871 = vadd.f32 %v3870, %v3597
      %v3872 = vadd.f32 %v3871, %v3607
      %v3873 = vadd.f32 %v3872, %v3617
      %v3874 = vadd.f32 %v3873, %v3627
      %v3875 = vadd.f32 %v3874, %v3637
      %v3876 = vadd.f32 %v3875, %v3647
      %v3877 = vadd.f32 %v3876, %v3657
      %v3878 = vadd.f32 %v3877, %v3667
      %v3879 = vadd.f32 %v3878, %v3677
      %v3880 = vadd.f32 %v3879, %v3687
      %v3881 = vadd.f32 %v3880, %v3697
      %v3882 = vrot.slane %v3881, 4
      %v3883 = vadd.f32 %v3881, %v3882
      %v3884 = vrot.slane %v3883, 2
      %v3885 = vadd.f32 %v3883, %v3884
      %v3886 = vrot.slane %v3885, 1
      %v3887 = vadd.f32 %v3885, %v3886
      %v3888 = vadd.f32 %v3388, %v3398
      %v3889 = vadd.f32 %v3888, %v3408
      %v3890 = vadd.f32 %v3889, %v3418
      %v3891 = vadd.f32 %v3890, %v3428
      %v3892 = vadd.f32 %v3891, %v3438
      %v3893 = vadd.f32 %v3892, %v3448
      %v3894 = vadd.f32 %v3893, %v3458
      %v3895 = vadd.f32 %v3894, %v3468
      %v3896 = vadd.f32 %v3895, %v3478
      %v3897 = vadd.f32 %v3896, %v3488
      %v3898 = vadd.f32 %v3897, %v3498
      %v3899 = vadd.f32 %v3898, %v3508
      %v3900 = vadd.f32 %v3899, %v3518
      %v3901 = vadd.f32 %v3900, %v3528
      %v3902 = vadd.f32 %v3901, %v3538
      %v3903 = vadd.f32 %v3902, %v3548
      %v3904 = vadd.f32 %v3903, %v3558
      %v3905 = vadd.f32 %v3904, %v3568
      %v3906 = vadd.f32 %v3905, %v3578
      %v3907 = vadd.f32 %v3906, %v3588
      %v3908 = vadd.f32 %v3907, %v3598
      %v3909 = vadd.f32 %v3908, %v3608
      %v3910 = vadd.f32 %v3909, %v3618
      %v3911 = vadd.f32 %v3910, %v3628
      %v3912 = vadd.f32 %v3911, %v3638
      %v3913 = vadd.f32 %v3912, %v3648
      %v3914 = vadd.f32 %v3913, %v3658
      %v3915 = vadd.f32 %v3914, %v3668
      %v3916 = vadd.f32 %v3915, %v3678
      %v3917 = vadd.f32 %v3916, %v3688
      %v3918 = vadd.f32 %v3917, %v3698
      %v3919 = vrot.slane %v3918, 4
      %v3920 = vadd.f32 %v3918, %v3919
      %v3921 = vrot.slane %v3920, 2
      %v3922 = vadd.f32 %v3920, %v3921
      %v3923 = vrot.slane %v3922, 1
      %v3924 = vadd.f32 %v3922, %v3923
      %v3925 = vadd.f32 %v3389, %v3399
      %v3926 = vadd.f32 %v3925, %v3409
      %v3927 = vadd.f32 %v3926, %v3419
      %v3928 = vadd.f32 %v3927, %v3429
      %v3929 = vadd.f32 %v3928, %v3439
      %v3930 = vadd.f32 %v3929, %v3449
      %v3931 = vadd.f32 %v3930, %v3459
      %v3932 = vadd.f32 %v3931, %v3469
      %v3933 = vadd.f32 %v3932, %v3479
      %v3934 = vadd.f32 %v3933, %v3489
      %v3935 = vadd.f32 %v3934, %v3499
      %v3936 = vadd.f32 %v3935, %v3509
      %v3937 = vadd.f32 %v3936, %v3519
      %v3938 = vadd.f32 %v3937, %v3529
      %v3939 = vadd.f32 %v3938, %v3539
      %v3940 = vadd.f32 %v3939, %v3549
      %v3941 = vadd.f32 %v3940, %v3559
      %v3942 = vadd.f32 %v3941, %v3569
      %v3943 = vadd.f32 %v3942, %v3579
      %v3944 = vadd.f32 %v3943, %v3589
      %v3945 = vadd.f32 %v3944, %v3599
      %v3946 = vadd.f32 %v3945, %v3609
      %v3947 = vadd.f32 %v3946, %v3619
      %v3948 = vadd.f32 %v3947, %v3629
      %v3949 = vadd.f32 %v3948, %v3639
      %v3950 = vadd.f32 %v3949, %v3649
      %v3951 = vadd.f32 %v3950, %v3659
      %v3952 = vadd.f32 %v3951, %v3669
      %v3953 = vadd.f32 %v3952, %v3679
      %v3954 = vadd.f32 %v3953, %v3689
      %v3955 = vadd.f32 %v3954, %v3699
      %v3956 = vrot.slane %v3955, 4
      %v3957 = vadd.f32 %v3955, %v3956
      %v3958 = vrot.slane %v3957, 2
      %v3959 = vadd.f32 %v3957, %v3958
      %v3960 = vrot.slane %v3959, 1
      %v3961 = vadd.f32 %v3959, %v3960
      %v3962 = vadd.f32 %v3390, %v3400
      %v3963 = vadd.f32 %v3962, %v3410
      %v3964 = vadd.f32 %v3963, %v3420
      %v3965 = vadd.f32 %v3964, %v3430
      %v3966 = vadd.f32 %v3965, %v3440
      %v3967 = vadd.f32 %v3966, %v3450
      %v3968 = vadd.f32 %v3967, %v3460
      %v3969 = vadd.f32 %v3968, %v3470
      %v3970 = vadd.f32 %v3969, %v3480
      %v3971 = vadd.f32 %v3970, %v3490
      %v3972 = vadd.f32 %v3971, %v3500
      %v3973 = vadd.f32 %v3972, %v3510
      %v3974 = vadd.f32 %v3973, %v3520
      %v3975 = vadd.f32 %v3974, %v3530
      %v3976 = vadd.f32 %v3975, %v3540
      %v3977 = vadd.f32 %v3976, %v3550
      %v3978 = vadd.f32 %v3977, %v3560
      %v3979 = vadd.f32 %v3978, %v3570
      %v3980 = vadd.f32 %v3979, %v3580
      %v3981 = vadd.f32 %v3980, %v3590
      %v3982 = vadd.f32 %v3981, %v3600
      %v3983 = vadd.f32 %v3982, %v3610
      %v3984 = vadd.f32 %v3983, %v3620
      %v3985 = vadd.f32 %v3984, %v3630
      %v3986 = vadd.f32 %v3985, %v3640
      %v3987 = vadd.f32 %v3986, %v3650
      %v3988 = vadd.f32 %v3987, %v3660
      %v3989 = vadd.f32 %v3988, %v3670
      %v3990 = vadd.f32 %v3989, %v3680
      %v3991 = vadd.f32 %v3990, %v3690
      %v3992 = vadd.f32 %v3991, %v3700
      %v3993 = vrot.slane %v3992, 4
      %v3994 = vadd.f32 %v3992, %v3993
      %v3995 = vrot.slane %v3994, 2
      %v3996 = vadd.f32 %v3994, %v3995
      %v3997 = vrot.slane %v3996, 1
      %v3998 = vadd.f32 %v3996, %v3997
      %v3999 = vadd.f32 %v3391, %v3401
      %v4000 = vadd.f32 %v3999, %v3411
      %v4001 = vadd.f32 %v4000, %v3421
      %v4002 = vadd.f32 %v4001, %v3431
      %v4003 = vadd.f32 %v4002, %v3441
      %v4004 = vadd.f32 %v4003, %v3451
      %v4005 = vadd.f32 %v4004, %v3461
      %v4006 = vadd.f32 %v4005, %v3471
      %v4007 = vadd.f32 %v4006, %v3481
      %v4008 = vadd.f32 %v4007, %v3491
      %v4009 = vadd.f32 %v4008, %v3501
      %v4010 = vadd.f32 %v4009, %v3511
      %v4011 = vadd.f32 %v4010, %v3521
      %v4012 = vadd.f32 %v4011, %v3531
      %v4013 = vadd.f32 %v4012, %v3541
      %v4014 = vadd.f32 %v4013, %v3551
      %v4015 = vadd.f32 %v4014, %v3561
      %v4016 = vadd.f32 %v4015, %v3571
      %v4017 = vadd.f32 %v4016, %v3581
      %v4018 = vadd.f32 %v4017, %v3591
      %v4019 = vadd.f32 %v4018, %v3601
      %v4020 = vadd.f32 %v4019, %v3611
      %v4021 = vadd.f32 %v4020, %v3621
      %v4022 = vadd.f32 %v4021, %v3631
      %v4023 = vadd.f32 %v4022, %v3641
      %v4024 = vadd.f32 %v4023, %v3651
      %v4025 = vadd.f32 %v4024, %v3661
      %v4026 = vadd.f32 %v4025, %v3671
      %v4027 = vadd.f32 %v4026, %v3681
      %v4028 = vadd.f32 %v4027, %v3691
      %v4029 = vadd.f32 %v4028, %v3701
      %v4030 = vrot.slane %v4029, 4
      %v4031 = vadd.f32 %v4029, %v4030
      %v4032 = vrot.slane %v4031, 2
      %v4033 = vadd.f32 %v4031, %v4032
      %v4034 = vrot.slane %v4033, 1
      %v4035 = vadd.f32 %v4033, %v4034
      %v4036 = vadd.f32 %v3392, %v3402
      %v4037 = vadd.f32 %v4036, %v3412
      %v4038 = vadd.f32 %v4037, %v3422
      %v4039 = vadd.f32 %v4038, %v3432
      %v4040 = vadd.f32 %v4039, %v3442
      %v4041 = vadd.f32 %v4040, %v3452
      %v4042 = vadd.f32 %v4041, %v3462
      %v4043 = vadd.f32 %v4042, %v3472
      %v4044 = vadd.f32 %v4043, %v3482
      %v4045 = vadd.f32 %v4044, %v3492
      %v4046 = vadd.f32 %v4045, %v3502
      %v4047 = vadd.f32 %v4046, %v3512
      %v4048 = vadd.f32 %v4047, %v3522
      %v4049 = vadd.f32 %v4048, %v3532
      %v4050 = vadd.f32 %v4049, %v3542
      %v4051 = vadd.f32 %v4050, %v3552
      %v4052 = vadd.f32 %v4051, %v3562
      %v4053 = vadd.f32 %v4052, %v3572
      %v4054 = vadd.f32 %v4053, %v3582
      %v4055 = vadd.f32 %v4054, %v3592
      %v4056 = vadd.f32 %v4055, %v3602
      %v4057 = vadd.f32 %v4056, %v3612
      %v4058 = vadd.f32 %v4057, %v3622
      %v4059 = vadd.f32 %v4058, %v3632
      %v4060 = vadd.f32 %v4059, %v3642
      %v4061 = vadd.f32 %v4060, %v3652
      %v4062 = vadd.f32 %v4061, %v3662
      %v4063 = vadd.f32 %v4062, %v3672
      %v4064 = vadd.f32 %v4063, %v3682
      %v4065 = vadd.f32 %v4064, %v3692
      %v4066 = vadd.f32 %v4065, %v3702
      %v4067 = vrot.slane %v4066, 4
      %v4068 = vadd.f32 %v4066, %v4067
      %v4069 = vrot.slane %v4068, 2
      %v4070 = vadd.f32 %v4068, %v4069
      %v4071 = vrot.slane %v4070, 1
      %v4072 = vadd.f32 %v4070, %v4071
      %v4083 = vcombine.low %v3739, %v3776
      %v4084 = vcombine.low %v3813, %v3850
      %v4085 = vcombine.low %v3887, %v3924
      %v4086 = vcombine.low %v3961, %v3998
      %v4088 = vunpack.c.l.s4 1966171168
      %v4089 = vunpack.c.0.s8 %v4088
      %v4090 = vlaneseq
      %v4091 = vshrl.u32 %v4090, 7
      %v4092 = vsub.s32 %v4089, %v4091
      %v4093 = vrot.slane %v4083, %v4092
      %v4095 = vunpack.c.l.s4 1966171168
      %v4096 = vunpack.c.0.s8 %v4095
      %v4097 = vlaneseq
      %v4098 = vshrl.u32 %v4097, 7
      %v4099 = vsub.s32 %v4096, %v4098
      %v4100 = vrot.slane %v4084, %v4099
      %v4102 = vunpack.c.l.s4 1966171168
      %v4103 = vunpack.c.0.s8 %v4102
      %v4104 = vlaneseq
      %v4105 = vshrl.u32 %v4104, 7
      %v4106 = vsub.s32 %v4103, %v4105
      %v4107 = vrot.slane %v4085, %v4106
      %v4109 = vunpack.c.l.s4 1966171168
      %v4110 = vunpack.c.0.s8 %v4109
      %v4111 = vlaneseq
      %v4112 = vshrl.u32 %v4111, 7
      %v4113 = vsub.s32 %v4110, %v4112
      %v4114 = vrot.slane %v4086, %v4113
      %v4115 = vcombine.low %v4093, %v4100
      %v4116 = vcombine.low %v4107, %v4114
      %v4118 = vunpack.c.l.s4 1966171168
      %v4119 = vunpack.c.0.s8 %v4118
      %v4120 = vlaneseq
      %v4121 = vshrl.u32 %v4120, 7
      %v4122 = vsub.s32 %v4119, %v4121
      %v4123 = vrot.slane %v4115, %v4122
      %v4125 = vunpack.c.l.s4 1966171168
      %v4126 = vunpack.c.0.s8 %v4125
      %v4127 = vlaneseq
      %v4128 = vshrl.u32 %v4127, 7
      %v4129 = vsub.s32 %v4126, %v4128
      %v4130 = vrot.slane %v4116, %v4129
      %v4131 = vcombine.low %v4123, %v4130
      %v4132 = vcombine.low %v4035, %v4072
      %v4134 = vunpack.c.l.s4 1966171168
      %v4135 = vunpack.c.0.s8 %v4134
      %v4136 = vlaneseq
      %v4137 = vshrl.u32 %v4136, 7
      %v4138 = vsub.s32 %v4135, %v4137
      %v4139 = vrot.slane %v4132, %v4138
      %v4141 = vunpack.c.l.s4 1966171168
      %v4142 = vunpack.c.0.s8 %v4141
      %v4143 = vlaneseq
      %v4144 = vshrl.u32 %v4143, 7
      %v4145 = vsub.s32 %v4142, %v4144
      %v4146 = vrot.slane %v4139, %v4145
      %v4149 = vadd.f32 %v3381, %v4131
      %v4150 = vadd.f32 %v3382, %v4146
      %4151 = vst [vmem:[#allocation2] sm:$0xff] %v4149
      %v4152 = vlaneseq
      %vm4153 = vcmp.ge.s32.totalorder %v4152, 0
      %vm4154 = vcmp.lt.s32.totalorder %v4152, 256
      %vm4155 = vmand %vm4153, %vm4154
      %4156 = vst.msk [vmem:[#allocation2 + $0x8] sm:$0x3] %vm4155, %v4150
      // Predicated region
      $region45: #{_lambda_.2} parent=39 // pred_check
        %p4157 = pneg %p253
      $region46: #{_lambda_.2} parent=39 // pred_check_branch
        %4159 = sbr.rel (%p4157) target = $region48
      $region47: #{_lambda_.2} parent=39 // pred_region
        %v4160 = vld [vmem:[#allocation2] sm:$0xff]
        %v4161 = vld [vmem:[#allocation2 + $0x8] sm:$0x3]
        %v4162 = vmul.f32 %v4160, 0.00390625
        %v4163 = vmul.f32 %v4161, 0.00390625
        %4164 = vst [vmem:[%s250] sm:$0xff] %v4162
        %4165 = vst.msk [vmem:[%s250 + $0x8] sm:$0x3] %vm4155, %v4163
      $region48: #{_lambda_.2} parent=39 // pred_fallthru
        _
      %p4166 = scmp.lt.s32.totalorder %s20, 1
      %s4167 = scalar_select %p4166, %s20, 1
      %s4168 = smul.addr %s4167, 10
      %s4169 = scalar_lea.vmem %s5, %s4168
      // Predicated region
      $region49: #{_lambda_.2} parent=39 // pred_check
        %p4170 = pneg %p158
      $region50: #{_lambda_.2} parent=39 // pred_check_branch
        %4172 = sbr.rel (%p4170) target = $region52
      $region51: #{_lambda_.2} parent=39 // pred_region
        _
      $region52: #{_lambda_.2} parent=39 // pred_fallthru
        _
    $region40: #{_lambda_.2} parent=5 // pred_fallthru
      _
    %p4173 = scmp.le.s32.totalorder 2, %s11
    // Predicated region
    $region53: #{_lambda_.2} parent=5 // pred_check
      %p4174 = pneg %p4173
    $region54: #{_lambda_.2} parent=5 // pred_check_branch
      %4176 = sbr.rel (%p4174) target = $region56
    $region55: #{_lambda_.2} parent=5 // pred_region
      %s4177 = ssub.s32 %s11, 2
      // Predicated region
      $region57: #{_lambda_.2} parent=55 // pred_check
        %p4178 = pneg %p164
      $region58: #{_lambda_.2} parent=55 // pred_check_branch
        %4180 = sbr.rel (%p4178) target = $region60
      $region59: #{_lambda_.2} parent=55 // pred_region
        %p4181 = scmp.lt.s32.totalorder %s22, 1
        %s4182 = scalar_select %p4181, %s22, 1
        %s4183 = smul.addr %s4182, 10
        %s4184 = scalar_lea.vmem %s5, %s4183
      $region60: #{_lambda_.2} parent=55 // pred_fallthru
        _
    $region56: #{_lambda_.2} parent=5 // pred_fallthru
      _
  $region6: #{_lambda_.2} parent=0 // loop_footer
    %s15 = sadd.s32 1, %s11
  $region7: #{_lambda_.2} parent=0 // loop_footer_branch
    %10 = sbr.rel target = $region3
  $region8: #{_lambda_.2} parent=0 // loop_exit
    _

</llo_original>
